<compile_context>
chip_gen: v5e
topology: v5e:2x2
jax: 0.10.0
libtpu: 0.0.40
codegen_flags: <defaults>
</compile_context>

<pallas_src>
import functools

import jax
import jax.numpy as jnp
from jax.experimental import pallas as pl
from jax.experimental.pallas import tpu as pltpu


# ---------------------------------------------------------------------------
# in-kernel helpers
# ---------------------------------------------------------------------------
def _gn_silu(x3, A, gamma, beta, eps):
    """GroupNorm + SiLU on a (H, W, C) fp32 value.

    One-pass statistics: per-channel sum / sum-of-squares, then a tiny (C, C)
    matmul with A (A[i, j] = 1/count when channels i, j share a group) maps
    them to per-channel group mean / E[x^2].  Everything stays full lane width.
    """
    s1 = jnp.sum(jnp.sum(x3, axis=0), axis=0, keepdims=True)        # (1, C)
    s2 = jnp.sum(jnp.sum(x3 * x3, axis=0), axis=0, keepdims=True)   # (1, C)
    stats = jnp.dot(jnp.concatenate([s1, s2], axis=0), A,
                    preferred_element_type=jnp.float32)             # (2, C)
    mean = stats[0:1]                                               # group mean per channel
    var = stats[1:2] - mean * mean                                  # biased var (matches torch)
    inv = jax.lax.rsqrt(var + eps)
    scale = gamma * inv                                             # (1, C)
    shift = beta - mean * scale
    y = x3 * scale[None] + shift[None]
    return y * jax.nn.sigmoid(y)                                    # SiLU (EUP)


def _conv_same(h3, w_ref, bias_ref, o_ref, xpf_ref, skip_ref, *, H, W, Cin, Cout, K):
    """'same' KxK conv of a (H, W, Cin) fp32 value via one im2col MXU matmul.

    h3 is column-zero-padded in registers, written once (lane dense) into a
    flat padded-row-major fp32 scratch; the K*K taps are then shifted row
    slices of that scratch concatenated on the lane axis -> a single
    (H*Wp, K*K*Cin) bf16 slab x (K*K*Cin, Cpad) bf16 weight -> fp32 acc.
    """
    pad = (K - 1) // 2
    Wp = W + 2 * pad
    rows = H * Wp
    Cpad = w_ref.shape[-1]

    h3 = h3.astype(xpf_ref.dtype)
    if pad:
        zc = jnp.zeros((H, pad, Cin), xpf_ref.dtype)
        h3 = jnp.concatenate([zc, h3, zc], axis=1)                  # (H, Wp, Cin)
        xpf_ref[...] = jnp.zeros_like(xpf_ref)                      # top/bottom halo rows
    xpf_ref[pl.ds(pad * Wp, rows), :] = h3.reshape(rows, Cin)       # one lane-dense store

    cols = [xpf_ref[pl.ds(ky * Wp + kx, rows), :]                   # shifted views, no copies
            for ky in range(K) for kx in range(K)]
    slab = cols[0] if K == 1 else jnp.concatenate(cols, axis=-1)    # (rows, K*K*Cin)
    acc = jnp.dot(slab.astype(jnp.bfloat16), w_ref[...],
                  preferred_element_type=jnp.float32)               # (rows, Cpad), 1 MXU push
    acc = acc + bias_ref[...]                                       # (1, Cpad) broadcast
    out = acc.reshape(H, Wp, Cpad)[:, :W, :Cout]                    # drop pad cols / pad chans
    if skip_ref is not None:
        out = out + skip_ref[0].astype(jnp.float32)                 # fused residual add
    o_ref[...] = out[None].astype(o_ref.dtype)                      # single full-width store


def _nearest_up2(x3, H, W, C):
    """Nearest-neighbor 2x upsample of a (H, W, C) value, in-kernel."""
    u = jnp.broadcast_to(x3[:, None, :, :], (H, 2, W, C)).reshape(2 * H, W, C)
    u = jnp.concatenate([u, u], axis=-1).reshape(2 * H, 2 * W, C)   # column interleave
    return u


# ---------------------------------------------------------------------------
# kernels
# ---------------------------------------------------------------------------
def _gn_conv_kernel(x_ref, A_ref, g_ref, bt_ref, w_ref, bias_ref, o_ref, xpf_ref,
                    *, H, W, Cin, Cout, K, eps):
    x3 = x_ref[0].astype(jnp.float32)
    h3 = _gn_silu(x3, A_ref[...], g_ref[...].astype(jnp.float32),
                  bt_ref[...].astype(jnp.float32), eps)
    # dropout p=0.0 -> identity
    _conv_same(h3, w_ref, bias_ref, o_ref, xpf_ref, None,
               H=H, W=W, Cin=Cin, Cout=Cout, K=K)


def _gn_conv_add_kernel(x_ref, A_ref, g_ref, bt_ref, w_ref, bias_ref, skip_ref,
                        o_ref, xpf_ref, *, H, W, Cin, Cout, K, eps):
    x3 = x_ref[0].astype(jnp.float32)
    h3 = _gn_silu(x3, A_ref[...], g_ref[...].astype(jnp.float32),
                  bt_ref[...].astype(jnp.float32), eps)
    _conv_same(h3, w_ref, bias_ref, o_ref, xpf_ref, skip_ref,
               H=H, W=W, Cin=Cin, Cout=Cout, K=K)


def _conv_kernel(x_ref, w_ref, bias_ref, o_ref, xpf_ref, *, H, W, Cin, Cout, K):
    _conv_same(x_ref[0].astype(jnp.float32), w_ref, bias_ref, o_ref, xpf_ref, None,
               H=H, W=W, Cin=Cin, Cout=Cout, K=K)


def _up_conv_kernel(x_ref, w_ref, bias_ref, o_ref, xpf_ref, *, H, W, Cin, Cout, K):
    u = _nearest_up2(x_ref[0].astype(jnp.float32), H, W, Cin)       # fused 2x upsample
    _conv_same(u, w_ref, bias_ref, o_ref, xpf_ref, None,
               H=2 * H, W=2 * W, Cin=Cin, Cout=Cout, K=K)


def _upsample_kernel(x_ref, o_ref, *, H, W, C):
    u = _nearest_up2(x_ref[0], H, W, C)
    o_ref[...] = u[None].astype(o_ref.dtype)


# ---------------------------------------------------------------------------
# pallas_call wrappers
# ---------------------------------------------------------------------------
def _round_up(x, m):
    return ((x + m - 1) // m) * m


def _group_matrix(C, num_groups, hw):
    cg = C // num_groups
    gid = jnp.arange(C) // cg
    same = (gid[:, None] == gid[None, :]).astype(jnp.float32)
    return same / float(hw * cg)                                    # (C, C)


def _prep_conv(w, b):
    """HWIO (K,K,Cin,Cout) weight -> (K*K*Cin, Cpad) bf16; bias -> (1, Cpad) f32."""
    K, _, Cin, Cout = w.shape
    Cpad = _round_up(Cout, 128)                                     # lane-dense MXU feed
    wf = w.reshape(K * K * Cin, Cout).astype(jnp.bfloat16)
    bf = b.reshape(1, Cout).astype(jnp.float32)
    if Cpad != Cout:
        wf = jnp.pad(wf, ((0, 0), (0, Cpad - Cout)))
        bf = jnp.pad(bf, ((0, 0), (0, Cpad - Cout)))
    return wf, bf, K, Cin, Cout, Cpad


def _compiler_params():
    # NOTE: weight/bias specs could additionally use pipeline_mode=pl.Buffered(1)
    # and vmem_limit_bytes could be raised for large tiles; not needed at toy shapes.
    return pltpu.CompilerParams(dimension_semantics=("parallel",))


def gn_silu_conv(x, gamma, beta, w, b, skip=None, *, num_groups, eps):
    """Fused GroupNorm -> SiLU -> conv KxK ('same') [-> + skip], one pallas_call."""
    N, H, W, Cin = x.shape
    wf, bf, K, w_cin, Cout, Cpad = _prep_conv(w, b)
    assert w_cin == Cin and Cin % num_groups == 0
    pad = (K - 1) // 2
    Wp = W + 2 * pad
    A = _group_matrix(Cin, num_groups, H * W)
    g2 = gamma.reshape(1, Cin).astype(jnp.float32)
    bt2 = beta.reshape(1, Cin).astype(jnp.float32)

    kern = functools.partial(
        _gn_conv_add_kernel if skip is not None else _gn_conv_kernel,
        H=H, W=W, Cin=Cin, Cout=Cout, K=K, eps=eps)
    in_specs = [
        pl.BlockSpec((1, H, W, Cin), lambda n: (n, 0, 0, 0)),
        pl.BlockSpec((Cin, Cin), lambda n: (0, 0)),
        pl.BlockSpec((1, Cin), lambda n: (0, 0)),
        pl.BlockSpec((1, Cin), lambda n: (0, 0)),
        pl.BlockSpec((K * K * Cin, Cpad), lambda n: (0, 0)),
        pl.BlockSpec((1, Cpad), lambda n: (0, 0)),
    ]
    args = [x, A, g2, bt2, wf, bf]
    if skip is not None:
        in_specs.append(pl.BlockSpec((1, H, W, Cout), lambda n: (n, 0, 0, 0)))
        args.append(skip)

    return pl.pallas_call(
        kern,
        out_shape=jax.ShapeDtypeStruct((N, H, W, Cout), x.dtype),
        grid=(N,),
        in_specs=in_specs,
        out_specs=pl.BlockSpec((1, H, W, Cout), lambda n: (n, 0, 0, 0)),
        scratch_shapes=[pltpu.VMEM(((H + 2 * pad + 1) * Wp, Cin), jnp.float32)],
        compiler_params=_compiler_params(),
    )(*args)


def conv_same(x, w, b):
    """Plain 'same' conv (used for the residual skip projection)."""
    N, H, W, Cin = x.shape
    wf, bf, K, _, Cout, Cpad = _prep_conv(w, b)
    pad = (K - 1) // 2
    Wp = W + 2 * pad
    kern = functools.partial(_conv_kernel, H=H, W=W, Cin=Cin, Cout=Cout, K=K)
    return pl.pallas_call(
        kern,
        out_shape=jax.ShapeDtypeStruct((N, H, W, Cout), x.dtype),
        grid=(N,),
        in_specs=[pl.BlockSpec((1, H, W, Cin), lambda n: (n, 0, 0, 0)),
                  pl.BlockSpec((K * K * Cin, Cpad), lambda n: (0, 0)),
                  pl.BlockSpec((1, Cpad), lambda n: (0, 0))],
        out_specs=pl.BlockSpec((1, H, W, Cout), lambda n: (n, 0, 0, 0)),
        scratch_shapes=[pltpu.VMEM(((H + 2 * pad + 1) * Wp, Cin), jnp.float32)],
        compiler_params=_compiler_params(),
    )(x, wf, bf)


def upsample2x_conv(x, w, b):
    """Fused nearest-neighbor 2x upsample + conv3x3."""
    N, H, W, Cin = x.shape
    wf, bf, K, _, Cout, Cpad = _prep_conv(w, b)
    H2, W2 = 2 * H, 2 * W
    pad = (K - 1) // 2
    Wp = W2 + 2 * pad
    kern = functools.partial(_up_conv_kernel, H=H, W=W, Cin=Cin, Cout=Cout, K=K)
    return pl.pallas_call(
        kern,
        out_shape=jax.ShapeDtypeStruct((N, H2, W2, Cout), x.dtype),
        grid=(N,),
        in_specs=[pl.BlockSpec((1, H, W, Cin), lambda n: (n, 0, 0, 0)),
                  pl.BlockSpec((K * K * Cin, Cpad), lambda n: (0, 0)),
                  pl.BlockSpec((1, Cpad), lambda n: (0, 0))],
        out_specs=pl.BlockSpec((1, H2, W2, Cout), lambda n: (n, 0, 0, 0)),
        scratch_shapes=[pltpu.VMEM(((H2 + 2 * pad + 1) * Wp, Cin), jnp.float32)],
        compiler_params=_compiler_params(),
    )(x, wf, bf)


def upsample2x(x):
    """Nearest-neighbor 2x upsample only (use_up_conv=False path)."""
    N, H, W, C = x.shape
    kern = functools.partial(_upsample_kernel, H=H, W=W, C=C)
    return pl.pallas_call(
        kern,
        out_shape=jax.ShapeDtypeStruct((N, 2 * H, 2 * W, C), x.dtype),
        grid=(N,),
        in_specs=[pl.BlockSpec((1, H, W, C), lambda n: (n, 0, 0, 0))],
        out_specs=pl.BlockSpec((1, 2 * H, 2 * W, C), lambda n: (n, 0, 0, 0)),
        compiler_params=_compiler_params(),
    )(x)


# ---------------------------------------------------------------------------
# Parameter init (deterministic, synthetic) and UpBlock forward
# ---------------------------------------------------------------------------
def _conv_init(key, k, cin, cout, scale=0.05):
    kw, kb = jax.random.split(key)
    w = scale * jax.random.normal(kw, (k, k, cin, cout), jnp.float32)
    b = 0.01 * jax.random.normal(kb, (cout,), jnp.float32)
    return w, b


def init_upblock_params(key, in_channels, out_channels, *, num_res_blocks=1,
                        use_skip_conv=True, add_upsample=True, use_up_conv=True):
    params = {"res_blocks": [], "add_upsample": add_upsample, "use_up_conv": use_up_conv}
    for i in range(num_res_blocks):
        cin = in_channels if i == 0 else out_channels
        key, kg1, kb1, kc1, kg2, kb2, kc2, ksk = jax.random.split(key, 8)
        rb = {
            "gn1_g": 1.0 + 0.1 * jax.random.normal(kg1, (cin,), jnp.float32),
            "gn1_b": 0.1 * jax.random.normal(kb1, (cin,), jnp.float32),
            "gn2_g": 1.0 + 0.1 * jax.random.normal(kg2, (out_channels,), jnp.float32),
            "gn2_b": 0.1 * jax.random.normal(kb2, (out_channels,), jnp.float32),
        }
        rb["conv1_w"], rb["conv1_b"] = _conv_init(kc1, 3, cin, out_channels)
        rb["conv2_w"], rb["conv2_b"] = _conv_init(kc2, 3, out_channels, out_channels)
        if cin != out_channels:
            # use_skip_conv=True -> 3x3 skip conv (guided-diffusion style ResBlock),
            # otherwise 1x1 projection.
            ksz = 3 if use_skip_conv else 1
            rb["skip_w"], rb["skip_b"] = _conv_init(ksk, ksz, cin, out_channels)
        params["res_blocks"].append(rb)
    if add_upsample and use_up_conv:
        key, ku = jax.random.split(key)
        params["up_w"], params["up_b"] = _conv_init(ku, 3, out_channels, out_channels)
    return params


def upblock_forward(params, x_nchw, *, num_groups=4, eps=1e-5):
    # eps follows torch.nn.GroupNorm default (1e-5); diffusers-style blocks use 1e-6.
    x = jnp.transpose(x_nchw, (0, 2, 3, 1))            # NCHW -> NHWC (channels on lanes)
    for rb in params["res_blocks"]:
        h = gn_silu_conv(x, rb["gn1_g"], rb["gn1_b"], rb["conv1_w"], rb["conv1_b"],
                         num_groups=num_groups, eps=eps)
        skip = x if "skip_w" not in rb else conv_same(x, rb["skip_w"], rb["skip_b"])
        # dropout p=0.0 -> identity; residual add fused into the second conv.
        x = gn_silu_conv(h, rb["gn2_g"], rb["gn2_b"], rb["conv2_w"], rb["conv2_b"],
                         skip=skip, num_groups=num_groups, eps=eps)
        # TODO(synk): SelfAttentionBlock path not implemented (add_attention defaults to False).
    if params["add_upsample"]:
        if params["use_up_conv"]:
            x = upsample2x_conv(x, params["up_w"], params["up_b"])
        else:
            x = upsample2x(x)
    return jnp.transpose(x, (0, 3, 1, 2))              # NHWC -> NCHW


if __name__ == "__main__":
    key = jax.random.PRNGKey(0)
    kx, kp = jax.random.split(key)
    B, C_IN, C_OUT, S = 2, 8, 16, 16
    x = jax.random.normal(kx, (B, C_IN, S, S), jnp.float32)       # NCHW, like PyTorch
    params = init_upblock_params(kp, C_IN, C_OUT,
                                 num_res_blocks=1, use_skip_conv=True,
                                 add_upsample=True, use_up_conv=True)
    y = upblock_forward(params, x, num_groups=4)
    y = jax.block_until_ready(y)
    assert y.shape == (B, C_OUT, 2 * S, 2 * S), y.shape
    assert bool(jnp.all(jnp.isfinite(y)))
    print("KERNEL_OK")
</pallas_src>

<mosaic_0001>
module attributes {stable_mosaic.version = 11 : i64} {
  func.func @_gn_conv_kernel(%arg0: i32, %arg1: memref<1x16x16x8xf32, #tpu.memory_space<vmem>>, %arg2: memref<8x8xf32, #tpu.memory_space<vmem>>, %arg3: memref<1x8xf32, #tpu.memory_space<vmem>>, %arg4: memref<1x8xf32, #tpu.memory_space<vmem>>, %arg5: memref<72x128xbf16, #tpu.memory_space<vmem>>, %arg6: memref<1x128xf32, #tpu.memory_space<vmem>>, %arg7: memref<1x16x16x16xf32, #tpu.memory_space<vmem>>, %arg8: memref<342x8xf32, #tpu.memory_space<vmem>>) attributes {dimension_semantics = [#tpu.dimension_semantics<parallel>], iteration_bounds = array<i64: 2>, scalar_prefetch = 0 : i64, scratch_operands = 1 : i64, tpu.core_type = #tpu.core_type<tc>, window_params = [{transform_indices = @transform_0, window_bounds = array<i64: 1, 16, 16, 8>}, {pipeline_mode = #tpu.pipeline_mode<synchronous>, transform_indices = @transform_1, window_bounds = array<i64: 8, 8>}, {pipeline_mode = #tpu.pipeline_mode<synchronous>, transform_indices = @transform_2, window_bounds = array<i64: 1, 8>}, {pipeline_mode = #tpu.pipeline_mode<synchronous>, transform_indices = @transform_3, window_bounds = array<i64: 1, 8>}, {pipeline_mode = #tpu.pipeline_mode<synchronous>, transform_indices = @transform_4, window_bounds = array<i64: 72, 128>}, {pipeline_mode = #tpu.pipeline_mode<synchronous>, transform_indices = @transform_5, window_bounds = array<i64: 1, 128>}, {transform_indices = @transform_6, window_bounds = array<i64: 1, 16, 16, 16>}]} {
    %c0 = arith.constant 0 : index
    %c0_0 = arith.constant 0 : index
    %c0_1 = arith.constant 0 : index
    %c0_2 = arith.constant 0 : index
    %0 = vector.load %arg1[%c0, %c0_0, %c0_1, %c0_2] : memref<1x16x16x8xf32, #tpu.memory_space<vmem>>, vector<1x16x16x8xf32>
    %1 = vector.shape_cast %0 : vector<1x16x16x8xf32> to vector<16x16x8xf32>
    %c0_3 = arith.constant 0 : index
    %c0_4 = arith.constant 0 : index
    %2 = vector.load %arg2[%c0_3, %c0_4] : memref<8x8xf32, #tpu.memory_space<vmem>>, vector<8x8xf32>
    %c0_5 = arith.constant 0 : index
    %c0_6 = arith.constant 0 : index
    %3 = vector.load %arg3[%c0_5, %c0_6] : memref<1x8xf32, #tpu.memory_space<vmem>>, vector<1x8xf32>
    %c0_7 = arith.constant 0 : index
    %c0_8 = arith.constant 0 : index
    %4 = vector.load %arg4[%c0_7, %c0_8] : memref<1x8xf32, #tpu.memory_space<vmem>>, vector<1x8xf32>
    %cst = arith.constant dense<0.000000e+00> : vector<16x8xf32>
    %5 = vector.multi_reduction <add>, %1, %cst [0] : vector<16x16x8xf32> to vector<16x8xf32>
    %cst_9 = arith.constant dense<0.000000e+00> : vector<8xf32>
    %6 = vector.multi_reduction <add>, %5, %cst_9 [0] : vector<16x8xf32> to vector<8xf32>
    %7 = vector.shape_cast %6 : vector<8xf32> to vector<1x8xf32>
    %8 = arith.mulf %1, %1 : vector<16x16x8xf32>
    %cst_10 = arith.constant dense<0.000000e+00> : vector<16x8xf32>
    %9 = vector.multi_reduction <add>, %8, %cst_10 [0] : vector<16x16x8xf32> to vector<16x8xf32>
    %cst_11 = arith.constant dense<0.000000e+00> : vector<8xf32>
    %10 = vector.multi_reduction <add>, %9, %cst_11 [0] : vector<16x8xf32> to vector<8xf32>
    %11 = vector.shape_cast %10 : vector<8xf32> to vector<1x8xf32>
    %12 = tpu.concatenate %7, %11 in 0 : vector<1x8xf32>, vector<1x8xf32> -> vector<2x8xf32>
    %cst_12 = arith.constant dense<0.000000e+00> : vector<2x8xf32>
    %13 = tpu.matmul %12, %2, %cst_12 {dimension_numbers = #tpu.dot_dimension_numbers<[1], [0], [0], [1], [0, 0, 1, 1], [], []>} : vector<2x8xf32>, vector<8x8xf32>, vector<2x8xf32> -> vector<2x8xf32>
    %14 = vector.extract_strided_slice %13 {offsets = [0, 0], sizes = [1, 8], strides = [1, 1]} : vector<2x8xf32> to vector<1x8xf32>
    %15 = vector.extract_strided_slice %13 {offsets = [1, 0], sizes = [1, 8], strides = [1, 1]} : vector<2x8xf32> to vector<1x8xf32>
    %16 = arith.mulf %14, %14 : vector<1x8xf32>
    %17 = arith.subf %15, %16 : vector<1x8xf32>
    %cst_13 = arith.constant 9.99999974E-6 : f32
    %18 = vector.broadcast %cst_13 : f32 to vector<1x8xf32>
    %19 = arith.addf %17, %18 : vector<1x8xf32>
    %20 = math.rsqrt %19 : vector<1x8xf32>
    %21 = arith.mulf %3, %20 : vector<1x8xf32>
    %22 = arith.mulf %14, %21 : vector<1x8xf32>
    %23 = arith.subf %4, %22 : vector<1x8xf32>
    %24 = vector.shape_cast %21 : vector<1x8xf32> to vector<1x1x8xf32>
    %25 = vector.broadcast %24 : vector<1x1x8xf32> to vector<16x16x8xf32>
    %26 = arith.mulf %1, %25 : vector<16x16x8xf32>
    %27 = vector.shape_cast %23 : vector<1x8xf32> to vector<1x1x8xf32>
    %28 = vector.broadcast %27 : vector<1x1x8xf32> to vector<16x16x8xf32>
    %29 = arith.addf %26, %28 : vector<16x16x8xf32>
    %30 = arith.negf %29 : vector<16x16x8xf32>
    %31 = math.exp %30 : vector<16x16x8xf32>
    %cst_14 = arith.constant 1.000000e+00 : f32
    %32 = vector.broadcast %cst_14 : f32 to vector<16x16x8xf32>
    %33 = arith.addf %32, %31 : vector<16x16x8xf32>
    %34 = arith.divf %32, %33 : vector<16x16x8xf32>
    %35 = arith.mulf %29, %34 : vector<16x16x8xf32>
    %cst_15 = arith.constant 0.000000e+00 : f32
    %36 = vector.broadcast %cst_15 : f32 to vector<16x1x8xf32>
    %37 = tpu.concatenate %36, %35, %36 in 1 : vector<16x1x8xf32>, vector<16x16x8xf32>, vector<16x1x8xf32> -> vector<16x18x8xf32>
    %cst_16 = arith.constant 0.000000e+00 : f32
    %38 = vector.broadcast %cst_16 : f32 to vector<342x8xf32>
    %c0_17 = arith.constant 0 : index
    %c0_18 = arith.constant 0 : index
    %39 = vector.load %arg8[%c0_17, %c0_18] : memref<342x8xf32, #tpu.memory_space<vmem>>, vector<342x8xf32>
    tpu.vector_store %arg8[%c0_17, %c0_18], %38 {strides = array<i32>} : memref<342x8xf32, #tpu.memory_space<vmem>>, vector<342x8xf32>,
    %40 = vector.shape_cast %37 : vector<16x18x8xf32> to vector<288x8xf32>
    %c18 = arith.constant 18 : index
    %c0_19 = arith.constant 0 : index
    %41 = vector.load %arg8[%c18, %c0_19] : memref<342x8xf32, #tpu.memory_space<vmem>>, vector<288x8xf32>
    tpu.vector_store %arg8[%c18, %c0_19], %40 {strides = array<i32>} : memref<342x8xf32, #tpu.memory_space<vmem>>, vector<288x8xf32>,
    %c0_20 = arith.constant 0 : index
    %c0_21 = arith.constant 0 : index
    %42 = vector.load %arg8[%c0_20, %c0_21] : memref<342x8xf32, #tpu.memory_space<vmem>>, vector<288x8xf32>
    %c1 = arith.constant 1 : index
    %c0_22 = arith.constant 0 : index
    %43 = vector.load %arg8[%c1, %c0_22] : memref<342x8xf32, #tpu.memory_space<vmem>>, vector<288x8xf32>
    %c2 = arith.constant 2 : index
    %c0_23 = arith.constant 0 : index
    %44 = vector.load %arg8[%c2, %c0_23] : memref<342x8xf32, #tpu.memory_space<vmem>>, vector<288x8xf32>
    %c18_24 = arith.constant 18 : index
    %c0_25 = arith.constant 0 : index
    %45 = vector.load %arg8[%c18_24, %c0_25] : memref<342x8xf32, #tpu.memory_space<vmem>>, vector<288x8xf32>
    %c19 = arith.constant 19 : index
    %c0_26 = arith.constant 0 : index
    %46 = vector.load %arg8[%c19, %c0_26] : memref<342x8xf32, #tpu.memory_space<vmem>>, vector<288x8xf32>
    %c20 = arith.constant 20 : index
    %c0_27 = arith.constant 0 : index
    %47 = vector.load %arg8[%c20, %c0_27] : memref<342x8xf32, #tpu.memory_space<vmem>>, vector<288x8xf32>
    %c36 = arith.constant 36 : index
    %c0_28 = arith.constant 0 : index
    %48 = vector.load %arg8[%c36, %c0_28] : memref<342x8xf32, #tpu.memory_space<vmem>>, vector<288x8xf32>
    %c37 = arith.constant 37 : index
    %c0_29 = arith.constant 0 : index
    %49 = vector.load %arg8[%c37, %c0_29] : memref<342x8xf32, #tpu.memory_space<vmem>>, vector<288x8xf32>
    %c38 = arith.constant 38 : index
    %c0_30 = arith.constant 0 : index
    %50 = vector.load %arg8[%c38, %c0_30] : memref<342x8xf32, #tpu.memory_space<vmem>>, vector<288x8xf32>
    %51 = tpu.concatenate %42, %43, %44, %45, %46, %47, %48, %49, %50 in 1 : vector<288x8xf32>, vector<288x8xf32>, vector<288x8xf32>, vector<288x8xf32>, vector<288x8xf32>, vector<288x8xf32>, vector<288x8xf32>, vector<288x8xf32>, vector<288x8xf32> -> vector<288x72xf32>
    %52 = arith.truncf %51 : vector<288x72xf32> to vector<288x72xbf16>
    %c0_31 = arith.constant 0 : index
    %c0_32 = arith.constant 0 : index
    %53 = vector.load %arg5[%c0_31, %c0_32] : memref<72x128xbf16, #tpu.memory_space<vmem>>, vector<72x128xbf16>
    %cst_33 = arith.constant dense<0.000000e+00> : vector<288x128xf32>
    %54 = tpu.matmul %52, %53, %cst_33 {dimension_numbers = #tpu.dot_dimension_numbers<[1], [0], [0], [1], [0, 0, 1, 1], [], []>} : vector<288x72xbf16>, vector<72x128xbf16>, vector<288x128xf32> -> vector<288x128xf32>
    %c0_34 = arith.constant 0 : index
    %c0_35 = arith.constant 0 : index
    %55 = vector.load %arg6[%c0_34, %c0_35] : memref<1x128xf32, #tpu.memory_space<vmem>>, vector<1x128xf32>
    %56 = vector.broadcast %55 : vector<1x128xf32> to vector<288x128xf32>
    %57 = arith.addf %54, %56 : vector<288x128xf32>
    %58 = vector.shape_cast %57 : vector<288x128xf32> to vector<16x18x128xf32>
    %59 = vector.extract_strided_slice %58 {offsets = [0, 0, 0], sizes = [16, 16, 16], strides = [1, 1, 1]} : vector<16x18x128xf32> to vector<16x16x16xf32>
    %60 = vector.shape_cast %59 : vector<16x16x16xf32> to vector<1x16x16x16xf32>
    %c0_36 = arith.constant 0 : index
    %c0_37 = arith.constant 0 : index
    %c0_38 = arith.constant 0 : index
    %c0_39 = arith.constant 0 : index
    %61 = vector.load %arg7[%c0_36, %c0_37, %c0_38, %c0_39] : memref<1x16x16x16xf32, #tpu.memory_space<vmem>>, vector<1x16x16x16xf32>
    tpu.vector_store %arg7[%c0_36, %c0_37, %c0_38, %c0_39], %60 {strides = array<i32>} : memref<1x16x16x16xf32, #tpu.memory_space<vmem>>, vector<1x16x16x16xf32>,
    return
  }
  func.func @transform_0(%arg0: i32) -> (i32, i32, i32, i32) {
    %c0_i32 = arith.constant 0 : i32
    %c0_i32_0 = arith.constant 0 : i32
    %c0_i32_1 = arith.constant 0 : i32
    %c0_i32_2 = arith.constant 0 : i32
    return %arg0, %c0_i32, %c0_i32_0, %c0_i32_1 : i32, i32, i32, i32
  }
  func.func @transform_1(%arg0: i32) -> (i32, i32) {
    %c0_i32 = arith.constant 0 : i32
    %c0_i32_0 = arith.constant 0 : i32
    %c0_i32_1 = arith.constant 0 : i32
    return %c0_i32, %c0_i32_0 : i32, i32
  }
  func.func @transform_2(%arg0: i32) -> (i32, i32) {
    %c0_i32 = arith.constant 0 : i32
    %c0_i32_0 = arith.constant 0 : i32
    %c0_i32_1 = arith.constant 0 : i32
    return %c0_i32, %c0_i32_0 : i32, i32
  }
  func.func @transform_3(%arg0: i32) -> (i32, i32) {
    %c0_i32 = arith.constant 0 : i32
    %c0_i32_0 = arith.constant 0 : i32
    %c0_i32_1 = arith.constant 0 : i32
    return %c0_i32, %c0_i32_0 : i32, i32
  }
  func.func @transform_4(%arg0: i32) -> (i32, i32) {
    %c0_i32 = arith.constant 0 : i32
    %c0_i32_0 = arith.constant 0 : i32
    %c0_i32_1 = arith.constant 0 : i32
    return %c0_i32, %c0_i32_0 : i32, i32
  }
  func.func @transform_5(%arg0: i32) -> (i32, i32) {
    %c0_i32 = arith.constant 0 : i32
    %c0_i32_0 = arith.constant 0 : i32
    %c0_i32_1 = arith.constant 0 : i32
    return %c0_i32, %c0_i32_0 : i32, i32
  }
  func.func @transform_6(%arg0: i32) -> (i32, i32, i32, i32) {
    %c0_i32 = arith.constant 0 : i32
    %c0_i32_0 = arith.constant 0 : i32
    %c0_i32_1 = arith.constant 0 : i32
    %c0_i32_2 = arith.constant 0 : i32
    return %arg0, %c0_i32, %c0_i32_0, %c0_i32_1 : i32, i32, i32, i32
  }
}

</mosaic_0001>

<llo_original>
// kernel: tpu_custom_call.1
$region0: #{tpu_custom_call.1}
  #allocation0 [shape = 'u32[]', space=smem, size = 0x4, offset = 0x4, fixed_abs, tag = 'smem constant byte address 0x4 - core index']
  #allocation1 [shape = 'u32[72,128]{1,0:T(1,128)}', space=vmem, size = 0x9000, scoped, tag = 'internal scratch']
  #allocation2 [shape = 'f32[342,8]{1,0:T(8,128)}', space=vmem, size = 0x2b000, scoped, tag = 'scratch operand']
  %s0 = inlined_call_operand.vmem [shape: f32[2,16,16,8], index: 0, kind: input, shape index: {}]
  %s1 = inlined_call_operand.vmem [shape: f32[8,8], index: 1, kind: input, shape index: {}]
  %s2 = inlined_call_operand.vmem [shape: f32[1,8], index: 2, kind: input, shape index: {}]
  %s3 = inlined_call_operand.vmem [shape: f32[1,8], index: 3, kind: input, shape index: {}]
  %s4 = inlined_call_operand.vmem [shape: bf16[72,128], index: 4, kind: input, shape index: {}]
  %s5 = inlined_call_operand.vmem [shape: f32[1,128], index: 5, kind: input, shape index: {}]
  %s6 = inlined_call_operand.hbm [shape: f32[2,16,16,16], index: 6, kind: output, shape index: {}]
  %s7 = sld [smem:[#allocation0]]
  $region57: #{tpu_custom_call.1} parent=0
    _
  %s9 = ssub.s32 1, %s7
  %s10 = scalar_select 0, %s9, %s7
  $region1: #{tpu_custom_call.1} parent=0
    #allocation3 [shape = 'u8[262144]{0}', space=vmem, size = 0x40000, scoped, tag = 'output window, operand 0']
    #allocation4 [shape = 's32[2]{0}', space=sflag, size = 0x8, scoped, tag = 'scoped memory for tpu_custom_call.1']
    %11 = vsyncpa [#allocation4], 0
    %s12 = scalar_lea.sflag [#allocation4], 1
    %13 = vsyncpa %s12, 0
    loop: start=0, step=1, limit=4
    $region2: #{tpu_custom_call.1} parent=1 // loop_pre_header
      _
    $region3: #{tpu_custom_call.1} parent=1 // loop_header
      %s15 = sphi 0, %s19
      %p16 = scmp.ge.s32.totalorder %s15, 4
      %s25 = sphi 0, %s27
      %s28 = sphi 0, %s25
      %s29 = sphi 0, %s28
      %s45 = sphi 0, %s29
      %s49 = sphi 0, %s49
      %s51 = sphi 0, %s49
      %s52 = sphi 0, %s51
      %s66 = sphi 0, %s52
      %s70 = sphi 0, %s70
      %s72 = sphi 0, %s70
      %s73 = sphi 0, %s72
      %s87 = sphi 0, %s73
      %s91 = sphi 0, %s91
      %s93 = sphi 0, %s91
      %s94 = sphi 0, %s93
      %s108 = sphi 0, %s94
      %s112 = sphi 0, %s112
      %s114 = sphi 0, %s112
      %s115 = sphi 0, %s114
      %s129 = sphi 0, %s115
      %s133 = sphi 0, %s133
      %s135 = sphi 0, %s133
      %s136 = sphi 0, %s135
      %s150 = sphi 0, %s136
      %s156 = sphi 0, %s158
      %s159 = sphi 0, %s156
      %s160 = sphi 0, %s159
      %s176 = sphi 0, %s160
    $region4: #{tpu_custom_call.1} parent=1 // loop_header_branch
      %18 = sbr.rel (%p16) target = $region8
    $region5: #{tpu_custom_call.1} parent=1 // loop_body
      %s20 = ssub.s32 %s15, 1
      %s21 = ssub.s32 %s15, 2
      %s22 = sadd.s32 %s15, 1
      %s23 = ssub.s32 %s15, %s22
      %p24 = scmp.eq.s32.totalorder %s23, 0
      %s26 = sadd.s32 %s25, 1
      %s27 = scalar_select %p24, %s25, %s26
      %p30 = pneg %p24
      %p31 = scmp.eq.s32.totalorder %s15, 1
      %p32 = por %p30, %p31
      %p33 = scmp.ne.s32.totalorder %s25, %s28
      %p34 = scmp.eq.s32.totalorder %s15, 0
      %p35 = por %p33, %p34
      %p36 = scmp.ne.s32.totalorder %s25, %s28
      %p37 = scmp.eq.s32.totalorder %s20, 1
      %p38 = por %p36, %p37
      %p39 = scmp.ne.s32.totalorder %s28, %s29
      %p40 = scmp.eq.s32.totalorder %s20, 0
      %p41 = por %p39, %p40
      %p42 = scmp.ne.s32.totalorder %s28, %s29
      %p43 = scmp.eq.s32.totalorder %s21, 1
      %p44 = por %p42, %p43
      %p46 = scmp.ne.s32.totalorder %s29, %s45
      %p47 = scmp.eq.s32.totalorder %s21, 0
      %p48 = por %p46, %p47
      %s50 = sadd.s32 %s49, 1
      %p53 = scmp.eq.s32.totalorder %s15, 1
      %p54 = scmp.ne.s32.totalorder %s49, %s51
      %p55 = scmp.eq.s32.totalorder %s15, 0
      %p56 = por %p54, %p55
      %p57 = scmp.ne.s32.totalorder %s49, %s51
      %p58 = scmp.eq.s32.totalorder %s20, 1
      %p59 = por %p57, %p58
      %p60 = scmp.ne.s32.totalorder %s51, %s52
      %p61 = scmp.eq.s32.totalorder %s20, 0
      %p62 = por %p60, %p61
      %p63 = scmp.ne.s32.totalorder %s51, %s52
      %p64 = scmp.eq.s32.totalorder %s21, 1
      %p65 = por %p63, %p64
      %p67 = scmp.ne.s32.totalorder %s52, %s66
      %p68 = scmp.eq.s32.totalorder %s21, 0
      %p69 = por %p67, %p68
      %s71 = sadd.s32 %s70, 1
      %p74 = scmp.eq.s32.totalorder %s15, 1
      %p75 = scmp.ne.s32.totalorder %s70, %s72
      %p76 = scmp.eq.s32.totalorder %s15, 0
      %p77 = por %p75, %p76
      %p78 = scmp.ne.s32.totalorder %s70, %s72
      %p79 = scmp.eq.s32.totalorder %s20, 1
      %p80 = por %p78, %p79
      %p81 = scmp.ne.s32.totalorder %s72, %s73
      %p82 = scmp.eq.s32.totalorder %s20, 0
      %p83 = por %p81, %p82
      %p84 = scmp.ne.s32.totalorder %s72, %s73
      %p85 = scmp.eq.s32.totalorder %s21, 1
      %p86 = por %p84, %p85
      %p88 = scmp.ne.s32.totalorder %s73, %s87
      %p89 = scmp.eq.s32.totalorder %s21, 0
      %p90 = por %p88, %p89
      %s92 = sadd.s32 %s91, 1
      %p95 = scmp.eq.s32.totalorder %s15, 1
      %p96 = scmp.ne.s32.totalorder %s91, %s93
      %p97 = scmp.eq.s32.totalorder %s15, 0
      %p98 = por %p96, %p97
      %p99 = scmp.ne.s32.totalorder %s91, %s93
      %p100 = scmp.eq.s32.totalorder %s20, 1
      %p101 = por %p99, %p100
      %p102 = scmp.ne.s32.totalorder %s93, %s94
      %p103 = scmp.eq.s32.totalorder %s20, 0
      %p104 = por %p102, %p103
      %p105 = scmp.ne.s32.totalorder %s93, %s94
      %p106 = scmp.eq.s32.totalorder %s21, 1
      %p107 = por %p105, %p106
      %p109 = scmp.ne.s32.totalorder %s94, %s108
      %p110 = scmp.eq.s32.totalorder %s21, 0
      %p111 = por %p109, %p110
      %s113 = sadd.s32 %s112, 1
      %p116 = scmp.eq.s32.totalorder %s15, 1
      %p117 = scmp.ne.s32.totalorder %s112, %s114
      %p118 = scmp.eq.s32.totalorder %s15, 0
      %p119 = por %p117, %p118
      %p120 = scmp.ne.s32.totalorder %s112, %s114
      %p121 = scmp.eq.s32.totalorder %s20, 1
      %p122 = por %p120, %p121
      %p123 = scmp.ne.s32.totalorder %s114, %s115
      %p124 = scmp.eq.s32.totalorder %s20, 0
      %p125 = por %p123, %p124
      %p126 = scmp.ne.s32.totalorder %s114, %s115
      %p127 = scmp.eq.s32.totalorder %s21, 1
      %p128 = por %p126, %p127
      %p130 = scmp.ne.s32.totalorder %s115, %s129
      %p131 = scmp.eq.s32.totalorder %s21, 0
      %p132 = por %p130, %p131
      %s134 = sadd.s32 %s133, 1
      %p137 = scmp.eq.s32.totalorder %s15, 1
      %p138 = scmp.ne.s32.totalorder %s133, %s135
      %p139 = scmp.eq.s32.totalorder %s15, 0
      %p140 = por %p138, %p139
      %p141 = scmp.ne.s32.totalorder %s133, %s135
      %p142 = scmp.eq.s32.totalorder %s20, 1
      %p143 = por %p141, %p142
      %p144 = scmp.ne.s32.totalorder %s135, %s136
      %p145 = scmp.eq.s32.totalorder %s20, 0
      %p146 = por %p144, %p145
      %p147 = scmp.ne.s32.totalorder %s135, %s136
      %p148 = scmp.eq.s32.totalorder %s21, 1
      %p149 = por %p147, %p148
      %p151 = scmp.ne.s32.totalorder %s136, %s150
      %p152 = scmp.eq.s32.totalorder %s21, 0
      %p153 = por %p151, %p152
      %s154 = ssub.s32 %s15, %s22
      %p155 = scmp.eq.s32.totalorder %s154, 0
      %s157 = sadd.s32 %s156, 1
      %s158 = scalar_select %p155, %s156, %s157
      %p161 = pneg %p155
      %p162 = scmp.eq.s32.totalorder %s15, 1
      %p163 = por %p161, %p162
      %p164 = scmp.ne.s32.totalorder %s156, %s159
      %p165 = scmp.eq.s32.totalorder %s15, 0
      %p166 = por %p164, %p165
      %p167 = scmp.ne.s32.totalorder %s156, %s159
      %p168 = scmp.eq.s32.totalorder %s20, 1
      %p169 = por %p167, %p168
      %p170 = scmp.ne.s32.totalorder %s159, %s160
      %p171 = scmp.eq.s32.totalorder %s20, 0
      %p172 = por %p170, %p171
      %p173 = scmp.ne.s32.totalorder %s159, %s160
      %p174 = scmp.eq.s32.totalorder %s21, 1
      %p175 = por %p173, %p174
      %p177 = scmp.ne.s32.totalorder %s160, %s176
      %p178 = scmp.eq.s32.totalorder %s21, 0
      %p179 = por %p177, %p178
      %p180 = scmp.le.s32.totalorder 1, %s15
      %p181 = scmp.lt.s32.totalorder %s15, 3
      %p182 = pnand %p180, %p181
      %p183 = pneg %p182
      // Predicated region
      $region9: #{tpu_custom_call.1} parent=5 // pred_check
        _
      $region10: #{tpu_custom_call.1} parent=5 // pred_check_branch
        %185 = sbr.rel (%p182) target = $region12
      $region11: #{tpu_custom_call.1} parent=5 // pred_region
        %s186 = ssub.s32 %s15, 1
        // Predicated region
        $region13: #{tpu_custom_call.1} parent=11 // pred_check
          %p187 = pneg %p62
        $region14: #{tpu_custom_call.1} parent=11 // pred_check_branch
          %189 = sbr.rel (%p187) target = $region16
        $region15: #{tpu_custom_call.1} parent=11 // pred_region
          _
        $region16: #{tpu_custom_call.1} parent=11 // pred_fallthru
          _
        // Predicated region
        $region17: #{tpu_custom_call.1} parent=11 // pred_check
          %p190 = pneg %p83
        $region18: #{tpu_custom_call.1} parent=11 // pred_check_branch
          %192 = sbr.rel (%p190) target = $region20
        $region19: #{tpu_custom_call.1} parent=11 // pred_region
          _
        $region20: #{tpu_custom_call.1} parent=11 // pred_fallthru
          _
        // Predicated region
        $region21: #{tpu_custom_call.1} parent=11 // pred_check
          %p193 = pneg %p104
        $region22: #{tpu_custom_call.1} parent=11 // pred_check_branch
          %195 = sbr.rel (%p193) target = $region24
        $region23: #{tpu_custom_call.1} parent=11 // pred_region
          _
        $region24: #{tpu_custom_call.1} parent=11 // pred_fallthru
          _
        // Predicated region
        $region25: #{tpu_custom_call.1} parent=11 // pred_check
          %p196 = pneg %p125
        $region26: #{tpu_custom_call.1} parent=11 // pred_check_branch
          %198 = sbr.rel (%p196) target = $region28
        $region27: #{tpu_custom_call.1} parent=11 // pred_region
          _
        $region28: #{tpu_custom_call.1} parent=11 // pred_fallthru
          _
        // Predicated region
        $region29: #{tpu_custom_call.1} parent=11 // pred_check
          %p199 = pneg %p146
        $region30: #{tpu_custom_call.1} parent=11 // pred_check_branch
          %201 = sbr.rel (%p199) target = $region32
        $region31: #{tpu_custom_call.1} parent=11 // pred_region
          _
        $region32: #{tpu_custom_call.1} parent=11 // pred_fallthru
          _
      $region12: #{tpu_custom_call.1} parent=5 // pred_fallthru
        _
      %p202 = scmp.lt.s32.totalorder %s15, 2
      // Predicated region
      $region33: #{tpu_custom_call.1} parent=5 // pred_check
        %p203 = pneg %p202
      $region34: #{tpu_custom_call.1} parent=5 // pred_check_branch
        %205 = sbr.rel (%p203) target = $region36
      $region35: #{tpu_custom_call.1} parent=5 // pred_region
        // Predicated region
        $region37: #{tpu_custom_call.1} parent=35 // pred_check
          %p206 = pneg %p35
        $region38: #{tpu_custom_call.1} parent=35 // pred_check_branch
          %208 = sbr.rel (%p206) target = $region40
        $region39: #{tpu_custom_call.1} parent=35 // pred_region
          %p209 = scmp.lt.s32.totalorder %s15, 1
          %s210 = scalar_select %p209, %s15, 1
          %s211 = smul.addr %s210, 32
          %s212 = smul.addr %s211, 8
          %s213 = scalar_lea.vmem %s0, %s212
        $region40: #{tpu_custom_call.1} parent=35 // pred_fallthru
          _
      $region36: #{tpu_custom_call.1} parent=5 // pred_fallthru
        _
      %p214 = scmp.le.s32.totalorder 1, %s15
      %p215 = scmp.lt.s32.totalorder %s15, 3
      %p216 = pnand %p214, %p215
      %p217 = pneg %p216
      // Predicated region
      $region41: #{tpu_custom_call.1} parent=5 // pred_check
        _
      $region42: #{tpu_custom_call.1} parent=5 // pred_check_branch
        %219 = sbr.rel (%p216) target = $region44
      $region43: #{tpu_custom_call.1} parent=5 // pred_region
        %s220 = ssub.s32 %s15, 1
        %p221 = scmp.lt.s32.totalorder %s20, 1
        %s222 = scalar_select %p221, %s20, 1
        %s223 = smul.addr %s222, 32
        %s224 = smul.addr %s223, 8
        %s225 = scalar_lea.vmem %s0, %s224
        %p226 = pneg %p41
        %p227 = pneg %p38
        %p228 = pneg %p62
        %p229 = pneg %p59
        %p230 = pneg %p83
        %p231 = pneg %p80
        %p232 = pneg %p104
        %p233 = pneg %p101
        %p234 = pneg %p125
        %p235 = pneg %p122
        %p236 = pneg %p146
        %p237 = pneg %p143
        %p238 = pneg %p172
        %p239 = pneg %p169
        %s240 = sand.u32 %s159, 1
        %s241 = scalar_lea.sflag [#allocation4], %s240
        %s242 = sand.u32 %s159, 1
        %s243 = smul.addr %s242, 256
        %s244 = scalar_lea.vmem [#allocation3], %s243
        %p245 = scmp.lt.s32.totalorder %s20, 1
        %s246 = scalar_select %p245, %s20, 1
        %s247 = smul.addr %s246, 32
        %s248 = smul.addr %s247, 8
        %s249 = scalar_lea.vmem %s0, %s248
        %v251 = vld [vmem:[%s249] sm:$0xff]
        %v252 = vld [vmem:[%s249 + $0x8] sm:$0xff]
        %v253 = vld [vmem:[%s249 + $0x10] sm:$0xff]
        %v254 = vld [vmem:[%s249 + $0x18] sm:$0xff]
        %v255 = vld [vmem:[%s249 + $0x20] sm:$0xff]
        %v256 = vld [vmem:[%s249 + $0x28] sm:$0xff]
        %v257 = vld [vmem:[%s249 + $0x30] sm:$0xff]
        %v258 = vld [vmem:[%s249 + $0x38] sm:$0xff]
        %v259 = vld [vmem:[%s249 + $0x40] sm:$0xff]
        %v260 = vld [vmem:[%s249 + $0x48] sm:$0xff]
        %v261 = vld [vmem:[%s249 + $0x50] sm:$0xff]
        %v262 = vld [vmem:[%s249 + $0x58] sm:$0xff]
        %v263 = vld [vmem:[%s249 + $0x60] sm:$0xff]
        %v264 = vld [vmem:[%s249 + $0x68] sm:$0xff]
        %v265 = vld [vmem:[%s249 + $0x70] sm:$0xff]
        %v266 = vld [vmem:[%s249 + $0x78] sm:$0xff]
        %v267 = vld [vmem:[%s249 + $0x80] sm:$0xff]
        %v268 = vld [vmem:[%s249 + $0x88] sm:$0xff]
        %v269 = vld [vmem:[%s249 + $0x90] sm:$0xff]
        %v270 = vld [vmem:[%s249 + $0x98] sm:$0xff]
        %v271 = vld [vmem:[%s249 + $0xa0] sm:$0xff]
        %v272 = vld [vmem:[%s249 + $0xa8] sm:$0xff]
        %v273 = vld [vmem:[%s249 + $0xb0] sm:$0xff]
        %v274 = vld [vmem:[%s249 + $0xb8] sm:$0xff]
        %v275 = vld [vmem:[%s249 + $0xc0] sm:$0xff]
        %v276 = vld [vmem:[%s249 + $0xc8] sm:$0xff]
        %v277 = vld [vmem:[%s249 + $0xd0] sm:$0xff]
        %v278 = vld [vmem:[%s249 + $0xd8] sm:$0xff]
        %v279 = vld [vmem:[%s249 + $0xe0] sm:$0xff]
        %v280 = vld [vmem:[%s249 + $0xe8] sm:$0xff]
        %v281 = vld [vmem:[%s249 + $0xf0] sm:$0xff]
        %v282 = vld [vmem:[%s249 + $0xf8] sm:$0xff]
        %v283 = vld [vmem:[%s1] sm:$0xff]
        %v284 = vld [vmem:[%s2] sm:$0x1]
        %v285 = vld [vmem:[%s3] sm:$0x1]
        %vm286 = vcmask 64512
        %v287 = vsel %vm286, %v251, 0.0
        %v288 = vsel %vm286, %v253, 0.0
        %v289 = vadd.f32 %v287, %v288
        %v290 = vsel %vm286, %v255, 0.0
        %v291 = vadd.f32 %v289, %v290
        %v292 = vsel %vm286, %v257, 0.0
        %v293 = vadd.f32 %v291, %v292
        %v294 = vsel %vm286, %v259, 0.0
        %v295 = vadd.f32 %v293, %v294
        %v296 = vsel %vm286, %v261, 0.0
        %v297 = vadd.f32 %v295, %v296
        %v298 = vsel %vm286, %v263, 0.0
        %v299 = vadd.f32 %v297, %v298
        %v300 = vsel %vm286, %v265, 0.0
        %v301 = vadd.f32 %v299, %v300
        %v302 = vsel %vm286, %v267, 0.0
        %v303 = vadd.f32 %v301, %v302
        %v304 = vsel %vm286, %v269, 0.0
        %v305 = vadd.f32 %v303, %v304
        %v306 = vsel %vm286, %v271, 0.0
        %v307 = vadd.f32 %v305, %v306
        %v308 = vsel %vm286, %v273, 0.0
        %v309 = vadd.f32 %v307, %v308
        %v310 = vsel %vm286, %v275, 0.0
        %v311 = vadd.f32 %v309, %v310
        %v312 = vsel %vm286, %v277, 0.0
        %v313 = vadd.f32 %v311, %v312
        %v314 = vsel %vm286, %v279, 0.0
        %v315 = vadd.f32 %v313, %v314
        %v316 = vsel %vm286, %v281, 0.0
        %v317 = vadd.f32 %v315, %v316
        %v318 = vsel %vm286, %v252, 0.0
        %v319 = vsel %vm286, %v254, 0.0
        %v320 = vadd.f32 %v318, %v319
        %v321 = vsel %vm286, %v256, 0.0
        %v322 = vadd.f32 %v320, %v321
        %v323 = vsel %vm286, %v258, 0.0
        %v324 = vadd.f32 %v322, %v323
        %v325 = vsel %vm286, %v260, 0.0
        %v326 = vadd.f32 %v324, %v325
        %v327 = vsel %vm286, %v262, 0.0
        %v328 = vadd.f32 %v326, %v327
        %v329 = vsel %vm286, %v264, 0.0
        %v330 = vadd.f32 %v328, %v329
        %v331 = vsel %vm286, %v266, 0.0
        %v332 = vadd.f32 %v330, %v331
        %v333 = vsel %vm286, %v268, 0.0
        %v334 = vadd.f32 %v332, %v333
        %v335 = vsel %vm286, %v270, 0.0
        %v336 = vadd.f32 %v334, %v335
        %v337 = vsel %vm286, %v272, 0.0
        %v338 = vadd.f32 %v336, %v337
        %v339 = vsel %vm286, %v274, 0.0
        %v340 = vadd.f32 %v338, %v339
        %v341 = vsel %vm286, %v276, 0.0
        %v342 = vadd.f32 %v340, %v341
        %v343 = vsel %vm286, %v278, 0.0
        %v344 = vadd.f32 %v342, %v343
        %v345 = vsel %vm286, %v280, 0.0
        %v346 = vadd.f32 %v344, %v345
        %v347 = vsel %vm286, %v282, 0.0
        %v348 = vadd.f32 %v346, %v347
        %v349 = vsel %vm286, %v317, 0.0
        %v350 = vsel %vm286, %v348, 0.0
        %v351 = vadd.f32 %v349, %v350
        %v352 = vrot.slane %v351, 4
        %v353 = vadd.f32 %v351, %v352
        %v354 = vrot.slane %v353, 2
        %v355 = vadd.f32 %v353, %v354
        %v356 = vrot.slane %v355, 1
        %v357 = vadd.f32 %v355, %v356
        %v358 = vmul.f32 %v251, %v251
        %v359 = vmul.f32 %v252, %v252
        %v360 = vmul.f32 %v253, %v253
        %v361 = vmul.f32 %v254, %v254
        %v362 = vmul.f32 %v255, %v255
        %v363 = vmul.f32 %v256, %v256
        %v364 = vmul.f32 %v257, %v257
        %v365 = vmul.f32 %v258, %v258
        %v366 = vmul.f32 %v259, %v259
        %v367 = vmul.f32 %v260, %v260
        %v368 = vmul.f32 %v261, %v261
        %v369 = vmul.f32 %v262, %v262
        %v370 = vmul.f32 %v263, %v263
        %v371 = vmul.f32 %v264, %v264
        %v372 = vmul.f32 %v265, %v265
        %v373 = vmul.f32 %v266, %v266
        %v374 = vmul.f32 %v267, %v267
        %v375 = vmul.f32 %v268, %v268
        %v376 = vmul.f32 %v269, %v269
        %v377 = vmul.f32 %v270, %v270
        %v378 = vmul.f32 %v271, %v271
        %v379 = vmul.f32 %v272, %v272
        %v380 = vmul.f32 %v273, %v273
        %v381 = vmul.f32 %v274, %v274
        %v382 = vmul.f32 %v275, %v275
        %v383 = vmul.f32 %v276, %v276
        %v384 = vmul.f32 %v277, %v277
        %v385 = vmul.f32 %v278, %v278
        %v386 = vmul.f32 %v279, %v279
        %v387 = vmul.f32 %v280, %v280
        %v388 = vmul.f32 %v281, %v281
        %v389 = vmul.f32 %v282, %v282
        %v390 = vsel %vm286, %v358, 0.0
        %v391 = vsel %vm286, %v360, 0.0
        %v392 = vadd.f32 %v390, %v391
        %v393 = vsel %vm286, %v362, 0.0
        %v394 = vadd.f32 %v392, %v393
        %v395 = vsel %vm286, %v364, 0.0
        %v396 = vadd.f32 %v394, %v395
        %v397 = vsel %vm286, %v366, 0.0
        %v398 = vadd.f32 %v396, %v397
        %v399 = vsel %vm286, %v368, 0.0
        %v400 = vadd.f32 %v398, %v399
        %v401 = vsel %vm286, %v370, 0.0
        %v402 = vadd.f32 %v400, %v401
        %v403 = vsel %vm286, %v372, 0.0
        %v404 = vadd.f32 %v402, %v403
        %v405 = vsel %vm286, %v374, 0.0
        %v406 = vadd.f32 %v404, %v405
        %v407 = vsel %vm286, %v376, 0.0
        %v408 = vadd.f32 %v406, %v407
        %v409 = vsel %vm286, %v378, 0.0
        %v410 = vadd.f32 %v408, %v409
        %v411 = vsel %vm286, %v380, 0.0
        %v412 = vadd.f32 %v410, %v411
        %v413 = vsel %vm286, %v382, 0.0
        %v414 = vadd.f32 %v412, %v413
        %v415 = vsel %vm286, %v384, 0.0
        %v416 = vadd.f32 %v414, %v415
        %v417 = vsel %vm286, %v386, 0.0
        %v418 = vadd.f32 %v416, %v417
        %v419 = vsel %vm286, %v388, 0.0
        %v420 = vadd.f32 %v418, %v419
        %v421 = vsel %vm286, %v359, 0.0
        %v422 = vsel %vm286, %v361, 0.0
        %v423 = vadd.f32 %v421, %v422
        %v424 = vsel %vm286, %v363, 0.0
        %v425 = vadd.f32 %v423, %v424
        %v426 = vsel %vm286, %v365, 0.0
        %v427 = vadd.f32 %v425, %v426
        %v428 = vsel %vm286, %v367, 0.0
        %v429 = vadd.f32 %v427, %v428
        %v430 = vsel %vm286, %v369, 0.0
        %v431 = vadd.f32 %v429, %v430
        %v432 = vsel %vm286, %v371, 0.0
        %v433 = vadd.f32 %v431, %v432
        %v434 = vsel %vm286, %v373, 0.0
        %v435 = vadd.f32 %v433, %v434
        %v436 = vsel %vm286, %v375, 0.0
        %v437 = vadd.f32 %v435, %v436
        %v438 = vsel %vm286, %v377, 0.0
        %v439 = vadd.f32 %v437, %v438
        %v440 = vsel %vm286, %v379, 0.0
        %v441 = vadd.f32 %v439, %v440
        %v442 = vsel %vm286, %v381, 0.0
        %v443 = vadd.f32 %v441, %v442
        %v444 = vsel %vm286, %v383, 0.0
        %v445 = vadd.f32 %v443, %v444
        %v446 = vsel %vm286, %v385, 0.0
        %v447 = vadd.f32 %v445, %v446
        %v448 = vsel %vm286, %v387, 0.0
        %v449 = vadd.f32 %v447, %v448
        %v450 = vsel %vm286, %v389, 0.0
        %v451 = vadd.f32 %v449, %v450
        %v452 = vsel %vm286, %v420, 0.0
        %v453 = vsel %vm286, %v451, 0.0
        %v454 = vadd.f32 %v452, %v453
        %v455 = vrot.slane %v454, 4
        %v456 = vadd.f32 %v454, %v455
        %v457 = vrot.slane %v456, 2
        %v458 = vadd.f32 %v456, %v457
        %v459 = vrot.slane %v458, 1
        %v460 = vadd.f32 %v458, %v459
        %vm461 = vcmask 1040384
        %v462 = vsel %vm461, %v357, %v460
        %v464 = vsel %vm286, %v462, 0
        %466 = vmatpush.msra.mxu0 0.0
        %467 = vmatpush.msra.mxu0 0.0
        %468 = vmatpush.msra.mxu0 0.0
        %469 = vmatpush.msra.mxu0 0.0
        %470 = vmatpush.msra.mxu0 0.0
        %471 = vmatpush.msra.mxu0 0.0
        %472 = vmatpush.msra.mxu0 0.0
        %473 = vmatpush.msra.mxu0 0.0
        %474 = vmatpush.msra.mxu0 0.0
        %475 = vmatpush.msra.mxu0 0.0
        %476 = vmatpush.msra.mxu0 0.0
        %477 = vmatpush.msra.mxu0 0.0
        %478 = vmatpush.msra.mxu0 0.0
        %479 = vmatpush.msra.mxu0 0.0
        %480 = vmatpush.msra.mxu0 0.0
        %481 = vmatpush.msra.mxu0 %v283
        %482 = vmatmul.f32.gmra.mxu0 %v464
        %v483 = vpop.f32.mrf.mxu0
        %v484 = vadd.f32 0.0, %v483
        %485 = vdwg.mxu0
        %v486 = vmul.f32 %v484, %v484
        %v488 = vrot.slane %v486, 7
        %v490 = vsub.f32 %v484, %v488
        %v491 = vadd.f32 %v490, 1e-05
        %v492 = vrsqrt.pop %v491
        %v493 = vmul.f32 %v492, %v491
        %v494 = vmul.f32 %v493, %v492
        %v495 = vmul.f32 0.5, %v494
        %v496 = vsub.f32 1.5, %v495
        %v497 = vmul.f32 %v492, %v496
        %vm498 = vweird.f32 %v491
        %vm499 = vweird.f32 %v492
        %vm500 = vmor %vm498, %vm499
        %v501 = vsel %vm500, %v492, %v497
        %503 = vst [vmem:[#allocation1] sm:$0xff] %v501
        %s504 = scalar_lea.vmem [#allocation1], 1
        %v505 = vld [vmem:[%s504] ss:$9 sm:$0xff]
        %v507 = vmul.f32 %v284, %v505
        %v508 = vmul.f32 %v484, %v507
        %v509 = vsub.f32 %v285, %v508
        %v511 = vperm.slane %v507, 0
        %v513 = vmul.f32 %v251, %v511
        %v514 = vmul.f32 %v252, %v511
        %v515 = vmul.f32 %v253, %v511
        %v516 = vmul.f32 %v254, %v511
        %v517 = vmul.f32 %v255, %v511
        %v518 = vmul.f32 %v256, %v511
        %v519 = vmul.f32 %v257, %v511
        %v520 = vmul.f32 %v258, %v511
        %v521 = vmul.f32 %v259, %v511
        %v522 = vmul.f32 %v260, %v511
        %v523 = vmul.f32 %v261, %v511
        %v524 = vmul.f32 %v262, %v511
        %v525 = vmul.f32 %v263, %v511
        %v526 = vmul.f32 %v264, %v511
        %v527 = vmul.f32 %v265, %v511
        %v528 = vmul.f32 %v266, %v511
        %v529 = vmul.f32 %v267, %v511
        %v530 = vmul.f32 %v268, %v511
        %v531 = vmul.f32 %v269, %v511
        %v532 = vmul.f32 %v270, %v511
        %v533 = vmul.f32 %v271, %v511
        %v534 = vmul.f32 %v272, %v511
        %v535 = vmul.f32 %v273, %v511
        %v536 = vmul.f32 %v274, %v511
        %v537 = vmul.f32 %v275, %v511
        %v538 = vmul.f32 %v276, %v511
        %v539 = vmul.f32 %v277, %v511
        %v540 = vmul.f32 %v278, %v511
        %v541 = vmul.f32 %v279, %v511
        %v542 = vmul.f32 %v280, %v511
        %v543 = vmul.f32 %v281, %v511
        %v544 = vmul.f32 %v282, %v511
        %v546 = vperm.slane %v509, 0
        %v548 = vadd.f32 %v513, %v546
        %v549 = vadd.f32 %v514, %v546
        %v550 = vadd.f32 %v515, %v546
        %v551 = vadd.f32 %v516, %v546
        %v552 = vadd.f32 %v517, %v546
        %v553 = vadd.f32 %v518, %v546
        %v554 = vadd.f32 %v519, %v546
        %v555 = vadd.f32 %v520, %v546
        %v556 = vadd.f32 %v521, %v546
        %v557 = vadd.f32 %v522, %v546
        %v558 = vadd.f32 %v523, %v546
        %v559 = vadd.f32 %v524, %v546
        %v560 = vadd.f32 %v525, %v546
        %v561 = vadd.f32 %v526, %v546
        %v562 = vadd.f32 %v527, %v546
        %v563 = vadd.f32 %v528, %v546
        %v564 = vadd.f32 %v529, %v546
        %v565 = vadd.f32 %v530, %v546
        %v566 = vadd.f32 %v531, %v546
        %v567 = vadd.f32 %v532, %v546
        %v568 = vadd.f32 %v533, %v546
        %v569 = vadd.f32 %v534, %v546
        %v570 = vadd.f32 %v535, %v546
        %v571 = vadd.f32 %v536, %v546
        %v572 = vadd.f32 %v537, %v546
        %v573 = vadd.f32 %v538, %v546
        %v574 = vadd.f32 %v539, %v546
        %v575 = vadd.f32 %v540, %v546
        %v576 = vadd.f32 %v541, %v546
        %v577 = vadd.f32 %v542, %v546
        %v578 = vadd.f32 %v543, %v546
        %v579 = vadd.f32 %v544, %v546
        %v580 = vxor.u32 %v548, 2147483648
        %v581 = vxor.u32 %v549, 2147483648
        %v582 = vxor.u32 %v550, 2147483648
        %v583 = vxor.u32 %v551, 2147483648
        %v584 = vxor.u32 %v552, 2147483648
        %v585 = vxor.u32 %v553, 2147483648
        %v586 = vxor.u32 %v554, 2147483648
        %v587 = vxor.u32 %v555, 2147483648
        %v588 = vxor.u32 %v556, 2147483648
        %v589 = vxor.u32 %v557, 2147483648
        %v590 = vxor.u32 %v558, 2147483648
        %v591 = vxor.u32 %v559, 2147483648
        %v592 = vxor.u32 %v560, 2147483648
        %v593 = vxor.u32 %v561, 2147483648
        %v594 = vxor.u32 %v562, 2147483648
        %v595 = vxor.u32 %v563, 2147483648
        %v596 = vxor.u32 %v564, 2147483648
        %v597 = vxor.u32 %v565, 2147483648
        %v598 = vxor.u32 %v566, 2147483648
        %v599 = vxor.u32 %v567, 2147483648
        %v600 = vxor.u32 %v568, 2147483648
        %v601 = vxor.u32 %v569, 2147483648
        %v602 = vxor.u32 %v570, 2147483648
        %v603 = vxor.u32 %v571, 2147483648
        %v604 = vxor.u32 %v572, 2147483648
        %v605 = vxor.u32 %v573, 2147483648
        %v606 = vxor.u32 %v574, 2147483648
        %v607 = vxor.u32 %v575, 2147483648
        %v608 = vxor.u32 %v576, 2147483648
        %v609 = vxor.u32 %v577, 2147483648
        %v610 = vxor.u32 %v578, 2147483648
        %v611 = vxor.u32 %v579, 2147483648
        %v612 = vmul.f32 %v580, 1.442695
        %v613 = vpow.pop %v612
        %v614 = vmul.f32 %v581, 1.442695
        %v615 = vpow.pop %v614
        %v616 = vmul.f32 %v582, 1.442695
        %v617 = vpow.pop %v616
        %v618 = vmul.f32 %v583, 1.442695
        %v619 = vpow.pop %v618
        %v620 = vmul.f32 %v584, 1.442695
        %v621 = vpow.pop %v620
        %v622 = vmul.f32 %v585, 1.442695
        %v623 = vpow.pop %v622
        %v624 = vmul.f32 %v586, 1.442695
        %v625 = vpow.pop %v624
        %v626 = vmul.f32 %v587, 1.442695
        %v627 = vpow.pop %v626
        %v628 = vmul.f32 %v588, 1.442695
        %v629 = vpow.pop %v628
        %v630 = vmul.f32 %v589, 1.442695
        %v631 = vpow.pop %v630
        %v632 = vmul.f32 %v590, 1.442695
        %v633 = vpow.pop %v632
        %v634 = vmul.f32 %v591, 1.442695
        %v635 = vpow.pop %v634
        %v636 = vmul.f32 %v592, 1.442695
        %v637 = vpow.pop %v636
        %v638 = vmul.f32 %v593, 1.442695
        %v639 = vpow.pop %v638
        %v640 = vmul.f32 %v594, 1.442695
        %v641 = vpow.pop %v640
        %v642 = vmul.f32 %v595, 1.442695
        %v643 = vpow.pop %v642
        %v644 = vmul.f32 %v596, 1.442695
        %v645 = vpow.pop %v644
        %v646 = vmul.f32 %v597, 1.442695
        %v647 = vpow.pop %v646
        %v648 = vmul.f32 %v598, 1.442695
        %v649 = vpow.pop %v648
        %v650 = vmul.f32 %v599, 1.442695
        %v651 = vpow.pop %v650
        %v652 = vmul.f32 %v600, 1.442695
        %v653 = vpow.pop %v652
        %v654 = vmul.f32 %v601, 1.442695
        %v655 = vpow.pop %v654
        %v656 = vmul.f32 %v602, 1.442695
        %v657 = vpow.pop %v656
        %v658 = vmul.f32 %v603, 1.442695
        %v659 = vpow.pop %v658
        %v660 = vmul.f32 %v604, 1.442695
        %v661 = vpow.pop %v660
        %v662 = vmul.f32 %v605, 1.442695
        %v663 = vpow.pop %v662
        %v664 = vmul.f32 %v606, 1.442695
        %v665 = vpow.pop %v664
        %v666 = vmul.f32 %v607, 1.442695
        %v667 = vpow.pop %v666
        %v668 = vmul.f32 %v608, 1.442695
        %v669 = vpow.pop %v668
        %v670 = vmul.f32 %v609, 1.442695
        %v671 = vpow.pop %v670
        %v672 = vmul.f32 %v610, 1.442695
        %v673 = vpow.pop %v672
        %v674 = vmul.f32 %v611, 1.442695
        %v675 = vpow.pop %v674
        %v676 = vadd.f32 %v613, 1.0
        %v677 = vadd.f32 %v615, 1.0
        %v678 = vadd.f32 %v617, 1.0
        %v679 = vadd.f32 %v619, 1.0
        %v680 = vadd.f32 %v621, 1.0
        %v681 = vadd.f32 %v623, 1.0
        %v682 = vadd.f32 %v625, 1.0
        %v683 = vadd.f32 %v627, 1.0
        %v684 = vadd.f32 %v629, 1.0
        %v685 = vadd.f32 %v631, 1.0
        %v686 = vadd.f32 %v633, 1.0
        %v687 = vadd.f32 %v635, 1.0
        %v688 = vadd.f32 %v637, 1.0
        %v689 = vadd.f32 %v639, 1.0
        %v690 = vadd.f32 %v641, 1.0
        %v691 = vadd.f32 %v643, 1.0
        %v692 = vadd.f32 %v645, 1.0
        %v693 = vadd.f32 %v647, 1.0
        %v694 = vadd.f32 %v649, 1.0
        %v695 = vadd.f32 %v651, 1.0
        %v696 = vadd.f32 %v653, 1.0
        %v697 = vadd.f32 %v655, 1.0
        %v698 = vadd.f32 %v657, 1.0
        %v699 = vadd.f32 %v659, 1.0
        %v700 = vadd.f32 %v661, 1.0
        %v701 = vadd.f32 %v663, 1.0
        %v702 = vadd.f32 %v665, 1.0
        %v703 = vadd.f32 %v667, 1.0
        %v704 = vadd.f32 %v669, 1.0
        %v705 = vadd.f32 %v671, 1.0
        %v706 = vadd.f32 %v673, 1.0
        %v707 = vadd.f32 %v675, 1.0
        %v708 = vrcp.pop %v676
        %v709 = vmul.f32 %v676, %v708
        %v710 = vsub.f32 1.0, %v709
        %v711 = vmul.f32 %v708, %v710
        %v712 = vadd.f32 %v708, %v711
        %vm713 = vweird.f32 %v676
        %vm714 = vweird.f32 %v708
        %vm715 = vmor %vm713, %vm714
        %v716 = vsel %vm715, %v708, %v712
        %v717 = vand.u32 2147483647, %v676
        %vm718 = vcmp.eq.f32.partialorder %v717, 8.507059e+37
        %v719 = vand.u32 %v676, 2147483648
        %v720 = vor.u32 1.1754944e-38, %v719
        %v721 = vsel %vm718, %v720, %v716
        %v722 = vmul.f32 1.0, %v721
        %v723 = vrcp.pop %v677
        %v724 = vmul.f32 %v677, %v723
        %v725 = vsub.f32 1.0, %v724
        %v726 = vmul.f32 %v723, %v725
        %v727 = vadd.f32 %v723, %v726
        %vm728 = vweird.f32 %v677
        %vm729 = vweird.f32 %v723
        %vm730 = vmor %vm728, %vm729
        %v731 = vsel %vm730, %v723, %v727
        %v732 = vand.u32 2147483647, %v677
        %vm733 = vcmp.eq.f32.partialorder %v732, 8.507059e+37
        %v734 = vand.u32 %v677, 2147483648
        %v735 = vor.u32 1.1754944e-38, %v734
        %v736 = vsel %vm733, %v735, %v731
        %v737 = vmul.f32 1.0, %v736
        %v738 = vrcp.pop %v678
        %v739 = vmul.f32 %v678, %v738
        %v740 = vsub.f32 1.0, %v739
        %v741 = vmul.f32 %v738, %v740
        %v742 = vadd.f32 %v738, %v741
        %vm743 = vweird.f32 %v678
        %vm744 = vweird.f32 %v738
        %vm745 = vmor %vm743, %vm744
        %v746 = vsel %vm745, %v738, %v742
        %v747 = vand.u32 2147483647, %v678
        %vm748 = vcmp.eq.f32.partialorder %v747, 8.507059e+37
        %v749 = vand.u32 %v678, 2147483648
        %v750 = vor.u32 1.1754944e-38, %v749
        %v751 = vsel %vm748, %v750, %v746
        %v752 = vmul.f32 1.0, %v751
        %v753 = vrcp.pop %v679
        %v754 = vmul.f32 %v679, %v753
        %v755 = vsub.f32 1.0, %v754
        %v756 = vmul.f32 %v753, %v755
        %v757 = vadd.f32 %v753, %v756
        %vm758 = vweird.f32 %v679
        %vm759 = vweird.f32 %v753
        %vm760 = vmor %vm758, %vm759
        %v761 = vsel %vm760, %v753, %v757
        %v762 = vand.u32 2147483647, %v679
        %vm763 = vcmp.eq.f32.partialorder %v762, 8.507059e+37
        %v764 = vand.u32 %v679, 2147483648
        %v765 = vor.u32 1.1754944e-38, %v764
        %v766 = vsel %vm763, %v765, %v761
        %v767 = vmul.f32 1.0, %v766
        %v768 = vrcp.pop %v680
        %v769 = vmul.f32 %v680, %v768
        %v770 = vsub.f32 1.0, %v769
        %v771 = vmul.f32 %v768, %v770
        %v772 = vadd.f32 %v768, %v771
        %vm773 = vweird.f32 %v680
        %vm774 = vweird.f32 %v768
        %vm775 = vmor %vm773, %vm774
        %v776 = vsel %vm775, %v768, %v772
        %v777 = vand.u32 2147483647, %v680
        %vm778 = vcmp.eq.f32.partialorder %v777, 8.507059e+37
        %v779 = vand.u32 %v680, 2147483648
        %v780 = vor.u32 1.1754944e-38, %v779
        %v781 = vsel %vm778, %v780, %v776
        %v782 = vmul.f32 1.0, %v781
        %v783 = vrcp.pop %v681
        %v784 = vmul.f32 %v681, %v783
        %v785 = vsub.f32 1.0, %v784
        %v786 = vmul.f32 %v783, %v785
        %v787 = vadd.f32 %v783, %v786
        %vm788 = vweird.f32 %v681
        %vm789 = vweird.f32 %v783
        %vm790 = vmor %vm788, %vm789
        %v791 = vsel %vm790, %v783, %v787
        %v792 = vand.u32 2147483647, %v681
        %vm793 = vcmp.eq.f32.partialorder %v792, 8.507059e+37
        %v794 = vand.u32 %v681, 2147483648
        %v795 = vor.u32 1.1754944e-38, %v794
        %v796 = vsel %vm793, %v795, %v791
        %v797 = vmul.f32 1.0, %v796
        %v798 = vrcp.pop %v682
        %v799 = vmul.f32 %v682, %v798
        %v800 = vsub.f32 1.0, %v799
        %v801 = vmul.f32 %v798, %v800
        %v802 = vadd.f32 %v798, %v801
        %vm803 = vweird.f32 %v682
        %vm804 = vweird.f32 %v798
        %vm805 = vmor %vm803, %vm804
        %v806 = vsel %vm805, %v798, %v802
        %v807 = vand.u32 2147483647, %v682
        %vm808 = vcmp.eq.f32.partialorder %v807, 8.507059e+37
        %v809 = vand.u32 %v682, 2147483648
        %v810 = vor.u32 1.1754944e-38, %v809
        %v811 = vsel %vm808, %v810, %v806
        %v812 = vmul.f32 1.0, %v811
        %v813 = vrcp.pop %v683
        %v814 = vmul.f32 %v683, %v813
        %v815 = vsub.f32 1.0, %v814
        %v816 = vmul.f32 %v813, %v815
        %v817 = vadd.f32 %v813, %v816
        %vm818 = vweird.f32 %v683
        %vm819 = vweird.f32 %v813
        %vm820 = vmor %vm818, %vm819
        %v821 = vsel %vm820, %v813, %v817
        %v822 = vand.u32 2147483647, %v683
        %vm823 = vcmp.eq.f32.partialorder %v822, 8.507059e+37
        %v824 = vand.u32 %v683, 2147483648
        %v825 = vor.u32 1.1754944e-38, %v824
        %v826 = vsel %vm823, %v825, %v821
        %v827 = vmul.f32 1.0, %v826
        %v828 = vrcp.pop %v684
        %v829 = vmul.f32 %v684, %v828
        %v830 = vsub.f32 1.0, %v829
        %v831 = vmul.f32 %v828, %v830
        %v832 = vadd.f32 %v828, %v831
        %vm833 = vweird.f32 %v684
        %vm834 = vweird.f32 %v828
        %vm835 = vmor %vm833, %vm834
        %v836 = vsel %vm835, %v828, %v832
        %v837 = vand.u32 2147483647, %v684
        %vm838 = vcmp.eq.f32.partialorder %v837, 8.507059e+37
        %v839 = vand.u32 %v684, 2147483648
        %v840 = vor.u32 1.1754944e-38, %v839
        %v841 = vsel %vm838, %v840, %v836
        %v842 = vmul.f32 1.0, %v841
        %v843 = vrcp.pop %v685
        %v844 = vmul.f32 %v685, %v843
        %v845 = vsub.f32 1.0, %v844
        %v846 = vmul.f32 %v843, %v845
        %v847 = vadd.f32 %v843, %v846
        %vm848 = vweird.f32 %v685
        %vm849 = vweird.f32 %v843
        %vm850 = vmor %vm848, %vm849
        %v851 = vsel %vm850, %v843, %v847
        %v852 = vand.u32 2147483647, %v685
        %vm853 = vcmp.eq.f32.partialorder %v852, 8.507059e+37
        %v854 = vand.u32 %v685, 2147483648
        %v855 = vor.u32 1.1754944e-38, %v854
        %v856 = vsel %vm853, %v855, %v851
        %v857 = vmul.f32 1.0, %v856
        %v858 = vrcp.pop %v686
        %v859 = vmul.f32 %v686, %v858
        %v860 = vsub.f32 1.0, %v859
        %v861 = vmul.f32 %v858, %v860
        %v862 = vadd.f32 %v858, %v861
        %vm863 = vweird.f32 %v686
        %vm864 = vweird.f32 %v858
        %vm865 = vmor %vm863, %vm864
        %v866 = vsel %vm865, %v858, %v862
        %v867 = vand.u32 2147483647, %v686
        %vm868 = vcmp.eq.f32.partialorder %v867, 8.507059e+37
        %v869 = vand.u32 %v686, 2147483648
        %v870 = vor.u32 1.1754944e-38, %v869
        %v871 = vsel %vm868, %v870, %v866
        %v872 = vmul.f32 1.0, %v871
        %v873 = vrcp.pop %v687
        %v874 = vmul.f32 %v687, %v873
        %v875 = vsub.f32 1.0, %v874
        %v876 = vmul.f32 %v873, %v875
        %v877 = vadd.f32 %v873, %v876
        %vm878 = vweird.f32 %v687
        %vm879 = vweird.f32 %v873
        %vm880 = vmor %vm878, %vm879
        %v881 = vsel %vm880, %v873, %v877
        %v882 = vand.u32 2147483647, %v687
        %vm883 = vcmp.eq.f32.partialorder %v882, 8.507059e+37
        %v884 = vand.u32 %v687, 2147483648
        %v885 = vor.u32 1.1754944e-38, %v884
        %v886 = vsel %vm883, %v885, %v881
        %v887 = vmul.f32 1.0, %v886
        %v888 = vrcp.pop %v688
        %v889 = vmul.f32 %v688, %v888
        %v890 = vsub.f32 1.0, %v889
        %v891 = vmul.f32 %v888, %v890
        %v892 = vadd.f32 %v888, %v891
        %vm893 = vweird.f32 %v688
        %vm894 = vweird.f32 %v888
        %vm895 = vmor %vm893, %vm894
        %v896 = vsel %vm895, %v888, %v892
        %v897 = vand.u32 2147483647, %v688
        %vm898 = vcmp.eq.f32.partialorder %v897, 8.507059e+37
        %v899 = vand.u32 %v688, 2147483648
        %v900 = vor.u32 1.1754944e-38, %v899
        %v901 = vsel %vm898, %v900, %v896
        %v902 = vmul.f32 1.0, %v901
        %v903 = vrcp.pop %v689
        %v904 = vmul.f32 %v689, %v903
        %v905 = vsub.f32 1.0, %v904
        %v906 = vmul.f32 %v903, %v905
        %v907 = vadd.f32 %v903, %v906
        %vm908 = vweird.f32 %v689
        %vm909 = vweird.f32 %v903
        %vm910 = vmor %vm908, %vm909
        %v911 = vsel %vm910, %v903, %v907
        %v912 = vand.u32 2147483647, %v689
        %vm913 = vcmp.eq.f32.partialorder %v912, 8.507059e+37
        %v914 = vand.u32 %v689, 2147483648
        %v915 = vor.u32 1.1754944e-38, %v914
        %v916 = vsel %vm913, %v915, %v911
        %v917 = vmul.f32 1.0, %v916
        %v918 = vrcp.pop %v690
        %v919 = vmul.f32 %v690, %v918
        %v920 = vsub.f32 1.0, %v919
        %v921 = vmul.f32 %v918, %v920
        %v922 = vadd.f32 %v918, %v921
        %vm923 = vweird.f32 %v690
        %vm924 = vweird.f32 %v918
        %vm925 = vmor %vm923, %vm924
        %v926 = vsel %vm925, %v918, %v922
        %v927 = vand.u32 2147483647, %v690
        %vm928 = vcmp.eq.f32.partialorder %v927, 8.507059e+37
        %v929 = vand.u32 %v690, 2147483648
        %v930 = vor.u32 1.1754944e-38, %v929
        %v931 = vsel %vm928, %v930, %v926
        %v932 = vmul.f32 1.0, %v931
        %v933 = vrcp.pop %v691
        %v934 = vmul.f32 %v691, %v933
        %v935 = vsub.f32 1.0, %v934
        %v936 = vmul.f32 %v933, %v935
        %v937 = vadd.f32 %v933, %v936
        %vm938 = vweird.f32 %v691
        %vm939 = vweird.f32 %v933
        %vm940 = vmor %vm938, %vm939
        %v941 = vsel %vm940, %v933, %v937
        %v942 = vand.u32 2147483647, %v691
        %vm943 = vcmp.eq.f32.partialorder %v942, 8.507059e+37
        %v944 = vand.u32 %v691, 2147483648
        %v945 = vor.u32 1.1754944e-38, %v944
        %v946 = vsel %vm943, %v945, %v941
        %v947 = vmul.f32 1.0, %v946
        %v948 = vrcp.pop %v692
        %v949 = vmul.f32 %v692, %v948
        %v950 = vsub.f32 1.0, %v949
        %v951 = vmul.f32 %v948, %v950
        %v952 = vadd.f32 %v948, %v951
        %vm953 = vweird.f32 %v692
        %vm954 = vweird.f32 %v948
        %vm955 = vmor %vm953, %vm954
        %v956 = vsel %vm955, %v948, %v952
        %v957 = vand.u32 2147483647, %v692
        %vm958 = vcmp.eq.f32.partialorder %v957, 8.507059e+37
        %v959 = vand.u32 %v692, 2147483648
        %v960 = vor.u32 1.1754944e-38, %v959
        %v961 = vsel %vm958, %v960, %v956
        %v962 = vmul.f32 1.0, %v961
        %v963 = vrcp.pop %v693
        %v964 = vmul.f32 %v693, %v963
        %v965 = vsub.f32 1.0, %v964
        %v966 = vmul.f32 %v963, %v965
        %v967 = vadd.f32 %v963, %v966
        %vm968 = vweird.f32 %v693
        %vm969 = vweird.f32 %v963
        %vm970 = vmor %vm968, %vm969
        %v971 = vsel %vm970, %v963, %v967
        %v972 = vand.u32 2147483647, %v693
        %vm973 = vcmp.eq.f32.partialorder %v972, 8.507059e+37
        %v974 = vand.u32 %v693, 2147483648
        %v975 = vor.u32 1.1754944e-38, %v974
        %v976 = vsel %vm973, %v975, %v971
        %v977 = vmul.f32 1.0, %v976
        %v978 = vrcp.pop %v694
        %v979 = vmul.f32 %v694, %v978
        %v980 = vsub.f32 1.0, %v979
        %v981 = vmul.f32 %v978, %v980
        %v982 = vadd.f32 %v978, %v981
        %vm983 = vweird.f32 %v694
        %vm984 = vweird.f32 %v978
        %vm985 = vmor %vm983, %vm984
        %v986 = vsel %vm985, %v978, %v982
        %v987 = vand.u32 2147483647, %v694
        %vm988 = vcmp.eq.f32.partialorder %v987, 8.507059e+37
        %v989 = vand.u32 %v694, 2147483648
        %v990 = vor.u32 1.1754944e-38, %v989
        %v991 = vsel %vm988, %v990, %v986
        %v992 = vmul.f32 1.0, %v991
        %v993 = vrcp.pop %v695
        %v994 = vmul.f32 %v695, %v993
        %v995 = vsub.f32 1.0, %v994
        %v996 = vmul.f32 %v993, %v995
        %v997 = vadd.f32 %v993, %v996
        %vm998 = vweird.f32 %v695
        %vm999 = vweird.f32 %v993
        %vm1000 = vmor %vm998, %vm999
        %v1001 = vsel %vm1000, %v993, %v997
        %v1002 = vand.u32 2147483647, %v695
        %vm1003 = vcmp.eq.f32.partialorder %v1002, 8.507059e+37
        %v1004 = vand.u32 %v695, 2147483648
        %v1005 = vor.u32 1.1754944e-38, %v1004
        %v1006 = vsel %vm1003, %v1005, %v1001
        %v1007 = vmul.f32 1.0, %v1006
        %v1008 = vrcp.pop %v696
        %v1009 = vmul.f32 %v696, %v1008
        %v1010 = vsub.f32 1.0, %v1009
        %v1011 = vmul.f32 %v1008, %v1010
        %v1012 = vadd.f32 %v1008, %v1011
        %vm1013 = vweird.f32 %v696
        %vm1014 = vweird.f32 %v1008
        %vm1015 = vmor %vm1013, %vm1014
        %v1016 = vsel %vm1015, %v1008, %v1012
        %v1017 = vand.u32 2147483647, %v696
        %vm1018 = vcmp.eq.f32.partialorder %v1017, 8.507059e+37
        %v1019 = vand.u32 %v696, 2147483648
        %v1020 = vor.u32 1.1754944e-38, %v1019
        %v1021 = vsel %vm1018, %v1020, %v1016
        %v1022 = vmul.f32 1.0, %v1021
        %v1023 = vrcp.pop %v697
        %v1024 = vmul.f32 %v697, %v1023
        %v1025 = vsub.f32 1.0, %v1024
        %v1026 = vmul.f32 %v1023, %v1025
        %v1027 = vadd.f32 %v1023, %v1026
        %vm1028 = vweird.f32 %v697
        %vm1029 = vweird.f32 %v1023
        %vm1030 = vmor %vm1028, %vm1029
        %v1031 = vsel %vm1030, %v1023, %v1027
        %v1032 = vand.u32 2147483647, %v697
        %vm1033 = vcmp.eq.f32.partialorder %v1032, 8.507059e+37
        %v1034 = vand.u32 %v697, 2147483648
        %v1035 = vor.u32 1.1754944e-38, %v1034
        %v1036 = vsel %vm1033, %v1035, %v1031
        %v1037 = vmul.f32 1.0, %v1036
        %v1038 = vrcp.pop %v698
        %v1039 = vmul.f32 %v698, %v1038
        %v1040 = vsub.f32 1.0, %v1039
        %v1041 = vmul.f32 %v1038, %v1040
        %v1042 = vadd.f32 %v1038, %v1041
        %vm1043 = vweird.f32 %v698
        %vm1044 = vweird.f32 %v1038
        %vm1045 = vmor %vm1043, %vm1044
        %v1046 = vsel %vm1045, %v1038, %v1042
        %v1047 = vand.u32 2147483647, %v698
        %vm1048 = vcmp.eq.f32.partialorder %v1047, 8.507059e+37
        %v1049 = vand.u32 %v698, 2147483648
        %v1050 = vor.u32 1.1754944e-38, %v1049
        %v1051 = vsel %vm1048, %v1050, %v1046
        %v1052 = vmul.f32 1.0, %v1051
        %v1053 = vrcp.pop %v699
        %v1054 = vmul.f32 %v699, %v1053
        %v1055 = vsub.f32 1.0, %v1054
        %v1056 = vmul.f32 %v1053, %v1055
        %v1057 = vadd.f32 %v1053, %v1056
        %vm1058 = vweird.f32 %v699
        %vm1059 = vweird.f32 %v1053
        %vm1060 = vmor %vm1058, %vm1059
        %v1061 = vsel %vm1060, %v1053, %v1057
        %v1062 = vand.u32 2147483647, %v699
        %vm1063 = vcmp.eq.f32.partialorder %v1062, 8.507059e+37
        %v1064 = vand.u32 %v699, 2147483648
        %v1065 = vor.u32 1.1754944e-38, %v1064
        %v1066 = vsel %vm1063, %v1065, %v1061
        %v1067 = vmul.f32 1.0, %v1066
        %v1068 = vrcp.pop %v700
        %v1069 = vmul.f32 %v700, %v1068
        %v1070 = vsub.f32 1.0, %v1069
        %v1071 = vmul.f32 %v1068, %v1070
        %v1072 = vadd.f32 %v1068, %v1071
        %vm1073 = vweird.f32 %v700
        %vm1074 = vweird.f32 %v1068
        %vm1075 = vmor %vm1073, %vm1074
        %v1076 = vsel %vm1075, %v1068, %v1072
        %v1077 = vand.u32 2147483647, %v700
        %vm1078 = vcmp.eq.f32.partialorder %v1077, 8.507059e+37
        %v1079 = vand.u32 %v700, 2147483648
        %v1080 = vor.u32 1.1754944e-38, %v1079
        %v1081 = vsel %vm1078, %v1080, %v1076
        %v1082 = vmul.f32 1.0, %v1081
        %v1083 = vrcp.pop %v701
        %v1084 = vmul.f32 %v701, %v1083
        %v1085 = vsub.f32 1.0, %v1084
        %v1086 = vmul.f32 %v1083, %v1085
        %v1087 = vadd.f32 %v1083, %v1086
        %vm1088 = vweird.f32 %v701
        %vm1089 = vweird.f32 %v1083
        %vm1090 = vmor %vm1088, %vm1089
        %v1091 = vsel %vm1090, %v1083, %v1087
        %v1092 = vand.u32 2147483647, %v701
        %vm1093 = vcmp.eq.f32.partialorder %v1092, 8.507059e+37
        %v1094 = vand.u32 %v701, 2147483648
        %v1095 = vor.u32 1.1754944e-38, %v1094
        %v1096 = vsel %vm1093, %v1095, %v1091
        %v1097 = vmul.f32 1.0, %v1096
        %v1098 = vrcp.pop %v702
        %v1099 = vmul.f32 %v702, %v1098
        %v1100 = vsub.f32 1.0, %v1099
        %v1101 = vmul.f32 %v1098, %v1100
        %v1102 = vadd.f32 %v1098, %v1101
        %vm1103 = vweird.f32 %v702
        %vm1104 = vweird.f32 %v1098
        %vm1105 = vmor %vm1103, %vm1104
        %v1106 = vsel %vm1105, %v1098, %v1102
        %v1107 = vand.u32 2147483647, %v702
        %vm1108 = vcmp.eq.f32.partialorder %v1107, 8.507059e+37
        %v1109 = vand.u32 %v702, 2147483648
        %v1110 = vor.u32 1.1754944e-38, %v1109
        %v1111 = vsel %vm1108, %v1110, %v1106
        %v1112 = vmul.f32 1.0, %v1111
        %v1113 = vrcp.pop %v703
        %v1114 = vmul.f32 %v703, %v1113
        %v1115 = vsub.f32 1.0, %v1114
        %v1116 = vmul.f32 %v1113, %v1115
        %v1117 = vadd.f32 %v1113, %v1116
        %vm1118 = vweird.f32 %v703
        %vm1119 = vweird.f32 %v1113
        %vm1120 = vmor %vm1118, %vm1119
        %v1121 = vsel %vm1120, %v1113, %v1117
        %v1122 = vand.u32 2147483647, %v703
        %vm1123 = vcmp.eq.f32.partialorder %v1122, 8.507059e+37
        %v1124 = vand.u32 %v703, 2147483648
        %v1125 = vor.u32 1.1754944e-38, %v1124
        %v1126 = vsel %vm1123, %v1125, %v1121
        %v1127 = vmul.f32 1.0, %v1126
        %v1128 = vrcp.pop %v704
        %v1129 = vmul.f32 %v704, %v1128
        %v1130 = vsub.f32 1.0, %v1129
        %v1131 = vmul.f32 %v1128, %v1130
        %v1132 = vadd.f32 %v1128, %v1131
        %vm1133 = vweird.f32 %v704
        %vm1134 = vweird.f32 %v1128
        %vm1135 = vmor %vm1133, %vm1134
        %v1136 = vsel %vm1135, %v1128, %v1132
        %v1137 = vand.u32 2147483647, %v704
        %vm1138 = vcmp.eq.f32.partialorder %v1137, 8.507059e+37
        %v1139 = vand.u32 %v704, 2147483648
        %v1140 = vor.u32 1.1754944e-38, %v1139
        %v1141 = vsel %vm1138, %v1140, %v1136
        %v1142 = vmul.f32 1.0, %v1141
        %v1143 = vrcp.pop %v705
        %v1144 = vmul.f32 %v705, %v1143
        %v1145 = vsub.f32 1.0, %v1144
        %v1146 = vmul.f32 %v1143, %v1145
        %v1147 = vadd.f32 %v1143, %v1146
        %vm1148 = vweird.f32 %v705
        %vm1149 = vweird.f32 %v1143
        %vm1150 = vmor %vm1148, %vm1149
        %v1151 = vsel %vm1150, %v1143, %v1147
        %v1152 = vand.u32 2147483647, %v705
        %vm1153 = vcmp.eq.f32.partialorder %v1152, 8.507059e+37
        %v1154 = vand.u32 %v705, 2147483648
        %v1155 = vor.u32 1.1754944e-38, %v1154
        %v1156 = vsel %vm1153, %v1155, %v1151
        %v1157 = vmul.f32 1.0, %v1156
        %v1158 = vrcp.pop %v706
        %v1159 = vmul.f32 %v706, %v1158
        %v1160 = vsub.f32 1.0, %v1159
        %v1161 = vmul.f32 %v1158, %v1160
        %v1162 = vadd.f32 %v1158, %v1161
        %vm1163 = vweird.f32 %v706
        %vm1164 = vweird.f32 %v1158
        %vm1165 = vmor %vm1163, %vm1164
        %v1166 = vsel %vm1165, %v1158, %v1162
        %v1167 = vand.u32 2147483647, %v706
        %vm1168 = vcmp.eq.f32.partialorder %v1167, 8.507059e+37
        %v1169 = vand.u32 %v706, 2147483648
        %v1170 = vor.u32 1.1754944e-38, %v1169
        %v1171 = vsel %vm1168, %v1170, %v1166
        %v1172 = vmul.f32 1.0, %v1171
        %v1173 = vrcp.pop %v707
        %v1174 = vmul.f32 %v707, %v1173
        %v1175 = vsub.f32 1.0, %v1174
        %v1176 = vmul.f32 %v1173, %v1175
        %v1177 = vadd.f32 %v1173, %v1176
        %vm1178 = vweird.f32 %v707
        %vm1179 = vweird.f32 %v1173
        %vm1180 = vmor %vm1178, %vm1179
        %v1181 = vsel %vm1180, %v1173, %v1177
        %v1182 = vand.u32 2147483647, %v707
        %vm1183 = vcmp.eq.f32.partialorder %v1182, 8.507059e+37
        %v1184 = vand.u32 %v707, 2147483648
        %v1185 = vor.u32 1.1754944e-38, %v1184
        %v1186 = vsel %vm1183, %v1185, %v1181
        %v1187 = vmul.f32 1.0, %v1186
        %v1188 = vmul.f32 %v548, %v722
        %v1189 = vmul.f32 %v549, %v737
        %v1190 = vmul.f32 %v550, %v752
        %v1191 = vmul.f32 %v551, %v767
        %v1192 = vmul.f32 %v552, %v782
        %v1193 = vmul.f32 %v553, %v797
        %v1194 = vmul.f32 %v554, %v812
        %v1195 = vmul.f32 %v555, %v827
        %v1196 = vmul.f32 %v556, %v842
        %v1197 = vmul.f32 %v557, %v857
        %v1198 = vmul.f32 %v558, %v872
        %v1199 = vmul.f32 %v559, %v887
        %v1200 = vmul.f32 %v560, %v902
        %v1201 = vmul.f32 %v561, %v917
        %v1202 = vmul.f32 %v562, %v932
        %v1203 = vmul.f32 %v563, %v947
        %v1204 = vmul.f32 %v564, %v962
        %v1205 = vmul.f32 %v565, %v977
        %v1206 = vmul.f32 %v566, %v992
        %v1207 = vmul.f32 %v567, %v1007
        %v1208 = vmul.f32 %v568, %v1022
        %v1209 = vmul.f32 %v569, %v1037
        %v1210 = vmul.f32 %v570, %v1052
        %v1211 = vmul.f32 %v571, %v1067
        %v1212 = vmul.f32 %v572, %v1082
        %v1213 = vmul.f32 %v573, %v1097
        %v1214 = vmul.f32 %v574, %v1112
        %v1215 = vmul.f32 %v575, %v1127
        %v1216 = vmul.f32 %v576, %v1142
        %v1217 = vmul.f32 %v577, %v1157
        %v1218 = vmul.f32 %v578, %v1172
        %v1219 = vmul.f32 %v579, %v1187
        %v1252 = vrot.slane %v1188, 7
        %v1253 = vrot.slane %v1189, 7
        %v1254 = vsel %vm461, %v1252, %v1253
        %v1255 = vrot.slane %v1190, 7
        %v1256 = vrot.slane %v1191, 7
        %v1257 = vsel %vm461, %v1255, %v1256
        %v1258 = vrot.slane %v1192, 7
        %v1259 = vrot.slane %v1193, 7
        %v1260 = vsel %vm461, %v1258, %v1259
        %v1261 = vrot.slane %v1194, 7
        %v1262 = vrot.slane %v1195, 7
        %v1263 = vsel %vm461, %v1261, %v1262
        %v1264 = vrot.slane %v1196, 7
        %v1265 = vrot.slane %v1197, 7
        %v1266 = vsel %vm461, %v1264, %v1265
        %v1267 = vrot.slane %v1198, 7
        %v1268 = vrot.slane %v1199, 7
        %v1269 = vsel %vm461, %v1267, %v1268
        %v1270 = vrot.slane %v1200, 7
        %v1271 = vrot.slane %v1201, 7
        %v1272 = vsel %vm461, %v1270, %v1271
        %v1273 = vrot.slane %v1202, 7
        %v1274 = vrot.slane %v1203, 7
        %v1275 = vsel %vm461, %v1273, %v1274
        %v1276 = vrot.slane %v1204, 7
        %v1277 = vrot.slane %v1205, 7
        %v1278 = vsel %vm461, %v1276, %v1277
        %v1279 = vrot.slane %v1206, 7
        %v1280 = vrot.slane %v1207, 7
        %v1281 = vsel %vm461, %v1279, %v1280
        %v1282 = vrot.slane %v1208, 7
        %v1283 = vrot.slane %v1209, 7
        %v1284 = vsel %vm461, %v1282, %v1283
        %v1285 = vrot.slane %v1210, 7
        %v1286 = vrot.slane %v1211, 7
        %v1287 = vsel %vm461, %v1285, %v1286
        %v1288 = vrot.slane %v1212, 7
        %v1289 = vrot.slane %v1213, 7
        %v1290 = vsel %vm461, %v1288, %v1289
        %v1291 = vrot.slane %v1214, 7
        %v1292 = vrot.slane %v1215, 7
        %v1293 = vsel %vm461, %v1291, %v1292
        %v1294 = vrot.slane %v1216, 7
        %v1295 = vrot.slane %v1217, 7
        %v1296 = vsel %vm461, %v1294, %v1295
        %v1297 = vrot.slane %v1218, 7
        %v1298 = vrot.slane %v1219, 7
        %v1299 = vsel %vm461, %v1297, %v1298
        %v1332 = vsel %vm461, 0.0, %v1252
        %v1333 = vsel %vm461, 0.0, %v1255
        %v1334 = vsel %vm461, 0.0, %v1258
        %v1335 = vsel %vm461, 0.0, %v1261
        %v1336 = vsel %vm461, 0.0, %v1264
        %v1337 = vsel %vm461, 0.0, %v1267
        %v1338 = vsel %vm461, 0.0, %v1270
        %v1339 = vsel %vm461, 0.0, %v1273
        %v1340 = vsel %vm461, 0.0, %v1276
        %v1341 = vsel %vm461, 0.0, %v1279
        %v1342 = vsel %vm461, 0.0, %v1282
        %v1343 = vsel %vm461, 0.0, %v1285
        %v1344 = vsel %vm461, 0.0, %v1288
        %v1345 = vsel %vm461, 0.0, %v1291
        %v1346 = vsel %vm461, 0.0, %v1294
        %v1347 = vsel %vm461, 0.0, %v1297
        %v1348 = vsel %vm461, %v1253, 0.0
        %v1349 = vsel %vm461, %v1256, 0.0
        %v1350 = vsel %vm461, %v1259, 0.0
        %v1351 = vsel %vm461, %v1262, 0.0
        %v1352 = vsel %vm461, %v1265, 0.0
        %v1353 = vsel %vm461, %v1268, 0.0
        %v1354 = vsel %vm461, %v1271, 0.0
        %v1355 = vsel %vm461, %v1274, 0.0
        %v1356 = vsel %vm461, %v1277, 0.0
        %v1357 = vsel %vm461, %v1280, 0.0
        %v1358 = vsel %vm461, %v1283, 0.0
        %v1359 = vsel %vm461, %v1286, 0.0
        %v1360 = vsel %vm461, %v1289, 0.0
        %v1361 = vsel %vm461, %v1292, 0.0
        %v1362 = vsel %vm461, %v1295, 0.0
        %v1363 = vsel %vm461, %v1298, 0.0
        %1364 = vst.msk [vmem:[#allocation2] sm:$0xff] %vm286, 0.0
        %1365 = vst.msk [vmem:[#allocation2 + $0x8] sm:$0xff] %vm286, 0.0
        %1366 = vst.msk [vmem:[#allocation2 + $0x10] sm:$0xff] %vm286, 0.0
        %1367 = vst.msk [vmem:[#allocation2 + $0x18] sm:$0xff] %vm286, 0.0
        %1368 = vst.msk [vmem:[#allocation2 + $0x20] sm:$0xff] %vm286, 0.0
        %1369 = vst.msk [vmem:[#allocation2 + $0x28] sm:$0xff] %vm286, 0.0
        %1370 = vst.msk [vmem:[#allocation2 + $0x30] sm:$0xff] %vm286, 0.0
        %1371 = vst.msk [vmem:[#allocation2 + $0x38] sm:$0xff] %vm286, 0.0
        %1372 = vst.msk [vmem:[#allocation2 + $0x40] sm:$0xff] %vm286, 0.0
        %1373 = vst.msk [vmem:[#allocation2 + $0x48] sm:$0xff] %vm286, 0.0
        %1374 = vst.msk [vmem:[#allocation2 + $0x50] sm:$0xff] %vm286, 0.0
        %1375 = vst.msk [vmem:[#allocation2 + $0x58] sm:$0xff] %vm286, 0.0
        %1376 = vst.msk [vmem:[#allocation2 + $0x60] sm:$0xff] %vm286, 0.0
        %1377 = vst.msk [vmem:[#allocation2 + $0x68] sm:$0xff] %vm286, 0.0
        %1378 = vst.msk [vmem:[#allocation2 + $0x70] sm:$0xff] %vm286, 0.0
        %1379 = vst.msk [vmem:[#allocation2 + $0x78] sm:$0xff] %vm286, 0.0
        %1380 = vst.msk [vmem:[#allocation2 + $0x80] sm:$0xff] %vm286, 0.0
        %1381 = vst.msk [vmem:[#allocation2 + $0x88] sm:$0xff] %vm286, 0.0
        %1382 = vst.msk [vmem:[#allocation2 + $0x90] sm:$0xff] %vm286, 0.0
        %1383 = vst.msk [vmem:[#allocation2 + $0x98] sm:$0xff] %vm286, 0.0
        %1384 = vst.msk [vmem:[#allocation2 + $0xa0] sm:$0xff] %vm286, 0.0
        %1385 = vst.msk [vmem:[#allocation2 + $0xa8] sm:$0xff] %vm286, 0.0
        %1386 = vst.msk [vmem:[#allocation2 + $0xb0] sm:$0xff] %vm286, 0.0
        %1387 = vst.msk [vmem:[#allocation2 + $0xb8] sm:$0xff] %vm286, 0.0
        %1388 = vst.msk [vmem:[#allocation2 + $0xc0] sm:$0xff] %vm286, 0.0
        %1389 = vst.msk [vmem:[#allocation2 + $0xc8] sm:$0xff] %vm286, 0.0
        %1390 = vst.msk [vmem:[#allocation2 + $0xd0] sm:$0xff] %vm286, 0.0
        %1391 = vst.msk [vmem:[#allocation2 + $0xd8] sm:$0xff] %vm286, 0.0
        %1392 = vst.msk [vmem:[#allocation2 + $0xe0] sm:$0xff] %vm286, 0.0
        %1393 = vst.msk [vmem:[#allocation2 + $0xe8] sm:$0xff] %vm286, 0.0
        %1394 = vst.msk [vmem:[#allocation2 + $0xf0] sm:$0xff] %vm286, 0.0
        %1395 = vst.msk [vmem:[#allocation2 + $0xf8] sm:$0xff] %vm286, 0.0
        %1396 = vst.msk [vmem:[#allocation2 + $0x100] sm:$0xff] %vm286, 0.0
        %1397 = vst.msk [vmem:[#allocation2 + $0x108] sm:$0xff] %vm286, 0.0
        %1398 = vst.msk [vmem:[#allocation2 + $0x110] sm:$0xff] %vm286, 0.0
        %1399 = vst.msk [vmem:[#allocation2 + $0x118] sm:$0xff] %vm286, 0.0
        %1400 = vst.msk [vmem:[#allocation2 + $0x120] sm:$0xff] %vm286, 0.0
        %1401 = vst.msk [vmem:[#allocation2 + $0x128] sm:$0xff] %vm286, 0.0
        %1402 = vst.msk [vmem:[#allocation2 + $0x130] sm:$0xff] %vm286, 0.0
        %1403 = vst.msk [vmem:[#allocation2 + $0x138] sm:$0xff] %vm286, 0.0
        %1404 = vst.msk [vmem:[#allocation2 + $0x140] sm:$0xff] %vm286, 0.0
        %1405 = vst.msk [vmem:[#allocation2 + $0x148] sm:$0xff] %vm286, 0.0
        %vm1406 = vcmask 62464
        %1407 = vst.msk [vmem:[#allocation2 + $0x150] sm:$0x3f] %vm1406, 0.0
        %v1440 = vrot.slane %v1332, 2
        %v1441 = vrot.slane %v1332, 4
        %v1442 = vrot.slane %v1332, 6
        %v1443 = vrot.slane %v1254, 2
        %v1444 = vrot.slane %v1254, 4
        %v1445 = vrot.slane %v1254, 6
        %v1446 = vrot.slane %v1333, 2
        %v1447 = vrot.slane %v1333, 4
        %v1448 = vrot.slane %v1333, 6
        %v1449 = vrot.slane %v1257, 2
        %v1450 = vrot.slane %v1257, 4
        %v1451 = vrot.slane %v1257, 6
        %v1452 = vrot.slane %v1334, 2
        %v1453 = vrot.slane %v1334, 4
        %v1454 = vrot.slane %v1334, 6
        %v1455 = vrot.slane %v1260, 2
        %v1456 = vrot.slane %v1260, 4
        %v1457 = vrot.slane %v1260, 6
        %v1458 = vrot.slane %v1335, 2
        %v1459 = vrot.slane %v1335, 4
        %v1460 = vrot.slane %v1335, 6
        %v1461 = vrot.slane %v1263, 2
        %v1462 = vrot.slane %v1263, 4
        %v1463 = vrot.slane %v1263, 6
        %v1464 = vrot.slane %v1336, 2
        %v1465 = vrot.slane %v1336, 4
        %v1466 = vrot.slane %v1336, 6
        %v1467 = vrot.slane %v1266, 2
        %v1468 = vrot.slane %v1266, 4
        %v1469 = vrot.slane %v1266, 6
        %v1470 = vrot.slane %v1337, 2
        %v1471 = vrot.slane %v1337, 4
        %v1472 = vrot.slane %v1337, 6
        %v1473 = vrot.slane %v1269, 2
        %v1474 = vrot.slane %v1269, 4
        %v1475 = vrot.slane %v1269, 6
        %v1476 = vrot.slane %v1338, 2
        %v1477 = vrot.slane %v1338, 4
        %v1478 = vrot.slane %v1338, 6
        %v1479 = vrot.slane %v1272, 2
        %v1480 = vrot.slane %v1272, 4
        %v1481 = vrot.slane %v1272, 6
        %v1482 = vrot.slane %v1339, 2
        %v1483 = vrot.slane %v1339, 4
        %v1484 = vrot.slane %v1339, 6
        %v1485 = vrot.slane %v1275, 2
        %v1486 = vrot.slane %v1275, 4
        %v1487 = vrot.slane %v1275, 6
        %v1488 = vrot.slane %v1340, 2
        %v1489 = vrot.slane %v1340, 4
        %v1490 = vrot.slane %v1340, 6
        %v1491 = vrot.slane %v1278, 2
        %v1492 = vrot.slane %v1278, 4
        %v1493 = vrot.slane %v1278, 6
        %v1494 = vrot.slane %v1341, 2
        %v1495 = vrot.slane %v1341, 4
        %v1496 = vrot.slane %v1341, 6
        %v1497 = vrot.slane %v1281, 2
        %v1498 = vrot.slane %v1281, 4
        %v1499 = vrot.slane %v1281, 6
        %v1500 = vrot.slane %v1342, 2
        %v1501 = vrot.slane %v1342, 4
        %v1502 = vrot.slane %v1342, 6
        %v1503 = vrot.slane %v1284, 2
        %v1504 = vrot.slane %v1284, 4
        %v1505 = vrot.slane %v1284, 6
        %v1506 = vrot.slane %v1343, 2
        %v1507 = vrot.slane %v1343, 4
        %v1508 = vrot.slane %v1343, 6
        %v1509 = vrot.slane %v1287, 2
        %v1510 = vrot.slane %v1287, 4
        %v1511 = vrot.slane %v1287, 6
        %v1512 = vrot.slane %v1344, 2
        %v1513 = vrot.slane %v1344, 4
        %v1514 = vrot.slane %v1344, 6
        %v1515 = vrot.slane %v1290, 2
        %v1516 = vrot.slane %v1290, 4
        %v1517 = vrot.slane %v1290, 6
        %v1518 = vrot.slane %v1345, 2
        %v1519 = vrot.slane %v1345, 4
        %v1520 = vrot.slane %v1345, 6
        %v1521 = vrot.slane %v1293, 2
        %v1522 = vrot.slane %v1293, 4
        %v1523 = vrot.slane %v1293, 6
        %v1524 = vrot.slane %v1346, 2
        %v1525 = vrot.slane %v1346, 4
        %v1526 = vrot.slane %v1346, 6
        %v1527 = vrot.slane %v1296, 2
        %v1528 = vrot.slane %v1296, 4
        %v1529 = vrot.slane %v1296, 6
        %v1530 = vrot.slane %v1347, 2
        %v1531 = vrot.slane %v1347, 4
        %v1532 = vrot.slane %v1347, 6
        %v1533 = vrot.slane %v1299, 2
        %v1534 = vrot.slane %v1299, 4
        %v1535 = vrot.slane %v1299, 6
        %1536 = vst [vmem:[#allocation1] ss:$4 sm:$0xff] %v1332
        %s1537 = scalar_lea.vmem [#allocation1], 1
        %1538 = vst [vmem:[%s1537] ss:$4 sm:$0xff] %v1440
        %s1539 = scalar_lea.vmem [#allocation1], 2
        %1540 = vst [vmem:[%s1539] ss:$4 sm:$0xff] %v1441
        %s1541 = scalar_lea.vmem [#allocation1], 3
        %1542 = vst [vmem:[%s1541] ss:$4 sm:$0xff] %v1442
        %s1543 = scalar_lea.vmem [#allocation1], 32
        %1544 = vst [vmem:[%s1543] ss:$4 sm:$0xff] %v1254
        %s1545 = scalar_lea.vmem [#allocation1], 33
        %1546 = vst [vmem:[%s1545] ss:$4 sm:$0xff] %v1443
        %s1547 = scalar_lea.vmem [#allocation1], 34
        %1548 = vst [vmem:[%s1547] ss:$4 sm:$0xff] %v1444
        %s1549 = scalar_lea.vmem [#allocation1], 35
        %1550 = vst [vmem:[%s1549] ss:$4 sm:$0xff] %v1445
        %v1551 = vld.sshfl [vmem:[#allocation1] sm:$0xff pattern:$0x73625140]
        %v1552 = vld.sshfl [vmem:[#allocation1 + $0x20] sm:$0xff pattern:$0x73625140]
        %1553 = vst [vmem:[#allocation1] ss:$4 sm:$0xff] %v1348
        %1554 = vst [vmem:[%s1537] ss:$4 sm:$0xff] %v1333
        %1555 = vst [vmem:[%s1539] ss:$4 sm:$0xff] %v1446
        %1556 = vst [vmem:[%s1541] ss:$4 sm:$0xff] %v1447
        %1557 = vst [vmem:[%s1543] ss:$4 sm:$0xff] %v1448
        %1558 = vst [vmem:[%s1545] ss:$4 sm:$0xff] %v1257
        %1559 = vst [vmem:[%s1547] ss:$4 sm:$0xff] %v1449
        %1560 = vst [vmem:[%s1549] ss:$4 sm:$0xff] %v1450
        %v1561 = vld.sshfl [vmem:[#allocation1] sm:$0xff pattern:$0x73625140]
        %v1562 = vld.sshfl [vmem:[#allocation1 + $0x20] sm:$0xff pattern:$0x73625140]
        %1563 = vst [vmem:[#allocation1] ss:$4 sm:$0xff] %v1451
        %1564 = vst [vmem:[%s1537] ss:$4 sm:$0xff] %v1349
        %1565 = vst [vmem:[%s1539] ss:$4 sm:$0xff] %v1334
        %1566 = vst [vmem:[%s1541] ss:$4 sm:$0xff] %v1452
        %1567 = vst [vmem:[%s1543] ss:$4 sm:$0xff] %v1453
        %1568 = vst [vmem:[%s1545] ss:$4 sm:$0xff] %v1454
        %1569 = vst [vmem:[%s1547] ss:$4 sm:$0xff] %v1260
        %1570 = vst [vmem:[%s1549] ss:$4 sm:$0xff] %v1455
        %v1571 = vld.sshfl [vmem:[#allocation1] sm:$0xff pattern:$0x73625140]
        %v1572 = vld.sshfl [vmem:[#allocation1 + $0x20] sm:$0xff pattern:$0x73625140]
        %1573 = vst [vmem:[#allocation1] ss:$4 sm:$0xff] %v1456
        %1574 = vst [vmem:[%s1537] ss:$4 sm:$0xff] %v1457
        %1575 = vst [vmem:[%s1539] ss:$4 sm:$0xff] %v1350
        %1576 = vst [vmem:[%s1541] ss:$4 sm:$0xff] %v1335
        %1577 = vst [vmem:[%s1543] ss:$4 sm:$0xff] %v1458
        %1578 = vst [vmem:[%s1545] ss:$4 sm:$0xff] %v1459
        %1579 = vst [vmem:[%s1547] ss:$4 sm:$0xff] %v1460
        %1580 = vst [vmem:[%s1549] ss:$4 sm:$0xff] %v1263
        %v1581 = vld.sshfl [vmem:[#allocation1] sm:$0xff pattern:$0x73625140]
        %v1582 = vld.sshfl [vmem:[#allocation1 + $0x20] sm:$0xff pattern:$0x73625140]
        %1583 = vst [vmem:[#allocation1] ss:$4 sm:$0xff] %v1461
        %1584 = vst [vmem:[%s1537] ss:$4 sm:$0xff] %v1462
        %1585 = vst [vmem:[%s1539] ss:$4 sm:$0xff] %v1463
        %1586 = vst [vmem:[%s1541] ss:$4 sm:$0xff] %v1351
        %1587 = vst [vmem:[%s1543] ss:$4 sm:$0xff] %v1336
        %1588 = vst [vmem:[%s1545] ss:$4 sm:$0xff] %v1464
        %1589 = vst [vmem:[%s1547] ss:$4 sm:$0xff] %v1465
        %1590 = vst [vmem:[%s1549] ss:$4 sm:$0xff] %v1466
        %v1591 = vld.sshfl [vmem:[#allocation1] sm:$0xff pattern:$0x73625140]
        %v1592 = vld.sshfl [vmem:[#allocation1 + $0x20] sm:$0xff pattern:$0x73625140]
        %1593 = vst [vmem:[#allocation1] ss:$4 sm:$0xff] %v1266
        %1594 = vst [vmem:[%s1537] ss:$4 sm:$0xff] %v1467
        %1595 = vst [vmem:[%s1539] ss:$4 sm:$0xff] %v1468
        %1596 = vst [vmem:[%s1541] ss:$4 sm:$0xff] %v1469
        %1597 = vst [vmem:[%s1543] ss:$4 sm:$0xff] %v1352
        %1598 = vst [vmem:[%s1545] ss:$4 sm:$0xff] %v1337
        %1599 = vst [vmem:[%s1547] ss:$4 sm:$0xff] %v1470
        %1600 = vst [vmem:[%s1549] ss:$4 sm:$0xff] %v1471
        %v1601 = vld.sshfl [vmem:[#allocation1] sm:$0xff pattern:$0x73625140]
        %v1602 = vld.sshfl [vmem:[#allocation1 + $0x20] sm:$0xff pattern:$0x73625140]
        %1603 = vst [vmem:[#allocation1] ss:$4 sm:$0xff] %v1472
        %1604 = vst [vmem:[%s1537] ss:$4 sm:$0xff] %v1269
        %1605 = vst [vmem:[%s1539] ss:$4 sm:$0xff] %v1473
        %1606 = vst [vmem:[%s1541] ss:$4 sm:$0xff] %v1474
        %1607 = vst [vmem:[%s1543] ss:$4 sm:$0xff] %v1475
        %1608 = vst [vmem:[%s1545] ss:$4 sm:$0xff] %v1353
        %1609 = vst [vmem:[%s1547] ss:$4 sm:$0xff] %v1338
        %1610 = vst [vmem:[%s1549] ss:$4 sm:$0xff] %v1476
        %v1611 = vld.sshfl [vmem:[#allocation1] sm:$0xff pattern:$0x73625140]
        %v1612 = vld.sshfl [vmem:[#allocation1 + $0x20] sm:$0xff pattern:$0x73625140]
        %1613 = vst [vmem:[#allocation1] ss:$4 sm:$0xff] %v1477
        %1614 = vst [vmem:[%s1537] ss:$4 sm:$0xff] %v1478
        %1615 = vst [vmem:[%s1539] ss:$4 sm:$0xff] %v1272
        %1616 = vst [vmem:[%s1541] ss:$4 sm:$0xff] %v1479
        %1617 = vst [vmem:[%s1543] ss:$4 sm:$0xff] %v1480
        %1618 = vst [vmem:[%s1545] ss:$4 sm:$0xff] %v1481
        %1619 = vst [vmem:[%s1547] ss:$4 sm:$0xff] %v1354
        %1620 = vst [vmem:[%s1549] ss:$4 sm:$0xff] %v1339
        %v1621 = vld.sshfl [vmem:[#allocation1] sm:$0xff pattern:$0x73625140]
        %v1622 = vld.sshfl [vmem:[#allocation1 + $0x20] sm:$0xff pattern:$0x73625140]
        %1623 = vst [vmem:[#allocation1] ss:$4 sm:$0xff] %v1482
        %1624 = vst [vmem:[%s1537] ss:$4 sm:$0xff] %v1483
        %1625 = vst [vmem:[%s1539] ss:$4 sm:$0xff] %v1484
        %1626 = vst [vmem:[%s1541] ss:$4 sm:$0xff] %v1275
        %1627 = vst [vmem:[%s1543] ss:$4 sm:$0xff] %v1485
        %1628 = vst [vmem:[%s1545] ss:$4 sm:$0xff] %v1486
        %1629 = vst [vmem:[%s1547] ss:$4 sm:$0xff] %v1487
        %1630 = vst [vmem:[%s1549] ss:$4 sm:$0xff] %v1355
        %v1631 = vld.sshfl [vmem:[#allocation1] sm:$0xff pattern:$0x73625140]
        %v1632 = vld.sshfl [vmem:[#allocation1 + $0x20] sm:$0xff pattern:$0x73625140]
        %1633 = vst [vmem:[#allocation1] ss:$4 sm:$0xff] %v1340
        %1634 = vst [vmem:[%s1537] ss:$4 sm:$0xff] %v1488
        %1635 = vst [vmem:[%s1539] ss:$4 sm:$0xff] %v1489
        %1636 = vst [vmem:[%s1541] ss:$4 sm:$0xff] %v1490
        %1637 = vst [vmem:[%s1543] ss:$4 sm:$0xff] %v1278
        %1638 = vst [vmem:[%s1545] ss:$4 sm:$0xff] %v1491
        %1639 = vst [vmem:[%s1547] ss:$4 sm:$0xff] %v1492
        %1640 = vst [vmem:[%s1549] ss:$4 sm:$0xff] %v1493
        %v1641 = vld.sshfl [vmem:[#allocation1] sm:$0xff pattern:$0x73625140]
        %v1642 = vld.sshfl [vmem:[#allocation1 + $0x20] sm:$0xff pattern:$0x73625140]
        %1643 = vst [vmem:[#allocation1] ss:$4 sm:$0xff] %v1356
        %1644 = vst [vmem:[%s1537] ss:$4 sm:$0xff] %v1341
        %1645 = vst [vmem:[%s1539] ss:$4 sm:$0xff] %v1494
        %1646 = vst [vmem:[%s1541] ss:$4 sm:$0xff] %v1495
        %1647 = vst [vmem:[%s1543] ss:$4 sm:$0xff] %v1496
        %1648 = vst [vmem:[%s1545] ss:$4 sm:$0xff] %v1281
        %1649 = vst [vmem:[%s1547] ss:$4 sm:$0xff] %v1497
        %1650 = vst [vmem:[%s1549] ss:$4 sm:$0xff] %v1498
        %v1651 = vld.sshfl [vmem:[#allocation1] sm:$0xff pattern:$0x73625140]
        %v1652 = vld.sshfl [vmem:[#allocation1 + $0x20] sm:$0xff pattern:$0x73625140]
        %1653 = vst [vmem:[#allocation1] ss:$4 sm:$0xff] %v1499
        %1654 = vst [vmem:[%s1537] ss:$4 sm:$0xff] %v1357
        %1655 = vst [vmem:[%s1539] ss:$4 sm:$0xff] %v1342
        %1656 = vst [vmem:[%s1541] ss:$4 sm:$0xff] %v1500
        %1657 = vst [vmem:[%s1543] ss:$4 sm:$0xff] %v1501
        %1658 = vst [vmem:[%s1545] ss:$4 sm:$0xff] %v1502
        %1659 = vst [vmem:[%s1547] ss:$4 sm:$0xff] %v1284
        %1660 = vst [vmem:[%s1549] ss:$4 sm:$0xff] %v1503
        %v1661 = vld.sshfl [vmem:[#allocation1] sm:$0xff pattern:$0x73625140]
        %v1662 = vld.sshfl [vmem:[#allocation1 + $0x20] sm:$0xff pattern:$0x73625140]
        %1663 = vst [vmem:[#allocation1] ss:$4 sm:$0xff] %v1504
        %1664 = vst [vmem:[%s1537] ss:$4 sm:$0xff] %v1505
        %1665 = vst [vmem:[%s1539] ss:$4 sm:$0xff] %v1358
        %1666 = vst [vmem:[%s1541] ss:$4 sm:$0xff] %v1343
        %1667 = vst [vmem:[%s1543] ss:$4 sm:$0xff] %v1506
        %1668 = vst [vmem:[%s1545] ss:$4 sm:$0xff] %v1507
        %1669 = vst [vmem:[%s1547] ss:$4 sm:$0xff] %v1508
        %1670 = vst [vmem:[%s1549] ss:$4 sm:$0xff] %v1287
        %v1671 = vld.sshfl [vmem:[#allocation1] sm:$0xff pattern:$0x73625140]
        %v1672 = vld.sshfl [vmem:[#allocation1 + $0x20] sm:$0xff pattern:$0x73625140]
        %1673 = vst [vmem:[#allocation1] ss:$4 sm:$0xff] %v1509
        %1674 = vst [vmem:[%s1537] ss:$4 sm:$0xff] %v1510
        %1675 = vst [vmem:[%s1539] ss:$4 sm:$0xff] %v1511
        %1676 = vst [vmem:[%s1541] ss:$4 sm:$0xff] %v1359
        %1677 = vst [vmem:[%s1543] ss:$4 sm:$0xff] %v1344
        %1678 = vst [vmem:[%s1545] ss:$4 sm:$0xff] %v1512
        %1679 = vst [vmem:[%s1547] ss:$4 sm:$0xff] %v1513
        %1680 = vst [vmem:[%s1549] ss:$4 sm:$0xff] %v1514
        %v1681 = vld.sshfl [vmem:[#allocation1] sm:$0xff pattern:$0x73625140]
        %v1682 = vld.sshfl [vmem:[#allocation1 + $0x20] sm:$0xff pattern:$0x73625140]
        %1683 = vst [vmem:[#allocation1] ss:$4 sm:$0xff] %v1290
        %1684 = vst [vmem:[%s1537] ss:$4 sm:$0xff] %v1515
        %1685 = vst [vmem:[%s1539] ss:$4 sm:$0xff] %v1516
        %1686 = vst [vmem:[%s1541] ss:$4 sm:$0xff] %v1517
        %1687 = vst [vmem:[%s1543] ss:$4 sm:$0xff] %v1360
        %1688 = vst [vmem:[%s1545] ss:$4 sm:$0xff] %v1345
        %1689 = vst [vmem:[%s1547] ss:$4 sm:$0xff] %v1518
        %1690 = vst [vmem:[%s1549] ss:$4 sm:$0xff] %v1519
        %v1691 = vld.sshfl [vmem:[#allocation1] sm:$0xff pattern:$0x73625140]
        %v1692 = vld.sshfl [vmem:[#allocation1 + $0x20] sm:$0xff pattern:$0x73625140]
        %1693 = vst [vmem:[#allocation1] ss:$4 sm:$0xff] %v1520
        %1694 = vst [vmem:[%s1537] ss:$4 sm:$0xff] %v1293
        %1695 = vst [vmem:[%s1539] ss:$4 sm:$0xff] %v1521
        %1696 = vst [vmem:[%s1541] ss:$4 sm:$0xff] %v1522
        %1697 = vst [vmem:[%s1543] ss:$4 sm:$0xff] %v1523
        %1698 = vst [vmem:[%s1545] ss:$4 sm:$0xff] %v1361
        %1699 = vst [vmem:[%s1547] ss:$4 sm:$0xff] %v1346
        %1700 = vst [vmem:[%s1549] ss:$4 sm:$0xff] %v1524
        %v1701 = vld.sshfl [vmem:[#allocation1] sm:$0xff pattern:$0x73625140]
        %v1702 = vld.sshfl [vmem:[#allocation1 + $0x20] sm:$0xff pattern:$0x73625140]
        %1703 = vst [vmem:[#allocation1] ss:$4 sm:$0xff] %v1525
        %1704 = vst [vmem:[%s1537] ss:$4 sm:$0xff] %v1526
        %1705 = vst [vmem:[%s1539] ss:$4 sm:$0xff] %v1296
        %1706 = vst [vmem:[%s1541] ss:$4 sm:$0xff] %v1527
        %1707 = vst [vmem:[%s1543] ss:$4 sm:$0xff] %v1528
        %1708 = vst [vmem:[%s1545] ss:$4 sm:$0xff] %v1529
        %1709 = vst [vmem:[%s1547] ss:$4 sm:$0xff] %v1362
        %1710 = vst [vmem:[%s1549] ss:$4 sm:$0xff] %v1347
        %v1711 = vld.sshfl [vmem:[#allocation1] sm:$0xff pattern:$0x73625140]
        %v1712 = vld.sshfl [vmem:[#allocation1 + $0x20] sm:$0xff pattern:$0x73625140]
        %1713 = vst [vmem:[#allocation1] ss:$4 sm:$0xff] %v1530
        %1714 = vst [vmem:[%s1537] ss:$4 sm:$0xff] %v1531
        %1715 = vst [vmem:[%s1539] ss:$4 sm:$0xff] %v1532
        %1716 = vst [vmem:[%s1541] ss:$4 sm:$0xff] %v1299
        %1717 = vst [vmem:[%s1543] ss:$4 sm:$0xff] %v1533
        %1718 = vst [vmem:[%s1545] ss:$4 sm:$0xff] %v1534
        %1719 = vst [vmem:[%s1547] ss:$4 sm:$0xff] %v1535
        %1720 = vst [vmem:[%s1549] ss:$4 sm:$0xff] %v1363
        %v1721 = vld.sshfl [vmem:[#allocation1] sm:$0xff pattern:$0x73625140]
        %v1722 = vld.sshfl [vmem:[#allocation1 + $0x20] sm:$0xff pattern:$0x73625140]
        %1759 = vst.msk [vmem:[#allocation2 + $0x12] sm:$0xff] %vm286, %v1551
        %1760 = vst.msk [vmem:[#allocation2 + $0x1a] sm:$0xff] %vm286, %v1552
        %1761 = vst.msk [vmem:[#allocation2 + $0x22] sm:$0xff] %vm286, %v1561
        %1762 = vst.msk [vmem:[#allocation2 + $0x2a] sm:$0xff] %vm286, %v1562
        %1763 = vst.msk [vmem:[#allocation2 + $0x32] sm:$0xff] %vm286, %v1571
        %1764 = vst.msk [vmem:[#allocation2 + $0x3a] sm:$0xff] %vm286, %v1572
        %1765 = vst.msk [vmem:[#allocation2 + $0x42] sm:$0xff] %vm286, %v1581
        %1766 = vst.msk [vmem:[#allocation2 + $0x4a] sm:$0xff] %vm286, %v1582
        %1767 = vst.msk [vmem:[#allocation2 + $0x52] sm:$0xff] %vm286, %v1591
        %1768 = vst.msk [vmem:[#allocation2 + $0x5a] sm:$0xff] %vm286, %v1592
        %1769 = vst.msk [vmem:[#allocation2 + $0x62] sm:$0xff] %vm286, %v1601
        %1770 = vst.msk [vmem:[#allocation2 + $0x6a] sm:$0xff] %vm286, %v1602
        %1771 = vst.msk [vmem:[#allocation2 + $0x72] sm:$0xff] %vm286, %v1611
        %1772 = vst.msk [vmem:[#allocation2 + $0x7a] sm:$0xff] %vm286, %v1612
        %1773 = vst.msk [vmem:[#allocation2 + $0x82] sm:$0xff] %vm286, %v1621
        %1774 = vst.msk [vmem:[#allocation2 + $0x8a] sm:$0xff] %vm286, %v1622
        %1775 = vst.msk [vmem:[#allocation2 + $0x92] sm:$0xff] %vm286, %v1631
        %1776 = vst.msk [vmem:[#allocation2 + $0x9a] sm:$0xff] %vm286, %v1632
        %1777 = vst.msk [vmem:[#allocation2 + $0xa2] sm:$0xff] %vm286, %v1641
        %1778 = vst.msk [vmem:[#allocation2 + $0xaa] sm:$0xff] %vm286, %v1642
        %1779 = vst.msk [vmem:[#allocation2 + $0xb2] sm:$0xff] %vm286, %v1651
        %1780 = vst.msk [vmem:[#allocation2 + $0xba] sm:$0xff] %vm286, %v1652
        %1781 = vst.msk [vmem:[#allocation2 + $0xc2] sm:$0xff] %vm286, %v1661
        %1782 = vst.msk [vmem:[#allocation2 + $0xca] sm:$0xff] %vm286, %v1662
        %1783 = vst.msk [vmem:[#allocation2 + $0xd2] sm:$0xff] %vm286, %v1671
        %1784 = vst.msk [vmem:[#allocation2 + $0xda] sm:$0xff] %vm286, %v1672
        %1785 = vst.msk [vmem:[#allocation2 + $0xe2] sm:$0xff] %vm286, %v1681
        %1786 = vst.msk [vmem:[#allocation2 + $0xea] sm:$0xff] %vm286, %v1682
        %1787 = vst.msk [vmem:[#allocation2 + $0xf2] sm:$0xff] %vm286, %v1691
        %1788 = vst.msk [vmem:[#allocation2 + $0xfa] sm:$0xff] %vm286, %v1692
        %1789 = vst.msk [vmem:[#allocation2 + $0x102] sm:$0xff] %vm286, %v1701
        %1790 = vst.msk [vmem:[#allocation2 + $0x10a] sm:$0xff] %vm286, %v1702
        %1791 = vst.msk [vmem:[#allocation2 + $0x112] sm:$0xff] %vm286, %v1711
        %1792 = vst.msk [vmem:[#allocation2 + $0x11a] sm:$0xff] %vm286, %v1712
        %1793 = vst.msk [vmem:[#allocation2 + $0x122] sm:$0xff] %vm286, %v1721
        %1794 = vst.msk [vmem:[#allocation2 + $0x12a] sm:$0xff] %vm286, %v1722
        %v1795 = vld [vmem:[#allocation2] sm:$0xff]
        %v1796 = vld [vmem:[#allocation2 + $0x8] sm:$0xff]
        %v1797 = vld [vmem:[#allocation2 + $0x10] sm:$0xff]
        %v1798 = vld [vmem:[#allocation2 + $0x18] sm:$0xff]
        %v1799 = vld [vmem:[#allocation2 + $0x20] sm:$0xff]
        %v1800 = vld [vmem:[#allocation2 + $0x28] sm:$0xff]
        %v1801 = vld [vmem:[#allocation2 + $0x30] sm:$0xff]
        %v1802 = vld [vmem:[#allocation2 + $0x38] sm:$0xff]
        %v1803 = vld [vmem:[#allocation2 + $0x40] sm:$0xff]
        %v1804 = vld [vmem:[#allocation2 + $0x48] sm:$0xff]
        %v1805 = vld [vmem:[#allocation2 + $0x50] sm:$0xff]
        %v1806 = vld [vmem:[#allocation2 + $0x58] sm:$0xff]
        %v1807 = vld [vmem:[#allocation2 + $0x60] sm:$0xff]
        %v1808 = vld [vmem:[#allocation2 + $0x68] sm:$0xff]
        %v1809 = vld [vmem:[#allocation2 + $0x70] sm:$0xff]
        %v1810 = vld [vmem:[#allocation2 + $0x78] sm:$0xff]
        %v1811 = vld [vmem:[#allocation2 + $0x80] sm:$0xff]
        %v1812 = vld [vmem:[#allocation2 + $0x88] sm:$0xff]
        %v1813 = vld [vmem:[#allocation2 + $0x90] sm:$0xff]
        %v1814 = vld [vmem:[#allocation2 + $0x98] sm:$0xff]
        %v1815 = vld [vmem:[#allocation2 + $0xa0] sm:$0xff]
        %v1816 = vld [vmem:[#allocation2 + $0xa8] sm:$0xff]
        %v1817 = vld [vmem:[#allocation2 + $0xb0] sm:$0xff]
        %v1818 = vld [vmem:[#allocation2 + $0xb8] sm:$0xff]
        %v1819 = vld [vmem:[#allocation2 + $0xc0] sm:$0xff]
        %v1820 = vld [vmem:[#allocation2 + $0xc8] sm:$0xff]
        %v1821 = vld [vmem:[#allocation2 + $0xd0] sm:$0xff]
        %v1822 = vld [vmem:[#allocation2 + $0xd8] sm:$0xff]
        %v1823 = vld [vmem:[#allocation2 + $0xe0] sm:$0xff]
        %v1824 = vld [vmem:[#allocation2 + $0xe8] sm:$0xff]
        %v1825 = vld [vmem:[#allocation2 + $0xf0] sm:$0xff]
        %v1826 = vld [vmem:[#allocation2 + $0xf8] sm:$0xff]
        %v1827 = vld [vmem:[#allocation2 + $0x100] sm:$0xff]
        %v1828 = vld [vmem:[#allocation2 + $0x108] sm:$0xff]
        %v1829 = vld [vmem:[#allocation2 + $0x110] sm:$0xff]
        %v1830 = vld [vmem:[#allocation2 + $0x118] sm:$0xff]
        %v1831 = vld [vmem:[#allocation2 + $0x1] sm:$0xff]
        %v1832 = vld [vmem:[#allocation2 + $0x9] sm:$0xff]
        %v1833 = vld [vmem:[#allocation2 + $0x11] sm:$0xff]
        %v1834 = vld [vmem:[#allocation2 + $0x19] sm:$0xff]
        %v1835 = vld [vmem:[#allocation2 + $0x21] sm:$0xff]
        %v1836 = vld [vmem:[#allocation2 + $0x29] sm:$0xff]
        %v1837 = vld [vmem:[#allocation2 + $0x31] sm:$0xff]
        %v1838 = vld [vmem:[#allocation2 + $0x39] sm:$0xff]
        %v1839 = vld [vmem:[#allocation2 + $0x41] sm:$0xff]
        %v1840 = vld [vmem:[#allocation2 + $0x49] sm:$0xff]
        %v1841 = vld [vmem:[#allocation2 + $0x51] sm:$0xff]
        %v1842 = vld [vmem:[#allocation2 + $0x59] sm:$0xff]
        %v1843 = vld [vmem:[#allocation2 + $0x61] sm:$0xff]
        %v1844 = vld [vmem:[#allocation2 + $0x69] sm:$0xff]
        %v1845 = vld [vmem:[#allocation2 + $0x71] sm:$0xff]
        %v1846 = vld [vmem:[#allocation2 + $0x79] sm:$0xff]
        %v1847 = vld [vmem:[#allocation2 + $0x81] sm:$0xff]
        %v1848 = vld [vmem:[#allocation2 + $0x89] sm:$0xff]
        %v1849 = vld [vmem:[#allocation2 + $0x91] sm:$0xff]
        %v1850 = vld [vmem:[#allocation2 + $0x99] sm:$0xff]
        %v1851 = vld [vmem:[#allocation2 + $0xa1] sm:$0xff]
        %v1852 = vld [vmem:[#allocation2 + $0xa9] sm:$0xff]
        %v1853 = vld [vmem:[#allocation2 + $0xb1] sm:$0xff]
        %v1854 = vld [vmem:[#allocation2 + $0xb9] sm:$0xff]
        %v1855 = vld [vmem:[#allocation2 + $0xc1] sm:$0xff]
        %v1856 = vld [vmem:[#allocation2 + $0xc9] sm:$0xff]
        %v1857 = vld [vmem:[#allocation2 + $0xd1] sm:$0xff]
        %v1858 = vld [vmem:[#allocation2 + $0xd9] sm:$0xff]
        %v1859 = vld [vmem:[#allocation2 + $0xe1] sm:$0xff]
        %v1860 = vld [vmem:[#allocation2 + $0xe9] sm:$0xff]
        %v1861 = vld [vmem:[#allocation2 + $0xf1] sm:$0xff]
        %v1862 = vld [vmem:[#allocation2 + $0xf9] sm:$0xff]
        %v1863 = vld [vmem:[#allocation2 + $0x101] sm:$0xff]
        %v1864 = vld [vmem:[#allocation2 + $0x109] sm:$0xff]
        %v1865 = vld [vmem:[#allocation2 + $0x111] sm:$0xff]
        %v1866 = vld [vmem:[#allocation2 + $0x119] sm:$0xff]
        %v1867 = vld [vmem:[#allocation2 + $0x2] sm:$0xff]
        %v1868 = vld [vmem:[#allocation2 + $0xa] sm:$0xff]
        %v1869 = vld [vmem:[#allocation2 + $0x12] sm:$0xff]
        %v1870 = vld [vmem:[#allocation2 + $0x1a] sm:$0xff]
        %v1871 = vld [vmem:[#allocation2 + $0x22] sm:$0xff]
        %v1872 = vld [vmem:[#allocation2 + $0x2a] sm:$0xff]
        %v1873 = vld [vmem:[#allocation2 + $0x32] sm:$0xff]
        %v1874 = vld [vmem:[#allocation2 + $0x3a] sm:$0xff]
        %v1875 = vld [vmem:[#allocation2 + $0x42] sm:$0xff]
        %v1876 = vld [vmem:[#allocation2 + $0x4a] sm:$0xff]
        %v1877 = vld [vmem:[#allocation2 + $0x52] sm:$0xff]
        %v1878 = vld [vmem:[#allocation2 + $0x5a] sm:$0xff]
        %v1879 = vld [vmem:[#allocation2 + $0x62] sm:$0xff]
        %v1880 = vld [vmem:[#allocation2 + $0x6a] sm:$0xff]
        %v1881 = vld [vmem:[#allocation2 + $0x72] sm:$0xff]
        %v1882 = vld [vmem:[#allocation2 + $0x7a] sm:$0xff]
        %v1883 = vld [vmem:[#allocation2 + $0x82] sm:$0xff]
        %v1884 = vld [vmem:[#allocation2 + $0x8a] sm:$0xff]
        %v1885 = vld [vmem:[#allocation2 + $0x92] sm:$0xff]
        %v1886 = vld [vmem:[#allocation2 + $0x9a] sm:$0xff]
        %v1887 = vld [vmem:[#allocation2 + $0xa2] sm:$0xff]
        %v1888 = vld [vmem:[#allocation2 + $0xaa] sm:$0xff]
        %v1889 = vld [vmem:[#allocation2 + $0xb2] sm:$0xff]
        %v1890 = vld [vmem:[#allocation2 + $0xba] sm:$0xff]
        %v1891 = vld [vmem:[#allocation2 + $0xc2] sm:$0xff]
        %v1892 = vld [vmem:[#allocation2 + $0xca] sm:$0xff]
        %v1893 = vld [vmem:[#allocation2 + $0xd2] sm:$0xff]
        %v1894 = vld [vmem:[#allocation2 + $0xda] sm:$0xff]
        %v1895 = vld [vmem:[#allocation2 + $0xe2] sm:$0xff]
        %v1896 = vld [vmem:[#allocation2 + $0xea] sm:$0xff]
        %v1897 = vld [vmem:[#allocation2 + $0xf2] sm:$0xff]
        %v1898 = vld [vmem:[#allocation2 + $0xfa] sm:$0xff]
        %v1899 = vld [vmem:[#allocation2 + $0x102] sm:$0xff]
        %v1900 = vld [vmem:[#allocation2 + $0x10a] sm:$0xff]
        %v1901 = vld [vmem:[#allocation2 + $0x112] sm:$0xff]
        %v1902 = vld [vmem:[#allocation2 + $0x11a] sm:$0xff]
        %v1903 = vld [vmem:[#allocation2 + $0x122] sm:$0xff]
        %v1904 = vld [vmem:[#allocation2 + $0x12a] sm:$0xff]
        %v1905 = vld [vmem:[#allocation2 + $0x13] sm:$0xff]
        %v1906 = vld [vmem:[#allocation2 + $0x1b] sm:$0xff]
        %v1907 = vld [vmem:[#allocation2 + $0x23] sm:$0xff]
        %v1908 = vld [vmem:[#allocation2 + $0x2b] sm:$0xff]
        %v1909 = vld [vmem:[#allocation2 + $0x33] sm:$0xff]
        %v1910 = vld [vmem:[#allocation2 + $0x3b] sm:$0xff]
        %v1911 = vld [vmem:[#allocation2 + $0x43] sm:$0xff]
        %v1912 = vld [vmem:[#allocation2 + $0x4b] sm:$0xff]
        %v1913 = vld [vmem:[#allocation2 + $0x53] sm:$0xff]
        %v1914 = vld [vmem:[#allocation2 + $0x5b] sm:$0xff]
        %v1915 = vld [vmem:[#allocation2 + $0x63] sm:$0xff]
        %v1916 = vld [vmem:[#allocation2 + $0x6b] sm:$0xff]
        %v1917 = vld [vmem:[#allocation2 + $0x73] sm:$0xff]
        %v1918 = vld [vmem:[#allocation2 + $0x7b] sm:$0xff]
        %v1919 = vld [vmem:[#allocation2 + $0x83] sm:$0xff]
        %v1920 = vld [vmem:[#allocation2 + $0x8b] sm:$0xff]
        %v1921 = vld [vmem:[#allocation2 + $0x93] sm:$0xff]
        %v1922 = vld [vmem:[#allocation2 + $0x9b] sm:$0xff]
        %v1923 = vld [vmem:[#allocation2 + $0xa3] sm:$0xff]
        %v1924 = vld [vmem:[#allocation2 + $0xab] sm:$0xff]
        %v1925 = vld [vmem:[#allocation2 + $0xb3] sm:$0xff]
        %v1926 = vld [vmem:[#allocation2 + $0xbb] sm:$0xff]
        %v1927 = vld [vmem:[#allocation2 + $0xc3] sm:$0xff]
        %v1928 = vld [vmem:[#allocation2 + $0xcb] sm:$0xff]
        %v1929 = vld [vmem:[#allocation2 + $0xd3] sm:$0xff]
        %v1930 = vld [vmem:[#allocation2 + $0xdb] sm:$0xff]
        %v1931 = vld [vmem:[#allocation2 + $0xe3] sm:$0xff]
        %v1932 = vld [vmem:[#allocation2 + $0xeb] sm:$0xff]
        %v1933 = vld [vmem:[#allocation2 + $0xf3] sm:$0xff]
        %v1934 = vld [vmem:[#allocation2 + $0xfb] sm:$0xff]
        %v1935 = vld [vmem:[#allocation2 + $0x103] sm:$0xff]
        %v1936 = vld [vmem:[#allocation2 + $0x10b] sm:$0xff]
        %v1937 = vld [vmem:[#allocation2 + $0x113] sm:$0xff]
        %v1938 = vld [vmem:[#allocation2 + $0x11b] sm:$0xff]
        %v1939 = vld [vmem:[#allocation2 + $0x123] sm:$0xff]
        %v1940 = vld [vmem:[#allocation2 + $0x12b] sm:$0xff]
        %v1941 = vld [vmem:[#allocation2 + $0x14] sm:$0xff]
        %v1942 = vld [vmem:[#allocation2 + $0x1c] sm:$0xff]
        %v1943 = vld [vmem:[#allocation2 + $0x24] sm:$0xff]
        %v1944 = vld [vmem:[#allocation2 + $0x2c] sm:$0xff]
        %v1945 = vld [vmem:[#allocation2 + $0x34] sm:$0xff]
        %v1946 = vld [vmem:[#allocation2 + $0x3c] sm:$0xff]
        %v1947 = vld [vmem:[#allocation2 + $0x44] sm:$0xff]
        %v1948 = vld [vmem:[#allocation2 + $0x4c] sm:$0xff]
        %v1949 = vld [vmem:[#allocation2 + $0x54] sm:$0xff]
        %v1950 = vld [vmem:[#allocation2 + $0x5c] sm:$0xff]
        %v1951 = vld [vmem:[#allocation2 + $0x64] sm:$0xff]
        %v1952 = vld [vmem:[#allocation2 + $0x6c] sm:$0xff]
        %v1953 = vld [vmem:[#allocation2 + $0x74] sm:$0xff]
        %v1954 = vld [vmem:[#allocation2 + $0x7c] sm:$0xff]
        %v1955 = vld [vmem:[#allocation2 + $0x84] sm:$0xff]
        %v1956 = vld [vmem:[#allocation2 + $0x8c] sm:$0xff]
        %v1957 = vld [vmem:[#allocation2 + $0x94] sm:$0xff]
        %v1958 = vld [vmem:[#allocation2 + $0x9c] sm:$0xff]
        %v1959 = vld [vmem:[#allocation2 + $0xa4] sm:$0xff]
        %v1960 = vld [vmem:[#allocation2 + $0xac] sm:$0xff]
        %v1961 = vld [vmem:[#allocation2 + $0xb4] sm:$0xff]
        %v1962 = vld [vmem:[#allocation2 + $0xbc] sm:$0xff]
        %v1963 = vld [vmem:[#allocation2 + $0xc4] sm:$0xff]
        %v1964 = vld [vmem:[#allocation2 + $0xcc] sm:$0xff]
        %v1965 = vld [vmem:[#allocation2 + $0xd4] sm:$0xff]
        %v1966 = vld [vmem:[#allocation2 + $0xdc] sm:$0xff]
        %v1967 = vld [vmem:[#allocation2 + $0xe4] sm:$0xff]
        %v1968 = vld [vmem:[#allocation2 + $0xec] sm:$0xff]
        %v1969 = vld [vmem:[#allocation2 + $0xf4] sm:$0xff]
        %v1970 = vld [vmem:[#allocation2 + $0xfc] sm:$0xff]
        %v1971 = vld [vmem:[#allocation2 + $0x104] sm:$0xff]
        %v1972 = vld [vmem:[#allocation2 + $0x10c] sm:$0xff]
        %v1973 = vld [vmem:[#allocation2 + $0x114] sm:$0xff]
        %v1974 = vld [vmem:[#allocation2 + $0x11c] sm:$0xff]
        %v1975 = vld [vmem:[#allocation2 + $0x124] sm:$0xff]
        %v1976 = vld [vmem:[#allocation2 + $0x12c] sm:$0xff]
        %v1977 = vld [vmem:[#allocation2 + $0x134] sm:$0xff]
        %v1978 = vld [vmem:[#allocation2 + $0x13c] sm:$0xff]
        %v1979 = vld [vmem:[#allocation2 + $0x25] sm:$0xff]
        %v1980 = vld [vmem:[#allocation2 + $0x2d] sm:$0xff]
        %v1981 = vld [vmem:[#allocation2 + $0x35] sm:$0xff]
        %v1982 = vld [vmem:[#allocation2 + $0x3d] sm:$0xff]
        %v1983 = vld [vmem:[#allocation2 + $0x45] sm:$0xff]
        %v1984 = vld [vmem:[#allocation2 + $0x4d] sm:$0xff]
        %v1985 = vld [vmem:[#allocation2 + $0x55] sm:$0xff]
        %v1986 = vld [vmem:[#allocation2 + $0x5d] sm:$0xff]
        %v1987 = vld [vmem:[#allocation2 + $0x65] sm:$0xff]
        %v1988 = vld [vmem:[#allocation2 + $0x6d] sm:$0xff]
        %v1989 = vld [vmem:[#allocation2 + $0x75] sm:$0xff]
        %v1990 = vld [vmem:[#allocation2 + $0x7d] sm:$0xff]
        %v1991 = vld [vmem:[#allocation2 + $0x85] sm:$0xff]
        %v1992 = vld [vmem:[#allocation2 + $0x8d] sm:$0xff]
        %v1993 = vld [vmem:[#allocation2 + $0x95] sm:$0xff]
        %v1994 = vld [vmem:[#allocation2 + $0x9d] sm:$0xff]
        %v1995 = vld [vmem:[#allocation2 + $0xa5] sm:$0xff]
        %v1996 = vld [vmem:[#allocation2 + $0xad] sm:$0xff]
        %v1997 = vld [vmem:[#allocation2 + $0xb5] sm:$0xff]
        %v1998 = vld [vmem:[#allocation2 + $0xbd] sm:$0xff]
        %v1999 = vld [vmem:[#allocation2 + $0xc5] sm:$0xff]
        %v2000 = vld [vmem:[#allocation2 + $0xcd] sm:$0xff]
        %v2001 = vld [vmem:[#allocation2 + $0xd5] sm:$0xff]
        %v2002 = vld [vmem:[#allocation2 + $0xdd] sm:$0xff]
        %v2003 = vld [vmem:[#allocation2 + $0xe5] sm:$0xff]
        %v2004 = vld [vmem:[#allocation2 + $0xed] sm:$0xff]
        %v2005 = vld [vmem:[#allocation2 + $0xf5] sm:$0xff]
        %v2006 = vld [vmem:[#allocation2 + $0xfd] sm:$0xff]
        %v2007 = vld [vmem:[#allocation2 + $0x105] sm:$0xff]
        %v2008 = vld [vmem:[#allocation2 + $0x10d] sm:$0xff]
        %v2009 = vld [vmem:[#allocation2 + $0x115] sm:$0xff]
        %v2010 = vld [vmem:[#allocation2 + $0x11d] sm:$0xff]
        %v2011 = vld [vmem:[#allocation2 + $0x125] sm:$0xff]
        %v2012 = vld [vmem:[#allocation2 + $0x12d] sm:$0xff]
        %v2013 = vld [vmem:[#allocation2 + $0x135] sm:$0xff]
        %v2014 = vld [vmem:[#allocation2 + $0x13d] sm:$0xff]
        %v2015 = vld [vmem:[#allocation2 + $0x26] sm:$0xff]
        %v2016 = vld [vmem:[#allocation2 + $0x2e] sm:$0xff]
        %v2017 = vld [vmem:[#allocation2 + $0x36] sm:$0xff]
        %v2018 = vld [vmem:[#allocation2 + $0x3e] sm:$0xff]
        %v2019 = vld [vmem:[#allocation2 + $0x46] sm:$0xff]
        %v2020 = vld [vmem:[#allocation2 + $0x4e] sm:$0xff]
        %v2021 = vld [vmem:[#allocation2 + $0x56] sm:$0xff]
        %v2022 = vld [vmem:[#allocation2 + $0x5e] sm:$0xff]
        %v2023 = vld [vmem:[#allocation2 + $0x66] sm:$0xff]
        %v2024 = vld [vmem:[#allocation2 + $0x6e] sm:$0xff]
        %v2025 = vld [vmem:[#allocation2 + $0x76] sm:$0xff]
        %v2026 = vld [vmem:[#allocation2 + $0x7e] sm:$0xff]
        %v2027 = vld [vmem:[#allocation2 + $0x86] sm:$0xff]
        %v2028 = vld [vmem:[#allocation2 + $0x8e] sm:$0xff]
        %v2029 = vld [vmem:[#allocation2 + $0x96] sm:$0xff]
        %v2030 = vld [vmem:[#allocation2 + $0x9e] sm:$0xff]
        %v2031 = vld [vmem:[#allocation2 + $0xa6] sm:$0xff]
        %v2032 = vld [vmem:[#allocation2 + $0xae] sm:$0xff]
        %v2033 = vld [vmem:[#allocation2 + $0xb6] sm:$0xff]
        %v2034 = vld [vmem:[#allocation2 + $0xbe] sm:$0xff]
        %v2035 = vld [vmem:[#allocation2 + $0xc6] sm:$0xff]
        %v2036 = vld [vmem:[#allocation2 + $0xce] sm:$0xff]
        %v2037 = vld [vmem:[#allocation2 + $0xd6] sm:$0xff]
        %v2038 = vld [vmem:[#allocation2 + $0xde] sm:$0xff]
        %v2039 = vld [vmem:[#allocation2 + $0xe6] sm:$0xff]
        %v2040 = vld [vmem:[#allocation2 + $0xee] sm:$0xff]
        %v2041 = vld [vmem:[#allocation2 + $0xf6] sm:$0xff]
        %v2042 = vld [vmem:[#allocation2 + $0xfe] sm:$0xff]
        %v2043 = vld [vmem:[#allocation2 + $0x106] sm:$0xff]
        %v2044 = vld [vmem:[#allocation2 + $0x10e] sm:$0xff]
        %v2045 = vld [vmem:[#allocation2 + $0x116] sm:$0xff]
        %v2046 = vld [vmem:[#allocation2 + $0x11e] sm:$0xff]
        %v2047 = vld [vmem:[#allocation2 + $0x126] sm:$0xff]
        %v2048 = vld [vmem:[#allocation2 + $0x12e] sm:$0xff]
        %v2049 = vld [vmem:[#allocation2 + $0x136] sm:$0xff]
        %v2050 = vld [vmem:[#allocation2 + $0x13e] sm:$0xff]
        %2087 = vrot.lane.b32.xlu0 %v1831, 8
        %v2088 = vpop.permute.xlu0 %2087
        %2089 = vrot.lane.b32.xlu0 %v1832, 8
        %v2090 = vpop.permute.xlu0 %2089
        %2091 = vrot.lane.b32.xlu0 %v1833, 8
        %v2092 = vpop.permute.xlu0 %2091
        %2093 = vrot.lane.b32.xlu0 %v1834, 8
        %v2094 = vpop.permute.xlu0 %2093
        %2095 = vrot.lane.b32.xlu0 %v1835, 8
        %v2096 = vpop.permute.xlu0 %2095
        %2097 = vrot.lane.b32.xlu0 %v1836, 8
        %v2098 = vpop.permute.xlu0 %2097
        %2099 = vrot.lane.b32.xlu0 %v1837, 8
        %v2100 = vpop.permute.xlu0 %2099
        %2101 = vrot.lane.b32.xlu0 %v1838, 8
        %v2102 = vpop.permute.xlu0 %2101
        %2103 = vrot.lane.b32.xlu0 %v1839, 8
        %v2104 = vpop.permute.xlu0 %2103
        %2105 = vrot.lane.b32.xlu0 %v1840, 8
        %v2106 = vpop.permute.xlu0 %2105
        %2107 = vrot.lane.b32.xlu0 %v1841, 8
        %v2108 = vpop.permute.xlu0 %2107
        %2109 = vrot.lane.b32.xlu0 %v1842, 8
        %v2110 = vpop.permute.xlu0 %2109
        %2111 = vrot.lane.b32.xlu0 %v1843, 8
        %v2112 = vpop.permute.xlu0 %2111
        %2113 = vrot.lane.b32.xlu0 %v1844, 8
        %v2114 = vpop.permute.xlu0 %2113
        %2115 = vrot.lane.b32.xlu0 %v1845, 8
        %v2116 = vpop.permute.xlu0 %2115
        %2117 = vrot.lane.b32.xlu0 %v1846, 8
        %v2118 = vpop.permute.xlu0 %2117
        %2119 = vrot.lane.b32.xlu0 %v1847, 8
        %v2120 = vpop.permute.xlu0 %2119
        %2121 = vrot.lane.b32.xlu0 %v1848, 8
        %v2122 = vpop.permute.xlu0 %2121
        %2123 = vrot.lane.b32.xlu0 %v1849, 8
        %v2124 = vpop.permute.xlu0 %2123
        %2125 = vrot.lane.b32.xlu0 %v1850, 8
        %v2126 = vpop.permute.xlu0 %2125
        %2127 = vrot.lane.b32.xlu0 %v1851, 8
        %v2128 = vpop.permute.xlu0 %2127
        %2129 = vrot.lane.b32.xlu0 %v1852, 8
        %v2130 = vpop.permute.xlu0 %2129
        %2131 = vrot.lane.b32.xlu0 %v1853, 8
        %v2132 = vpop.permute.xlu0 %2131
        %2133 = vrot.lane.b32.xlu0 %v1854, 8
        %v2134 = vpop.permute.xlu0 %2133
        %2135 = vrot.lane.b32.xlu0 %v1855, 8
        %v2136 = vpop.permute.xlu0 %2135
        %2137 = vrot.lane.b32.xlu0 %v1856, 8
        %v2138 = vpop.permute.xlu0 %2137
        %2139 = vrot.lane.b32.xlu0 %v1857, 8
        %v2140 = vpop.permute.xlu0 %2139
        %2141 = vrot.lane.b32.xlu0 %v1858, 8
        %v2142 = vpop.permute.xlu0 %2141
        %2143 = vrot.lane.b32.xlu0 %v1859, 8
        %v2144 = vpop.permute.xlu0 %2143
        %2145 = vrot.lane.b32.xlu0 %v1860, 8
        %v2146 = vpop.permute.xlu0 %2145
        %2147 = vrot.lane.b32.xlu0 %v1861, 8
        %v2148 = vpop.permute.xlu0 %2147
        %2149 = vrot.lane.b32.xlu0 %v1862, 8
        %v2150 = vpop.permute.xlu0 %2149
        %2151 = vrot.lane.b32.xlu0 %v1863, 8
        %v2152 = vpop.permute.xlu0 %2151
        %2153 = vrot.lane.b32.xlu0 %v1864, 8
        %v2154 = vpop.permute.xlu0 %2153
        %2155 = vrot.lane.b32.xlu0 %v1865, 8
        %v2156 = vpop.permute.xlu0 %2155
        %2157 = vrot.lane.b32.xlu0 %v1866, 8
        %v2158 = vpop.permute.xlu0 %2157
        %2231 = vrot.lane.b32.xlu0 %v1867, 16
        %v2232 = vpop.permute.xlu0 %2231
        %2233 = vrot.lane.b32.xlu0 %v1868, 16
        %v2234 = vpop.permute.xlu0 %2233
        %2235 = vrot.lane.b32.xlu0 %v1869, 16
        %v2236 = vpop.permute.xlu0 %2235
        %2237 = vrot.lane.b32.xlu0 %v1870, 16
        %v2238 = vpop.permute.xlu0 %2237
        %2239 = vrot.lane.b32.xlu0 %v1871, 16
        %v2240 = vpop.permute.xlu0 %2239
        %2241 = vrot.lane.b32.xlu0 %v1872, 16
        %v2242 = vpop.permute.xlu0 %2241
        %2243 = vrot.lane.b32.xlu0 %v1873, 16
        %v2244 = vpop.permute.xlu0 %2243
        %2245 = vrot.lane.b32.xlu0 %v1874, 16
        %v2246 = vpop.permute.xlu0 %2245
        %2247 = vrot.lane.b32.xlu0 %v1875, 16
        %v2248 = vpop.permute.xlu0 %2247
        %2249 = vrot.lane.b32.xlu0 %v1876, 16
        %v2250 = vpop.permute.xlu0 %2249
        %2251 = vrot.lane.b32.xlu0 %v1877, 16
        %v2252 = vpop.permute.xlu0 %2251
        %2253 = vrot.lane.b32.xlu0 %v1878, 16
        %v2254 = vpop.permute.xlu0 %2253
        %2255 = vrot.lane.b32.xlu0 %v1879, 16
        %v2256 = vpop.permute.xlu0 %2255
        %2257 = vrot.lane.b32.xlu0 %v1880, 16
        %v2258 = vpop.permute.xlu0 %2257
        %2259 = vrot.lane.b32.xlu0 %v1881, 16
        %v2260 = vpop.permute.xlu0 %2259
        %2261 = vrot.lane.b32.xlu0 %v1882, 16
        %v2262 = vpop.permute.xlu0 %2261
        %2263 = vrot.lane.b32.xlu0 %v1883, 16
        %v2264 = vpop.permute.xlu0 %2263
        %2265 = vrot.lane.b32.xlu0 %v1884, 16
        %v2266 = vpop.permute.xlu0 %2265
        %2267 = vrot.lane.b32.xlu0 %v1885, 16
        %v2268 = vpop.permute.xlu0 %2267
        %2269 = vrot.lane.b32.xlu0 %v1886, 16
        %v2270 = vpop.permute.xlu0 %2269
        %2271 = vrot.lane.b32.xlu0 %v1887, 16
        %v2272 = vpop.permute.xlu0 %2271
        %2273 = vrot.lane.b32.xlu0 %v1888, 16
        %v2274 = vpop.permute.xlu0 %2273
        %2275 = vrot.lane.b32.xlu0 %v1889, 16
        %v2276 = vpop.permute.xlu0 %2275
        %2277 = vrot.lane.b32.xlu0 %v1890, 16
        %v2278 = vpop.permute.xlu0 %2277
        %2279 = vrot.lane.b32.xlu0 %v1891, 16
        %v2280 = vpop.permute.xlu0 %2279
        %2281 = vrot.lane.b32.xlu0 %v1892, 16
        %v2282 = vpop.permute.xlu0 %2281
        %2283 = vrot.lane.b32.xlu0 %v1893, 16
        %v2284 = vpop.permute.xlu0 %2283
        %2285 = vrot.lane.b32.xlu0 %v1894, 16
        %v2286 = vpop.permute.xlu0 %2285
        %2287 = vrot.lane.b32.xlu0 %v1895, 16
        %v2288 = vpop.permute.xlu0 %2287
        %2289 = vrot.lane.b32.xlu0 %v1896, 16
        %v2290 = vpop.permute.xlu0 %2289
        %2291 = vrot.lane.b32.xlu0 %v1897, 16
        %v2292 = vpop.permute.xlu0 %2291
        %2293 = vrot.lane.b32.xlu0 %v1898, 16
        %v2294 = vpop.permute.xlu0 %2293
        %2295 = vrot.lane.b32.xlu0 %v1899, 16
        %v2296 = vpop.permute.xlu0 %2295
        %2297 = vrot.lane.b32.xlu0 %v1900, 16
        %v2298 = vpop.permute.xlu0 %2297
        %2299 = vrot.lane.b32.xlu0 %v1901, 16
        %v2300 = vpop.permute.xlu0 %2299
        %2301 = vrot.lane.b32.xlu0 %v1902, 16
        %v2302 = vpop.permute.xlu0 %2301
        %2341 = vrot.lane.b32.xlu0 %v1869, 24
        %v2342 = vpop.permute.xlu0 %2341
        %2343 = vrot.lane.b32.xlu0 %v1870, 24
        %v2344 = vpop.permute.xlu0 %2343
        %2345 = vrot.lane.b32.xlu0 %v1871, 24
        %v2346 = vpop.permute.xlu0 %2345
        %2347 = vrot.lane.b32.xlu0 %v1872, 24
        %v2348 = vpop.permute.xlu0 %2347
        %2349 = vrot.lane.b32.xlu0 %v1873, 24
        %v2350 = vpop.permute.xlu0 %2349
        %2351 = vrot.lane.b32.xlu0 %v1874, 24
        %v2352 = vpop.permute.xlu0 %2351
        %2353 = vrot.lane.b32.xlu0 %v1875, 24
        %v2354 = vpop.permute.xlu0 %2353
        %2355 = vrot.lane.b32.xlu0 %v1876, 24
        %v2356 = vpop.permute.xlu0 %2355
        %2357 = vrot.lane.b32.xlu0 %v1877, 24
        %v2358 = vpop.permute.xlu0 %2357
        %2359 = vrot.lane.b32.xlu0 %v1878, 24
        %v2360 = vpop.permute.xlu0 %2359
        %2361 = vrot.lane.b32.xlu0 %v1879, 24
        %v2362 = vpop.permute.xlu0 %2361
        %2363 = vrot.lane.b32.xlu0 %v1880, 24
        %v2364 = vpop.permute.xlu0 %2363
        %2365 = vrot.lane.b32.xlu0 %v1881, 24
        %v2366 = vpop.permute.xlu0 %2365
        %2367 = vrot.lane.b32.xlu0 %v1882, 24
        %v2368 = vpop.permute.xlu0 %2367
        %2369 = vrot.lane.b32.xlu0 %v1883, 24
        %v2370 = vpop.permute.xlu0 %2369
        %2371 = vrot.lane.b32.xlu0 %v1884, 24
        %v2372 = vpop.permute.xlu0 %2371
        %2373 = vrot.lane.b32.xlu0 %v1885, 24
        %v2374 = vpop.permute.xlu0 %2373
        %2375 = vrot.lane.b32.xlu0 %v1886, 24
        %v2376 = vpop.permute.xlu0 %2375
        %2377 = vrot.lane.b32.xlu0 %v1887, 24
        %v2378 = vpop.permute.xlu0 %2377
        %2379 = vrot.lane.b32.xlu0 %v1888, 24
        %v2380 = vpop.permute.xlu0 %2379
        %2381 = vrot.lane.b32.xlu0 %v1889, 24
        %v2382 = vpop.permute.xlu0 %2381
        %2383 = vrot.lane.b32.xlu0 %v1890, 24
        %v2384 = vpop.permute.xlu0 %2383
        %2385 = vrot.lane.b32.xlu0 %v1891, 24
        %v2386 = vpop.permute.xlu0 %2385
        %2387 = vrot.lane.b32.xlu0 %v1892, 24
        %v2388 = vpop.permute.xlu0 %2387
        %2389 = vrot.lane.b32.xlu0 %v1893, 24
        %v2390 = vpop.permute.xlu0 %2389
        %2391 = vrot.lane.b32.xlu0 %v1894, 24
        %v2392 = vpop.permute.xlu0 %2391
        %2393 = vrot.lane.b32.xlu0 %v1895, 24
        %v2394 = vpop.permute.xlu0 %2393
        %2395 = vrot.lane.b32.xlu0 %v1896, 24
        %v2396 = vpop.permute.xlu0 %2395
        %2397 = vrot.lane.b32.xlu0 %v1897, 24
        %v2398 = vpop.permute.xlu0 %2397
        %2399 = vrot.lane.b32.xlu0 %v1898, 24
        %v2400 = vpop.permute.xlu0 %2399
        %2401 = vrot.lane.b32.xlu0 %v1899, 24
        %v2402 = vpop.permute.xlu0 %2401
        %2403 = vrot.lane.b32.xlu0 %v1900, 24
        %v2404 = vpop.permute.xlu0 %2403
        %2405 = vrot.lane.b32.xlu0 %v1901, 24
        %v2406 = vpop.permute.xlu0 %2405
        %2407 = vrot.lane.b32.xlu0 %v1902, 24
        %v2408 = vpop.permute.xlu0 %2407
        %2409 = vrot.lane.b32.xlu0 %v1903, 24
        %v2410 = vpop.permute.xlu0 %2409
        %2411 = vrot.lane.b32.xlu0 %v1904, 24
        %v2412 = vpop.permute.xlu0 %2411
        %2485 = vrot.lane.b32.xlu0 %v1905, 32
        %v2486 = vpop.permute.xlu0 %2485
        %2487 = vrot.lane.b32.xlu0 %v1906, 32
        %v2488 = vpop.permute.xlu0 %2487
        %2489 = vrot.lane.b32.xlu0 %v1907, 32
        %v2490 = vpop.permute.xlu0 %2489
        %2491 = vrot.lane.b32.xlu0 %v1908, 32
        %v2492 = vpop.permute.xlu0 %2491
        %2493 = vrot.lane.b32.xlu0 %v1909, 32
        %v2494 = vpop.permute.xlu0 %2493
        %2495 = vrot.lane.b32.xlu0 %v1910, 32
        %v2496 = vpop.permute.xlu0 %2495
        %2497 = vrot.lane.b32.xlu0 %v1911, 32
        %v2498 = vpop.permute.xlu0 %2497
        %2499 = vrot.lane.b32.xlu0 %v1912, 32
        %v2500 = vpop.permute.xlu0 %2499
        %2501 = vrot.lane.b32.xlu0 %v1913, 32
        %v2502 = vpop.permute.xlu0 %2501
        %2503 = vrot.lane.b32.xlu0 %v1914, 32
        %v2504 = vpop.permute.xlu0 %2503
        %2505 = vrot.lane.b32.xlu0 %v1915, 32
        %v2506 = vpop.permute.xlu0 %2505
        %2507 = vrot.lane.b32.xlu0 %v1916, 32
        %v2508 = vpop.permute.xlu0 %2507
        %2509 = vrot.lane.b32.xlu0 %v1917, 32
        %v2510 = vpop.permute.xlu0 %2509
        %2511 = vrot.lane.b32.xlu0 %v1918, 32
        %v2512 = vpop.permute.xlu0 %2511
        %2513 = vrot.lane.b32.xlu0 %v1919, 32
        %v2514 = vpop.permute.xlu0 %2513
        %2515 = vrot.lane.b32.xlu0 %v1920, 32
        %v2516 = vpop.permute.xlu0 %2515
        %2517 = vrot.lane.b32.xlu0 %v1921, 32
        %v2518 = vpop.permute.xlu0 %2517
        %2519 = vrot.lane.b32.xlu0 %v1922, 32
        %v2520 = vpop.permute.xlu0 %2519
        %2521 = vrot.lane.b32.xlu0 %v1923, 32
        %v2522 = vpop.permute.xlu0 %2521
        %2523 = vrot.lane.b32.xlu0 %v1924, 32
        %v2524 = vpop.permute.xlu0 %2523
        %2525 = vrot.lane.b32.xlu0 %v1925, 32
        %v2526 = vpop.permute.xlu0 %2525
        %2527 = vrot.lane.b32.xlu0 %v1926, 32
        %v2528 = vpop.permute.xlu0 %2527
        %2529 = vrot.lane.b32.xlu0 %v1927, 32
        %v2530 = vpop.permute.xlu0 %2529
        %2531 = vrot.lane.b32.xlu0 %v1928, 32
        %v2532 = vpop.permute.xlu0 %2531
        %2533 = vrot.lane.b32.xlu0 %v1929, 32
        %v2534 = vpop.permute.xlu0 %2533
        %2535 = vrot.lane.b32.xlu0 %v1930, 32
        %v2536 = vpop.permute.xlu0 %2535
        %2537 = vrot.lane.b32.xlu0 %v1931, 32
        %v2538 = vpop.permute.xlu0 %2537
        %2539 = vrot.lane.b32.xlu0 %v1932, 32
        %v2540 = vpop.permute.xlu0 %2539
        %2541 = vrot.lane.b32.xlu0 %v1933, 32
        %v2542 = vpop.permute.xlu0 %2541
        %2543 = vrot.lane.b32.xlu0 %v1934, 32
        %v2544 = vpop.permute.xlu0 %2543
        %2545 = vrot.lane.b32.xlu0 %v1935, 32
        %v2546 = vpop.permute.xlu0 %2545
        %2547 = vrot.lane.b32.xlu0 %v1936, 32
        %v2548 = vpop.permute.xlu0 %2547
        %2549 = vrot.lane.b32.xlu0 %v1937, 32
        %v2550 = vpop.permute.xlu0 %2549
        %2551 = vrot.lane.b32.xlu0 %v1938, 32
        %v2552 = vpop.permute.xlu0 %2551
        %2553 = vrot.lane.b32.xlu0 %v1939, 32
        %v2554 = vpop.permute.xlu0 %2553
        %2555 = vrot.lane.b32.xlu0 %v1940, 32
        %v2556 = vpop.permute.xlu0 %2555
        %2629 = vrot.lane.b32.xlu0 %v1941, 40
        %v2630 = vpop.permute.xlu0 %2629
        %2631 = vrot.lane.b32.xlu0 %v1942, 40
        %v2632 = vpop.permute.xlu0 %2631
        %2633 = vrot.lane.b32.xlu0 %v1943, 40
        %v2634 = vpop.permute.xlu0 %2633
        %2635 = vrot.lane.b32.xlu0 %v1944, 40
        %v2636 = vpop.permute.xlu0 %2635
        %2637 = vrot.lane.b32.xlu0 %v1945, 40
        %v2638 = vpop.permute.xlu0 %2637
        %2639 = vrot.lane.b32.xlu0 %v1946, 40
        %v2640 = vpop.permute.xlu0 %2639
        %2641 = vrot.lane.b32.xlu0 %v1947, 40
        %v2642 = vpop.permute.xlu0 %2641
        %2643 = vrot.lane.b32.xlu0 %v1948, 40
        %v2644 = vpop.permute.xlu0 %2643
        %2645 = vrot.lane.b32.xlu0 %v1949, 40
        %v2646 = vpop.permute.xlu0 %2645
        %2647 = vrot.lane.b32.xlu0 %v1950, 40
        %v2648 = vpop.permute.xlu0 %2647
        %2649 = vrot.lane.b32.xlu0 %v1951, 40
        %v2650 = vpop.permute.xlu0 %2649
        %2651 = vrot.lane.b32.xlu0 %v1952, 40
        %v2652 = vpop.permute.xlu0 %2651
        %2653 = vrot.lane.b32.xlu0 %v1953, 40
        %v2654 = vpop.permute.xlu0 %2653
        %2655 = vrot.lane.b32.xlu0 %v1954, 40
        %v2656 = vpop.permute.xlu0 %2655
        %2657 = vrot.lane.b32.xlu0 %v1955, 40
        %v2658 = vpop.permute.xlu0 %2657
        %2659 = vrot.lane.b32.xlu0 %v1956, 40
        %v2660 = vpop.permute.xlu0 %2659
        %2661 = vrot.lane.b32.xlu0 %v1957, 40
        %v2662 = vpop.permute.xlu0 %2661
        %2663 = vrot.lane.b32.xlu0 %v1958, 40
        %v2664 = vpop.permute.xlu0 %2663
        %2665 = vrot.lane.b32.xlu0 %v1959, 40
        %v2666 = vpop.permute.xlu0 %2665
        %2667 = vrot.lane.b32.xlu0 %v1960, 40
        %v2668 = vpop.permute.xlu0 %2667
        %2669 = vrot.lane.b32.xlu0 %v1961, 40
        %v2670 = vpop.permute.xlu0 %2669
        %2671 = vrot.lane.b32.xlu0 %v1962, 40
        %v2672 = vpop.permute.xlu0 %2671
        %2673 = vrot.lane.b32.xlu0 %v1963, 40
        %v2674 = vpop.permute.xlu0 %2673
        %2675 = vrot.lane.b32.xlu0 %v1964, 40
        %v2676 = vpop.permute.xlu0 %2675
        %2677 = vrot.lane.b32.xlu0 %v1965, 40
        %v2678 = vpop.permute.xlu0 %2677
        %2679 = vrot.lane.b32.xlu0 %v1966, 40
        %v2680 = vpop.permute.xlu0 %2679
        %2681 = vrot.lane.b32.xlu0 %v1967, 40
        %v2682 = vpop.permute.xlu0 %2681
        %2683 = vrot.lane.b32.xlu0 %v1968, 40
        %v2684 = vpop.permute.xlu0 %2683
        %2685 = vrot.lane.b32.xlu0 %v1969, 40
        %v2686 = vpop.permute.xlu0 %2685
        %2687 = vrot.lane.b32.xlu0 %v1970, 40
        %v2688 = vpop.permute.xlu0 %2687
        %2689 = vrot.lane.b32.xlu0 %v1971, 40
        %v2690 = vpop.permute.xlu0 %2689
        %2691 = vrot.lane.b32.xlu0 %v1972, 40
        %v2692 = vpop.permute.xlu0 %2691
        %2693 = vrot.lane.b32.xlu0 %v1973, 40
        %v2694 = vpop.permute.xlu0 %2693
        %2695 = vrot.lane.b32.xlu0 %v1974, 40
        %v2696 = vpop.permute.xlu0 %2695
        %2697 = vrot.lane.b32.xlu0 %v1975, 40
        %v2698 = vpop.permute.xlu0 %2697
        %2699 = vrot.lane.b32.xlu0 %v1976, 40
        %v2700 = vpop.permute.xlu0 %2699
        %2739 = vrot.lane.b32.xlu0 %v1943, 48
        %v2740 = vpop.permute.xlu0 %2739
        %2741 = vrot.lane.b32.xlu0 %v1944, 48
        %v2742 = vpop.permute.xlu0 %2741
        %2743 = vrot.lane.b32.xlu0 %v1945, 48
        %v2744 = vpop.permute.xlu0 %2743
        %2745 = vrot.lane.b32.xlu0 %v1946, 48
        %v2746 = vpop.permute.xlu0 %2745
        %2747 = vrot.lane.b32.xlu0 %v1947, 48
        %v2748 = vpop.permute.xlu0 %2747
        %2749 = vrot.lane.b32.xlu0 %v1948, 48
        %v2750 = vpop.permute.xlu0 %2749
        %2751 = vrot.lane.b32.xlu0 %v1949, 48
        %v2752 = vpop.permute.xlu0 %2751
        %2753 = vrot.lane.b32.xlu0 %v1950, 48
        %v2754 = vpop.permute.xlu0 %2753
        %2755 = vrot.lane.b32.xlu0 %v1951, 48
        %v2756 = vpop.permute.xlu0 %2755
        %2757 = vrot.lane.b32.xlu0 %v1952, 48
        %v2758 = vpop.permute.xlu0 %2757
        %2759 = vrot.lane.b32.xlu0 %v1953, 48
        %v2760 = vpop.permute.xlu0 %2759
        %2761 = vrot.lane.b32.xlu0 %v1954, 48
        %v2762 = vpop.permute.xlu0 %2761
        %2763 = vrot.lane.b32.xlu0 %v1955, 48
        %v2764 = vpop.permute.xlu0 %2763
        %2765 = vrot.lane.b32.xlu0 %v1956, 48
        %v2766 = vpop.permute.xlu0 %2765
        %2767 = vrot.lane.b32.xlu0 %v1957, 48
        %v2768 = vpop.permute.xlu0 %2767
        %2769 = vrot.lane.b32.xlu0 %v1958, 48
        %v2770 = vpop.permute.xlu0 %2769
        %2771 = vrot.lane.b32.xlu0 %v1959, 48
        %v2772 = vpop.permute.xlu0 %2771
        %2773 = vrot.lane.b32.xlu0 %v1960, 48
        %v2774 = vpop.permute.xlu0 %2773
        %2775 = vrot.lane.b32.xlu0 %v1961, 48
        %v2776 = vpop.permute.xlu0 %2775
        %2777 = vrot.lane.b32.xlu0 %v1962, 48
        %v2778 = vpop.permute.xlu0 %2777
        %2779 = vrot.lane.b32.xlu0 %v1963, 48
        %v2780 = vpop.permute.xlu0 %2779
        %2781 = vrot.lane.b32.xlu0 %v1964, 48
        %v2782 = vpop.permute.xlu0 %2781
        %2783 = vrot.lane.b32.xlu0 %v1965, 48
        %v2784 = vpop.permute.xlu0 %2783
        %2785 = vrot.lane.b32.xlu0 %v1966, 48
        %v2786 = vpop.permute.xlu0 %2785
        %2787 = vrot.lane.b32.xlu0 %v1967, 48
        %v2788 = vpop.permute.xlu0 %2787
        %2789 = vrot.lane.b32.xlu0 %v1968, 48
        %v2790 = vpop.permute.xlu0 %2789
        %2791 = vrot.lane.b32.xlu0 %v1969, 48
        %v2792 = vpop.permute.xlu0 %2791
        %2793 = vrot.lane.b32.xlu0 %v1970, 48
        %v2794 = vpop.permute.xlu0 %2793
        %2795 = vrot.lane.b32.xlu0 %v1971, 48
        %v2796 = vpop.permute.xlu0 %2795
        %2797 = vrot.lane.b32.xlu0 %v1972, 48
        %v2798 = vpop.permute.xlu0 %2797
        %2799 = vrot.lane.b32.xlu0 %v1973, 48
        %v2800 = vpop.permute.xlu0 %2799
        %2801 = vrot.lane.b32.xlu0 %v1974, 48
        %v2802 = vpop.permute.xlu0 %2801
        %2803 = vrot.lane.b32.xlu0 %v1975, 48
        %v2804 = vpop.permute.xlu0 %2803
        %2805 = vrot.lane.b32.xlu0 %v1976, 48
        %v2806 = vpop.permute.xlu0 %2805
        %2807 = vrot.lane.b32.xlu0 %v1977, 48
        %v2808 = vpop.permute.xlu0 %2807
        %2809 = vrot.lane.b32.xlu0 %v1978, 48
        %v2810 = vpop.permute.xlu0 %2809
        %2883 = vrot.lane.b32.xlu0 %v1979, 56
        %v2884 = vpop.permute.xlu0 %2883
        %2885 = vrot.lane.b32.xlu0 %v1980, 56
        %v2886 = vpop.permute.xlu0 %2885
        %2887 = vrot.lane.b32.xlu0 %v1981, 56
        %v2888 = vpop.permute.xlu0 %2887
        %2889 = vrot.lane.b32.xlu0 %v1982, 56
        %v2890 = vpop.permute.xlu0 %2889
        %2891 = vrot.lane.b32.xlu0 %v1983, 56
        %v2892 = vpop.permute.xlu0 %2891
        %2893 = vrot.lane.b32.xlu0 %v1984, 56
        %v2894 = vpop.permute.xlu0 %2893
        %2895 = vrot.lane.b32.xlu0 %v1985, 56
        %v2896 = vpop.permute.xlu0 %2895
        %2897 = vrot.lane.b32.xlu0 %v1986, 56
        %v2898 = vpop.permute.xlu0 %2897
        %2899 = vrot.lane.b32.xlu0 %v1987, 56
        %v2900 = vpop.permute.xlu0 %2899
        %2901 = vrot.lane.b32.xlu0 %v1988, 56
        %v2902 = vpop.permute.xlu0 %2901
        %2903 = vrot.lane.b32.xlu0 %v1989, 56
        %v2904 = vpop.permute.xlu0 %2903
        %2905 = vrot.lane.b32.xlu0 %v1990, 56
        %v2906 = vpop.permute.xlu0 %2905
        %2907 = vrot.lane.b32.xlu0 %v1991, 56
        %v2908 = vpop.permute.xlu0 %2907
        %2909 = vrot.lane.b32.xlu0 %v1992, 56
        %v2910 = vpop.permute.xlu0 %2909
        %2911 = vrot.lane.b32.xlu0 %v1993, 56
        %v2912 = vpop.permute.xlu0 %2911
        %2913 = vrot.lane.b32.xlu0 %v1994, 56
        %v2914 = vpop.permute.xlu0 %2913
        %2915 = vrot.lane.b32.xlu0 %v1995, 56
        %v2916 = vpop.permute.xlu0 %2915
        %2917 = vrot.lane.b32.xlu0 %v1996, 56
        %v2918 = vpop.permute.xlu0 %2917
        %2919 = vrot.lane.b32.xlu0 %v1997, 56
        %v2920 = vpop.permute.xlu0 %2919
        %2921 = vrot.lane.b32.xlu0 %v1998, 56
        %v2922 = vpop.permute.xlu0 %2921
        %2923 = vrot.lane.b32.xlu0 %v1999, 56
        %v2924 = vpop.permute.xlu0 %2923
        %2925 = vrot.lane.b32.xlu0 %v2000, 56
        %v2926 = vpop.permute.xlu0 %2925
        %2927 = vrot.lane.b32.xlu0 %v2001, 56
        %v2928 = vpop.permute.xlu0 %2927
        %2929 = vrot.lane.b32.xlu0 %v2002, 56
        %v2930 = vpop.permute.xlu0 %2929
        %2931 = vrot.lane.b32.xlu0 %v2003, 56
        %v2932 = vpop.permute.xlu0 %2931
        %2933 = vrot.lane.b32.xlu0 %v2004, 56
        %v2934 = vpop.permute.xlu0 %2933
        %2935 = vrot.lane.b32.xlu0 %v2005, 56
        %v2936 = vpop.permute.xlu0 %2935
        %2937 = vrot.lane.b32.xlu0 %v2006, 56
        %v2938 = vpop.permute.xlu0 %2937
        %2939 = vrot.lane.b32.xlu0 %v2007, 56
        %v2940 = vpop.permute.xlu0 %2939
        %2941 = vrot.lane.b32.xlu0 %v2008, 56
        %v2942 = vpop.permute.xlu0 %2941
        %2943 = vrot.lane.b32.xlu0 %v2009, 56
        %v2944 = vpop.permute.xlu0 %2943
        %2945 = vrot.lane.b32.xlu0 %v2010, 56
        %v2946 = vpop.permute.xlu0 %2945
        %2947 = vrot.lane.b32.xlu0 %v2011, 56
        %v2948 = vpop.permute.xlu0 %2947
        %2949 = vrot.lane.b32.xlu0 %v2012, 56
        %v2950 = vpop.permute.xlu0 %2949
        %2951 = vrot.lane.b32.xlu0 %v2013, 56
        %v2952 = vpop.permute.xlu0 %2951
        %2953 = vrot.lane.b32.xlu0 %v2014, 56
        %v2954 = vpop.permute.xlu0 %2953
        %3027 = vrot.lane.b32.xlu0 %v2015, 64
        %v3028 = vpop.permute.xlu0 %3027
        %3029 = vrot.lane.b32.xlu0 %v2016, 64
        %v3030 = vpop.permute.xlu0 %3029
        %3031 = vrot.lane.b32.xlu0 %v2017, 64
        %v3032 = vpop.permute.xlu0 %3031
        %3033 = vrot.lane.b32.xlu0 %v2018, 64
        %v3034 = vpop.permute.xlu0 %3033
        %3035 = vrot.lane.b32.xlu0 %v2019, 64
        %v3036 = vpop.permute.xlu0 %3035
        %3037 = vrot.lane.b32.xlu0 %v2020, 64
        %v3038 = vpop.permute.xlu0 %3037
        %3039 = vrot.lane.b32.xlu0 %v2021, 64
        %v3040 = vpop.permute.xlu0 %3039
        %3041 = vrot.lane.b32.xlu0 %v2022, 64
        %v3042 = vpop.permute.xlu0 %3041
        %3043 = vrot.lane.b32.xlu0 %v2023, 64
        %v3044 = vpop.permute.xlu0 %3043
        %3045 = vrot.lane.b32.xlu0 %v2024, 64
        %v3046 = vpop.permute.xlu0 %3045
        %3047 = vrot.lane.b32.xlu0 %v2025, 64
        %v3048 = vpop.permute.xlu0 %3047
        %3049 = vrot.lane.b32.xlu0 %v2026, 64
        %v3050 = vpop.permute.xlu0 %3049
        %3051 = vrot.lane.b32.xlu0 %v2027, 64
        %v3052 = vpop.permute.xlu0 %3051
        %3053 = vrot.lane.b32.xlu0 %v2028, 64
        %v3054 = vpop.permute.xlu0 %3053
        %3055 = vrot.lane.b32.xlu0 %v2029, 64
        %v3056 = vpop.permute.xlu0 %3055
        %3057 = vrot.lane.b32.xlu0 %v2030, 64
        %v3058 = vpop.permute.xlu0 %3057
        %3059 = vrot.lane.b32.xlu0 %v2031, 64
        %v3060 = vpop.permute.xlu0 %3059
        %3061 = vrot.lane.b32.xlu0 %v2032, 64
        %v3062 = vpop.permute.xlu0 %3061
        %3063 = vrot.lane.b32.xlu0 %v2033, 64
        %v3064 = vpop.permute.xlu0 %3063
        %3065 = vrot.lane.b32.xlu0 %v2034, 64
        %v3066 = vpop.permute.xlu0 %3065
        %3067 = vrot.lane.b32.xlu0 %v2035, 64
        %v3068 = vpop.permute.xlu0 %3067
        %3069 = vrot.lane.b32.xlu0 %v2036, 64
        %v3070 = vpop.permute.xlu0 %3069
        %3071 = vrot.lane.b32.xlu0 %v2037, 64
        %v3072 = vpop.permute.xlu0 %3071
        %3073 = vrot.lane.b32.xlu0 %v2038, 64
        %v3074 = vpop.permute.xlu0 %3073
        %3075 = vrot.lane.b32.xlu0 %v2039, 64
        %v3076 = vpop.permute.xlu0 %3075
        %3077 = vrot.lane.b32.xlu0 %v2040, 64
        %v3078 = vpop.permute.xlu0 %3077
        %3079 = vrot.lane.b32.xlu0 %v2041, 64
        %v3080 = vpop.permute.xlu0 %3079
        %3081 = vrot.lane.b32.xlu0 %v2042, 64
        %v3082 = vpop.permute.xlu0 %3081
        %3083 = vrot.lane.b32.xlu0 %v2043, 64
        %v3084 = vpop.permute.xlu0 %3083
        %3085 = vrot.lane.b32.xlu0 %v2044, 64
        %v3086 = vpop.permute.xlu0 %3085
        %3087 = vrot.lane.b32.xlu0 %v2045, 64
        %v3088 = vpop.permute.xlu0 %3087
        %3089 = vrot.lane.b32.xlu0 %v2046, 64
        %v3090 = vpop.permute.xlu0 %3089
        %3091 = vrot.lane.b32.xlu0 %v2047, 64
        %v3092 = vpop.permute.xlu0 %3091
        %3093 = vrot.lane.b32.xlu0 %v2048, 64
        %v3094 = vpop.permute.xlu0 %3093
        %3095 = vrot.lane.b32.xlu0 %v2049, 64
        %v3096 = vpop.permute.xlu0 %3095
        %3097 = vrot.lane.b32.xlu0 %v2050, 64
        %v3098 = vpop.permute.xlu0 %3097
        %v3135 = vsel %vm286, %v1795, %v2088
        %v3136 = vsel %vm286, %v1796, %v2090
        %v3137 = vsel %vm286, %v1797, %v2092
        %v3138 = vsel %vm286, %v1798, %v2094
        %v3139 = vsel %vm286, %v1799, %v2096
        %v3140 = vsel %vm286, %v1800, %v2098
        %v3141 = vsel %vm286, %v1801, %v2100
        %v3142 = vsel %vm286, %v1802, %v2102
        %v3143 = vsel %vm286, %v1803, %v2104
        %v3144 = vsel %vm286, %v1804, %v2106
        %v3145 = vsel %vm286, %v1805, %v2108
        %v3146 = vsel %vm286, %v1806, %v2110
        %v3147 = vsel %vm286, %v1807, %v2112
        %v3148 = vsel %vm286, %v1808, %v2114
        %v3149 = vsel %vm286, %v1809, %v2116
        %v3150 = vsel %vm286, %v1810, %v2118
        %v3151 = vsel %vm286, %v1811, %v2120
        %v3152 = vsel %vm286, %v1812, %v2122
        %v3153 = vsel %vm286, %v1813, %v2124
        %v3154 = vsel %vm286, %v1814, %v2126
        %v3155 = vsel %vm286, %v1815, %v2128
        %v3156 = vsel %vm286, %v1816, %v2130
        %v3157 = vsel %vm286, %v1817, %v2132
        %v3158 = vsel %vm286, %v1818, %v2134
        %v3159 = vsel %vm286, %v1819, %v2136
        %v3160 = vsel %vm286, %v1820, %v2138
        %v3161 = vsel %vm286, %v1821, %v2140
        %v3162 = vsel %vm286, %v1822, %v2142
        %v3163 = vsel %vm286, %v1823, %v2144
        %v3164 = vsel %vm286, %v1824, %v2146
        %v3165 = vsel %vm286, %v1825, %v2148
        %v3166 = vsel %vm286, %v1826, %v2150
        %v3167 = vsel %vm286, %v1827, %v2152
        %v3168 = vsel %vm286, %v1828, %v2154
        %v3169 = vsel %vm286, %v1829, %v2156
        %v3170 = vsel %vm286, %v1830, %v2158
        %vm3171 = vcmask 130048
        %v3172 = vsel %vm3171, %v3135, %v2232
        %v3173 = vsel %vm3171, %v3136, %v2234
        %v3174 = vsel %vm3171, %v3137, %v2236
        %v3175 = vsel %vm3171, %v3138, %v2238
        %v3176 = vsel %vm3171, %v3139, %v2240
        %v3177 = vsel %vm3171, %v3140, %v2242
        %v3178 = vsel %vm3171, %v3141, %v2244
        %v3179 = vsel %vm3171, %v3142, %v2246
        %v3180 = vsel %vm3171, %v3143, %v2248
        %v3181 = vsel %vm3171, %v3144, %v2250
        %v3182 = vsel %vm3171, %v3145, %v2252
        %v3183 = vsel %vm3171, %v3146, %v2254
        %v3184 = vsel %vm3171, %v3147, %v2256
        %v3185 = vsel %vm3171, %v3148, %v2258
        %v3186 = vsel %vm3171, %v3149, %v2260
        %v3187 = vsel %vm3171, %v3150, %v2262
        %v3188 = vsel %vm3171, %v3151, %v2264
        %v3189 = vsel %vm3171, %v3152, %v2266
        %v3190 = vsel %vm3171, %v3153, %v2268
        %v3191 = vsel %vm3171, %v3154, %v2270
        %v3192 = vsel %vm3171, %v3155, %v2272
        %v3193 = vsel %vm3171, %v3156, %v2274
        %v3194 = vsel %vm3171, %v3157, %v2276
        %v3195 = vsel %vm3171, %v3158, %v2278
        %v3196 = vsel %vm3171, %v3159, %v2280
        %v3197 = vsel %vm3171, %v3160, %v2282
        %v3198 = vsel %vm3171, %v3161, %v2284
        %v3199 = vsel %vm3171, %v3162, %v2286
        %v3200 = vsel %vm3171, %v3163, %v2288
        %v3201 = vsel %vm3171, %v3164, %v2290
        %v3202 = vsel %vm3171, %v3165, %v2292
        %v3203 = vsel %vm3171, %v3166, %v2294
        %v3204 = vsel %vm3171, %v3167, %v2296
        %v3205 = vsel %vm3171, %v3168, %v2298
        %v3206 = vsel %vm3171, %v3169, %v2300
        %v3207 = vsel %vm3171, %v3170, %v2302
        %vm3208 = vcmask 195584
        %v3209 = vsel %vm3208, %v3172, %v2342
        %v3210 = vsel %vm3208, %v3173, %v2344
        %v3211 = vsel %vm3208, %v3174, %v2346
        %v3212 = vsel %vm3208, %v3175, %v2348
        %v3213 = vsel %vm3208, %v3176, %v2350
        %v3214 = vsel %vm3208, %v3177, %v2352
        %v3215 = vsel %vm3208, %v3178, %v2354
        %v3216 = vsel %vm3208, %v3179, %v2356
        %v3217 = vsel %vm3208, %v3180, %v2358
        %v3218 = vsel %vm3208, %v3181, %v2360
        %v3219 = vsel %vm3208, %v3182, %v2362
        %v3220 = vsel %vm3208, %v3183, %v2364
        %v3221 = vsel %vm3208, %v3184, %v2366
        %v3222 = vsel %vm3208, %v3185, %v2368
        %v3223 = vsel %vm3208, %v3186, %v2370
        %v3224 = vsel %vm3208, %v3187, %v2372
        %v3225 = vsel %vm3208, %v3188, %v2374
        %v3226 = vsel %vm3208, %v3189, %v2376
        %v3227 = vsel %vm3208, %v3190, %v2378
        %v3228 = vsel %vm3208, %v3191, %v2380
        %v3229 = vsel %vm3208, %v3192, %v2382
        %v3230 = vsel %vm3208, %v3193, %v2384
        %v3231 = vsel %vm3208, %v3194, %v2386
        %v3232 = vsel %vm3208, %v3195, %v2388
        %v3233 = vsel %vm3208, %v3196, %v2390
        %v3234 = vsel %vm3208, %v3197, %v2392
        %v3235 = vsel %vm3208, %v3198, %v2394
        %v3236 = vsel %vm3208, %v3199, %v2396
        %v3237 = vsel %vm3208, %v3200, %v2398
        %v3238 = vsel %vm3208, %v3201, %v2400
        %v3239 = vsel %vm3208, %v3202, %v2402
        %v3240 = vsel %vm3208, %v3203, %v2404
        %v3241 = vsel %vm3208, %v3204, %v2406
        %v3242 = vsel %vm3208, %v3205, %v2408
        %v3243 = vsel %vm3208, %v3206, %v2410
        %v3244 = vsel %vm3208, %v3207, %v2412
        %vm3245 = vcmask 261120
        %v3246 = vsel %vm3245, %v3209, %v2486
        %v3247 = vsel %vm3245, %v3210, %v2488
        %v3248 = vsel %vm3245, %v3211, %v2490
        %v3249 = vsel %vm3245, %v3212, %v2492
        %v3250 = vsel %vm3245, %v3213, %v2494
        %v3251 = vsel %vm3245, %v3214, %v2496
        %v3252 = vsel %vm3245, %v3215, %v2498
        %v3253 = vsel %vm3245, %v3216, %v2500
        %v3254 = vsel %vm3245, %v3217, %v2502
        %v3255 = vsel %vm3245, %v3218, %v2504
        %v3256 = vsel %vm3245, %v3219, %v2506
        %v3257 = vsel %vm3245, %v3220, %v2508
        %v3258 = vsel %vm3245, %v3221, %v2510
        %v3259 = vsel %vm3245, %v3222, %v2512
        %v3260 = vsel %vm3245, %v3223, %v2514
        %v3261 = vsel %vm3245, %v3224, %v2516
        %v3262 = vsel %vm3245, %v3225, %v2518
        %v3263 = vsel %vm3245, %v3226, %v2520
        %v3264 = vsel %vm3245, %v3227, %v2522
        %v3265 = vsel %vm3245, %v3228, %v2524
        %v3266 = vsel %vm3245, %v3229, %v2526
        %v3267 = vsel %vm3245, %v3230, %v2528
        %v3268 = vsel %vm3245, %v3231, %v2530
        %v3269 = vsel %vm3245, %v3232, %v2532
        %v3270 = vsel %vm3245, %v3233, %v2534
        %v3271 = vsel %vm3245, %v3234, %v2536
        %v3272 = vsel %vm3245, %v3235, %v2538
        %v3273 = vsel %vm3245, %v3236, %v2540
        %v3274 = vsel %vm3245, %v3237, %v2542
        %v3275 = vsel %vm3245, %v3238, %v2544
        %v3276 = vsel %vm3245, %v3239, %v2546
        %v3277 = vsel %vm3245, %v3240, %v2548
        %v3278 = vsel %vm3245, %v3241, %v2550
        %v3279 = vsel %vm3245, %v3242, %v2552
        %v3280 = vsel %vm3245, %v3243, %v2554
        %v3281 = vsel %vm3245, %v3244, %v2556
        %vm3282 = vcmask 326656
        %v3283 = vsel %vm3282, %v3246, %v2630
        %v3284 = vsel %vm3282, %v3247, %v2632
        %v3285 = vsel %vm3282, %v3248, %v2634
        %v3286 = vsel %vm3282, %v3249, %v2636
        %v3287 = vsel %vm3282, %v3250, %v2638
        %v3288 = vsel %vm3282, %v3251, %v2640
        %v3289 = vsel %vm3282, %v3252, %v2642
        %v3290 = vsel %vm3282, %v3253, %v2644
        %v3291 = vsel %vm3282, %v3254, %v2646
        %v3292 = vsel %vm3282, %v3255, %v2648
        %v3293 = vsel %vm3282, %v3256, %v2650
        %v3294 = vsel %vm3282, %v3257, %v2652
        %v3295 = vsel %vm3282, %v3258, %v2654
        %v3296 = vsel %vm3282, %v3259, %v2656
        %v3297 = vsel %vm3282, %v3260, %v2658
        %v3298 = vsel %vm3282, %v3261, %v2660
        %v3299 = vsel %vm3282, %v3262, %v2662
        %v3300 = vsel %vm3282, %v3263, %v2664
        %v3301 = vsel %vm3282, %v3264, %v2666
        %v3302 = vsel %vm3282, %v3265, %v2668
        %v3303 = vsel %vm3282, %v3266, %v2670
        %v3304 = vsel %vm3282, %v3267, %v2672
        %v3305 = vsel %vm3282, %v3268, %v2674
        %v3306 = vsel %vm3282, %v3269, %v2676
        %v3307 = vsel %vm3282, %v3270, %v2678
        %v3308 = vsel %vm3282, %v3271, %v2680
        %v3309 = vsel %vm3282, %v3272, %v2682
        %v3310 = vsel %vm3282, %v3273, %v2684
        %v3311 = vsel %vm3282, %v3274, %v2686
        %v3312 = vsel %vm3282, %v3275, %v2688
        %v3313 = vsel %vm3282, %v3276, %v2690
        %v3314 = vsel %vm3282, %v3277, %v2692
        %v3315 = vsel %vm3282, %v3278, %v2694
        %v3316 = vsel %vm3282, %v3279, %v2696
        %v3317 = vsel %vm3282, %v3280, %v2698
        %v3318 = vsel %vm3282, %v3281, %v2700
        %vm3319 = vcmask 392192
        %v3320 = vsel %vm3319, %v3283, %v2740
        %v3321 = vsel %vm3319, %v3284, %v2742
        %v3322 = vsel %vm3319, %v3285, %v2744
        %v3323 = vsel %vm3319, %v3286, %v2746
        %v3324 = vsel %vm3319, %v3287, %v2748
        %v3325 = vsel %vm3319, %v3288, %v2750
        %v3326 = vsel %vm3319, %v3289, %v2752
        %v3327 = vsel %vm3319, %v3290, %v2754
        %v3328 = vsel %vm3319, %v3291, %v2756
        %v3329 = vsel %vm3319, %v3292, %v2758
        %v3330 = vsel %vm3319, %v3293, %v2760
        %v3331 = vsel %vm3319, %v3294, %v2762
        %v3332 = vsel %vm3319, %v3295, %v2764
        %v3333 = vsel %vm3319, %v3296, %v2766
        %v3334 = vsel %vm3319, %v3297, %v2768
        %v3335 = vsel %vm3319, %v3298, %v2770
        %v3336 = vsel %vm3319, %v3299, %v2772
        %v3337 = vsel %vm3319, %v3300, %v2774
        %v3338 = vsel %vm3319, %v3301, %v2776
        %v3339 = vsel %vm3319, %v3302, %v2778
        %v3340 = vsel %vm3319, %v3303, %v2780
        %v3341 = vsel %vm3319, %v3304, %v2782
        %v3342 = vsel %vm3319, %v3305, %v2784
        %v3343 = vsel %vm3319, %v3306, %v2786
        %v3344 = vsel %vm3319, %v3307, %v2788
        %v3345 = vsel %vm3319, %v3308, %v2790
        %v3346 = vsel %vm3319, %v3309, %v2792
        %v3347 = vsel %vm3319, %v3310, %v2794
        %v3348 = vsel %vm3319, %v3311, %v2796
        %v3349 = vsel %vm3319, %v3312, %v2798
        %v3350 = vsel %vm3319, %v3313, %v2800
        %v3351 = vsel %vm3319, %v3314, %v2802
        %v3352 = vsel %vm3319, %v3315, %v2804
        %v3353 = vsel %vm3319, %v3316, %v2806
        %v3354 = vsel %vm3319, %v3317, %v2808
        %v3355 = vsel %vm3319, %v3318, %v2810
        %vm3356 = vcmask 457728
        %v3357 = vsel %vm3356, %v3320, %v2884
        %v3358 = vsel %vm3356, %v3321, %v2886
        %v3359 = vsel %vm3356, %v3322, %v2888
        %v3360 = vsel %vm3356, %v3323, %v2890
        %v3361 = vsel %vm3356, %v3324, %v2892
        %v3362 = vsel %vm3356, %v3325, %v2894
        %v3363 = vsel %vm3356, %v3326, %v2896
        %v3364 = vsel %vm3356, %v3327, %v2898
        %v3365 = vsel %vm3356, %v3328, %v2900
        %v3366 = vsel %vm3356, %v3329, %v2902
        %v3367 = vsel %vm3356, %v3330, %v2904
        %v3368 = vsel %vm3356, %v3331, %v2906
        %v3369 = vsel %vm3356, %v3332, %v2908
        %v3370 = vsel %vm3356, %v3333, %v2910
        %v3371 = vsel %vm3356, %v3334, %v2912
        %v3372 = vsel %vm3356, %v3335, %v2914
        %v3373 = vsel %vm3356, %v3336, %v2916
        %v3374 = vsel %vm3356, %v3337, %v2918
        %v3375 = vsel %vm3356, %v3338, %v2920
        %v3376 = vsel %vm3356, %v3339, %v2922
        %v3377 = vsel %vm3356, %v3340, %v2924
        %v3378 = vsel %vm3356, %v3341, %v2926
        %v3379 = vsel %vm3356, %v3342, %v2928
        %v3380 = vsel %vm3356, %v3343, %v2930
        %v3381 = vsel %vm3356, %v3344, %v2932
        %v3382 = vsel %vm3356, %v3345, %v2934
        %v3383 = vsel %vm3356, %v3346, %v2936
        %v3384 = vsel %vm3356, %v3347, %v2938
        %v3385 = vsel %vm3356, %v3348, %v2940
        %v3386 = vsel %vm3356, %v3349, %v2942
        %v3387 = vsel %vm3356, %v3350, %v2944
        %v3388 = vsel %vm3356, %v3351, %v2946
        %v3389 = vsel %vm3356, %v3352, %v2948
        %v3390 = vsel %vm3356, %v3353, %v2950
        %v3391 = vsel %vm3356, %v3354, %v2952
        %v3392 = vsel %vm3356, %v3355, %v2954
        %vm3393 = vcmask 523264
        %v3394 = vsel %vm3393, %v3357, %v3028
        %v3395 = vsel %vm3393, %v3358, %v3030
        %v3396 = vsel %vm3393, %v3359, %v3032
        %v3397 = vsel %vm3393, %v3360, %v3034
        %v3398 = vsel %vm3393, %v3361, %v3036
        %v3399 = vsel %vm3393, %v3362, %v3038
        %v3400 = vsel %vm3393, %v3363, %v3040
        %v3401 = vsel %vm3393, %v3364, %v3042
        %v3402 = vsel %vm3393, %v3365, %v3044
        %v3403 = vsel %vm3393, %v3366, %v3046
        %v3404 = vsel %vm3393, %v3367, %v3048
        %v3405 = vsel %vm3393, %v3368, %v3050
        %v3406 = vsel %vm3393, %v3369, %v3052
        %v3407 = vsel %vm3393, %v3370, %v3054
        %v3408 = vsel %vm3393, %v3371, %v3056
        %v3409 = vsel %vm3393, %v3372, %v3058
        %v3410 = vsel %vm3393, %v3373, %v3060
        %v3411 = vsel %vm3393, %v3374, %v3062
        %v3412 = vsel %vm3393, %v3375, %v3064
        %v3413 = vsel %vm3393, %v3376, %v3066
        %v3414 = vsel %vm3393, %v3377, %v3068
        %v3415 = vsel %vm3393, %v3378, %v3070
        %v3416 = vsel %vm3393, %v3379, %v3072
        %v3417 = vsel %vm3393, %v3380, %v3074
        %v3418 = vsel %vm3393, %v3381, %v3076
        %v3419 = vsel %vm3393, %v3382, %v3078
        %v3420 = vsel %vm3393, %v3383, %v3080
        %v3421 = vsel %vm3393, %v3384, %v3082
        %v3422 = vsel %vm3393, %v3385, %v3084
        %v3423 = vsel %vm3393, %v3386, %v3086
        %v3424 = vsel %vm3393, %v3387, %v3088
        %v3425 = vsel %vm3393, %v3388, %v3090
        %v3426 = vsel %vm3393, %v3389, %v3092
        %v3427 = vsel %vm3393, %v3390, %v3094
        %v3428 = vsel %vm3393, %v3391, %v3096
        %v3429 = vsel %vm3393, %v3392, %v3098
        %v3430 = vpack.c.bf16 %v3395, %v3394
        %v3431 = vpack.c.bf16 %v3397, %v3396
        %v3432 = vpack.c.bf16 %v3399, %v3398
        %v3433 = vpack.c.bf16 %v3401, %v3400
        %v3434 = vpack.c.bf16 %v3403, %v3402
        %v3435 = vpack.c.bf16 %v3405, %v3404
        %v3436 = vpack.c.bf16 %v3407, %v3406
        %v3437 = vpack.c.bf16 %v3409, %v3408
        %v3438 = vpack.c.bf16 %v3411, %v3410
        %v3439 = vpack.c.bf16 %v3413, %v3412
        %v3440 = vpack.c.bf16 %v3415, %v3414
        %v3441 = vpack.c.bf16 %v3417, %v3416
        %v3442 = vpack.c.bf16 %v3419, %v3418
        %v3443 = vpack.c.bf16 %v3421, %v3420
        %v3444 = vpack.c.bf16 %v3423, %v3422
        %v3445 = vpack.c.bf16 %v3425, %v3424
        %v3446 = vpack.c.bf16 %v3427, %v3426
        %v3447 = vpack.c.bf16 %v3429, %v3428
        %v3448 = vld [vmem:[%s4] sm:$0xf]
        %v3449 = vld [vmem:[%s4 + $0x4] sm:$0xf]
        %v3450 = vld [vmem:[%s4 + $0x8] sm:$0xf]
        %v3451 = vld [vmem:[%s4 + $0xc] sm:$0xf]
        %v3452 = vld [vmem:[%s4 + $0x10] sm:$0xf]
        %v3453 = vld [vmem:[%s4 + $0x14] sm:$0xf]
        %v3454 = vld [vmem:[%s4 + $0x18] sm:$0xf]
        %v3455 = vld [vmem:[%s4 + $0x1c] sm:$0xf]
        %v3456 = vld [vmem:[%s4 + $0x20] sm:$0xf]
        %v3457 = vld [vmem:[%s5] sm:$0x1]
        %v3459 = vperm.slane %v3457, 0
        %v3470 = vunpack.c.l.b16 %v3448
        %v3471 = vunpack.c.l.b16 %v3449
        %v3472 = vunpack.c.l.b16 %v3450
        %v3473 = vunpack.c.l.b16 %v3451
        %v3474 = vunpack.c.l.b16 %v3452
        %v3475 = vunpack.c.l.b16 %v3453
        %v3476 = vunpack.c.l.b16 %v3454
        %v3477 = vunpack.c.l.b16 %v3455
        %v3478 = vunpack.c.l.b16 %v3456
        %v3479 = vpack.c.b16 %v3471, %v3470
        %v3480 = vpack.c.b16 %v3473, %v3472
        %v3481 = vpack.c.b16 %v3475, %v3474
        %v3482 = vpack.c.b16 %v3477, %v3476
        %v3483 = vpack.c.b16 %v3478, %v3478
        %vm3488 = vcmask 588800
        %v3490 = vsel %vm3488, %v3430, 0
        %v3493 = vsel %vm3488, %v3431, 0
        %v3496 = vsel %vm3488, %v3432, 0
        %v3499 = vsel %vm3488, %v3433, 0
        %v3502 = vsel %vm3488, %v3434, 0
        %v3505 = vsel %vm3488, %v3435, 0
        %v3508 = vsel %vm3488, %v3436, 0
        %v3511 = vsel %vm3488, %v3437, 0
        %v3514 = vsel %vm3488, %v3438, 0
        %v3517 = vsel %vm3488, %v3439, 0
        %v3520 = vsel %vm3488, %v3440, 0
        %v3523 = vsel %vm3488, %v3441, 0
        %v3526 = vsel %vm3488, %v3442, 0
        %v3529 = vsel %vm3488, %v3443, 0
        %v3532 = vsel %vm3488, %v3444, 0
        %v3535 = vsel %vm3488, %v3445, 0
        %v3538 = vsel %vm3488, %v3446, 0
        %v3541 = vsel %vm3488, %v3447, 0
        %vm3543 = vcmask 1043456
        %v3545 = vsel %vm3543, %v3483, 0
        %3547 = vmatpush.bf16.msra.mxu0 0
        %3548 = vmatpush.bf16.msra.mxu0 0
        %3549 = vmatpush.bf16.msra.mxu0 0
        %3550 = vmatpush.bf16.msra.mxu0 %v3545
        %3551 = vmatpush.bf16.msra.mxu0 %v3482
        %3552 = vmatpush.bf16.msra.mxu0 %v3481
        %3553 = vmatpush.bf16.msra.mxu0 %v3480
        %3554 = vmatpush.bf16.msra.mxu0 %v3479
        %3555 = vmatmul.bf16.gmra.mxu0 %v3490
        %v3556 = vpop.f32.mrf.mxu0
        %v3557 = vadd.f32 %v3459, %v3556
        %v3558 = vpop.f32.mrf.mxu0
        %v3559 = vadd.f32 %v3459, %v3558
        %3560 = vmatmul.bf16.gmra.mxu0 %v3493
        %v3561 = vpop.f32.mrf.mxu0
        %v3562 = vadd.f32 %v3459, %v3561
        %v3563 = vpop.f32.mrf.mxu0
        %v3564 = vadd.f32 %v3459, %v3563
        %3565 = vmatmul.bf16.gmra.mxu0 %v3496
        %v3566 = vpop.f32.mrf.mxu0
        %v3567 = vadd.f32 %v3459, %v3566
        %v3568 = vpop.f32.mrf.mxu0
        %v3569 = vadd.f32 %v3459, %v3568
        %3570 = vmatmul.bf16.gmra.mxu0 %v3499
        %v3571 = vpop.f32.mrf.mxu0
        %v3572 = vadd.f32 %v3459, %v3571
        %v3573 = vpop.f32.mrf.mxu0
        %v3574 = vadd.f32 %v3459, %v3573
        %3575 = vmatmul.bf16.gmra.mxu0 %v3502
        %v3576 = vpop.f32.mrf.mxu0
        %v3577 = vadd.f32 %v3459, %v3576
        %v3578 = vpop.f32.mrf.mxu0
        %v3579 = vadd.f32 %v3459, %v3578
        %3580 = vmatmul.bf16.gmra.mxu0 %v3505
        %v3581 = vpop.f32.mrf.mxu0
        %v3582 = vadd.f32 %v3459, %v3581
        %v3583 = vpop.f32.mrf.mxu0
        %v3584 = vadd.f32 %v3459, %v3583
        %3585 = vmatmul.bf16.gmra.mxu0 %v3508
        %v3586 = vpop.f32.mrf.mxu0
        %v3587 = vadd.f32 %v3459, %v3586
        %v3588 = vpop.f32.mrf.mxu0
        %v3589 = vadd.f32 %v3459, %v3588
        %3590 = vmatmul.bf16.gmra.mxu0 %v3511
        %v3591 = vpop.f32.mrf.mxu0
        %v3592 = vadd.f32 %v3459, %v3591
        %v3593 = vpop.f32.mrf.mxu0
        %v3594 = vadd.f32 %v3459, %v3593
        %3595 = vmatmul.bf16.gmra.mxu0 %v3514
        %v3596 = vpop.f32.mrf.mxu0
        %v3597 = vadd.f32 %v3459, %v3596
        %v3598 = vpop.f32.mrf.mxu0
        %v3599 = vadd.f32 %v3459, %v3598
        %3600 = vmatmul.bf16.gmra.mxu0 %v3517
        %v3601 = vpop.f32.mrf.mxu0
        %v3602 = vadd.f32 %v3459, %v3601
        %v3603 = vpop.f32.mrf.mxu0
        %v3604 = vadd.f32 %v3459, %v3603
        %3605 = vmatmul.bf16.gmra.mxu0 %v3520
        %v3606 = vpop.f32.mrf.mxu0
        %v3607 = vadd.f32 %v3459, %v3606
        %v3608 = vpop.f32.mrf.mxu0
        %v3609 = vadd.f32 %v3459, %v3608
        %3610 = vmatmul.bf16.gmra.mxu0 %v3523
        %v3611 = vpop.f32.mrf.mxu0
        %v3612 = vadd.f32 %v3459, %v3611
        %v3613 = vpop.f32.mrf.mxu0
        %v3614 = vadd.f32 %v3459, %v3613
        %3615 = vmatmul.bf16.gmra.mxu0 %v3526
        %v3616 = vpop.f32.mrf.mxu0
        %v3617 = vadd.f32 %v3459, %v3616
        %v3618 = vpop.f32.mrf.mxu0
        %v3619 = vadd.f32 %v3459, %v3618
        %3620 = vmatmul.bf16.gmra.mxu0 %v3529
        %v3621 = vpop.f32.mrf.mxu0
        %v3622 = vadd.f32 %v3459, %v3621
        %v3623 = vpop.f32.mrf.mxu0
        %v3624 = vadd.f32 %v3459, %v3623
        %3625 = vmatmul.bf16.gmra.mxu0 %v3532
        %v3626 = vpop.f32.mrf.mxu0
        %v3627 = vadd.f32 %v3459, %v3626
        %v3628 = vpop.f32.mrf.mxu0
        %v3629 = vadd.f32 %v3459, %v3628
        %3630 = vmatmul.bf16.gmra.mxu0 %v3535
        %v3631 = vpop.f32.mrf.mxu0
        %v3632 = vadd.f32 %v3459, %v3631
        %v3633 = vpop.f32.mrf.mxu0
        %v3634 = vadd.f32 %v3459, %v3633
        %3635 = vmatmul.bf16.gmra.mxu0 %v3538
        %v3636 = vpop.f32.mrf.mxu0
        %v3637 = vadd.f32 %v3459, %v3636
        %v3638 = vpop.f32.mrf.mxu0
        %v3639 = vadd.f32 %v3459, %v3638
        %3640 = vmatmul.bf16.gmra.mxu0 %v3541
        %v3641 = vpop.f32.mrf.mxu0
        %v3642 = vadd.f32 %v3459, %v3641
        %v3643 = vpop.f32.mrf.mxu0
        %v3644 = vadd.f32 %v3459, %v3643
        %3645 = vdwg.mxu0
        %v3682 = vrot.slane %v3557, 2
        %v3683 = vrot.slane %v3557, 4
        %v3684 = vrot.slane %v3557, 6
        %v3685 = vrot.slane %v3559, 2
        %v3686 = vrot.slane %v3559, 4
        %v3687 = vrot.slane %v3559, 6
        %v3688 = vrot.slane %v3562, 2
        %v3689 = vrot.slane %v3562, 4
        %v3690 = vrot.slane %v3562, 6
        %v3691 = vrot.slane %v3564, 2
        %v3692 = vrot.slane %v3564, 4
        %v3693 = vrot.slane %v3564, 6
        %v3694 = vrot.slane %v3567, 4
        %v3695 = vrot.slane %v3567, 6
        %v3696 = vrot.slane %v3569, 2
        %v3697 = vrot.slane %v3569, 4
        %v3698 = vrot.slane %v3569, 6
        %v3699 = vrot.slane %v3572, 2
        %v3700 = vrot.slane %v3572, 6
        %v3701 = vrot.slane %v3574, 2
        %v3702 = vrot.slane %v3574, 4
        %v3703 = vrot.slane %v3574, 6
        %v3704 = vrot.slane %v3577, 2
        %v3705 = vrot.slane %v3577, 4
        %v3706 = vrot.slane %v3579, 2
        %v3707 = vrot.slane %v3579, 4
        %v3708 = vrot.slane %v3579, 6
        %v3709 = vrot.slane %v3582, 2
        %v3710 = vrot.slane %v3582, 4
        %v3711 = vrot.slane %v3582, 6
        %v3712 = vrot.slane %v3584, 2
        %v3713 = vrot.slane %v3584, 4
        %v3714 = vrot.slane %v3584, 6
        %v3715 = vrot.slane %v3587, 2
        %v3716 = vrot.slane %v3587, 4
        %v3717 = vrot.slane %v3587, 6
        %v3718 = vrot.slane %v3589, 4
        %v3719 = vrot.slane %v3589, 6
        %v3720 = vrot.slane %v3592, 2
        %v3721 = vrot.slane %v3592, 4
        %v3722 = vrot.slane %v3592, 6
        %v3723 = vrot.slane %v3594, 2
        %v3724 = vrot.slane %v3594, 6
        %v3725 = vrot.slane %v3597, 2
        %v3726 = vrot.slane %v3597, 4
        %v3727 = vrot.slane %v3597, 6
        %v3728 = vrot.slane %v3599, 2
        %v3729 = vrot.slane %v3599, 4
        %v3730 = vrot.slane %v3602, 2
        %v3731 = vrot.slane %v3602, 4
        %v3732 = vrot.slane %v3602, 6
        %v3733 = vrot.slane %v3604, 2
        %v3734 = vrot.slane %v3604, 4
        %v3735 = vrot.slane %v3604, 6
        %v3736 = vrot.slane %v3607, 2
        %v3737 = vrot.slane %v3607, 4
        %v3738 = vrot.slane %v3607, 6
        %v3739 = vrot.slane %v3609, 2
        %v3740 = vrot.slane %v3609, 4
        %v3741 = vrot.slane %v3609, 6
        %v3742 = vrot.slane %v3612, 4
        %v3743 = vrot.slane %v3612, 6
        %v3744 = vrot.slane %v3614, 2
        %v3745 = vrot.slane %v3614, 4
        %v3746 = vrot.slane %v3614, 6
        %v3747 = vrot.slane %v3617, 2
        %v3748 = vrot.slane %v3617, 6
        %v3749 = vrot.slane %v3619, 2
        %v3750 = vrot.slane %v3619, 4
        %v3751 = vrot.slane %v3619, 6
        %v3752 = vrot.slane %v3622, 2
        %v3753 = vrot.slane %v3622, 4
        %v3754 = vrot.slane %v3624, 2
        %v3755 = vrot.slane %v3624, 4
        %v3756 = vrot.slane %v3624, 6
        %v3757 = vrot.slane %v3627, 2
        %v3758 = vrot.slane %v3627, 4
        %v3759 = vrot.slane %v3627, 6
        %v3760 = vrot.slane %v3629, 2
        %v3761 = vrot.slane %v3629, 4
        %v3762 = vrot.slane %v3629, 6
        %v3763 = vrot.slane %v3632, 2
        %v3764 = vrot.slane %v3632, 4
        %v3765 = vrot.slane %v3632, 6
        %v3766 = vrot.slane %v3634, 4
        %v3767 = vrot.slane %v3634, 6
        %v3768 = vrot.slane %v3637, 2
        %v3769 = vrot.slane %v3637, 4
        %v3770 = vrot.slane %v3637, 6
        %v3771 = vrot.slane %v3639, 2
        %v3772 = vrot.slane %v3639, 6
        %v3773 = vrot.slane %v3642, 2
        %v3774 = vrot.slane %v3642, 4
        %v3775 = vrot.slane %v3642, 6
        %v3776 = vrot.slane %v3644, 2
        %v3777 = vrot.slane %v3644, 4
        %3778 = vst [vmem:[#allocation1] ss:$4 sm:$0xff] %v3557
        %s3779 = scalar_lea.vmem [#allocation1], 1
        %3780 = vst [vmem:[%s3779] ss:$4 sm:$0xff] %v3682
        %s3781 = scalar_lea.vmem [#allocation1], 2
        %3782 = vst [vmem:[%s3781] ss:$4 sm:$0xff] %v3683
        %s3783 = scalar_lea.vmem [#allocation1], 3
        %3784 = vst [vmem:[%s3783] ss:$4 sm:$0xff] %v3684
        %s3785 = scalar_lea.vmem [#allocation1], 32
        %3786 = vst [vmem:[%s3785] ss:$4 sm:$0xff] %v3559
        %s3787 = scalar_lea.vmem [#allocation1], 33
        %3788 = vst [vmem:[%s3787] ss:$4 sm:$0xff] %v3685
        %s3789 = scalar_lea.vmem [#allocation1], 34
        %3790 = vst [vmem:[%s3789] ss:$4 sm:$0xff] %v3686
        %s3791 = scalar_lea.vmem [#allocation1], 35
        %3792 = vst [vmem:[%s3791] ss:$4 sm:$0xff] %v3687
        %v3793 = vld.sshfl [vmem:[#allocation1] sm:$0xff pattern:$0x73625140]
        %v3794 = vld.sshfl [vmem:[#allocation1 + $0x20] sm:$0xff pattern:$0x73625140]
        %3795 = vst [vmem:[#allocation1] ss:$4 sm:$0xff] %v3688
        %3796 = vst [vmem:[%s3779] ss:$4 sm:$0xff] %v3689
        %3797 = vst [vmem:[%s3781] ss:$4 sm:$0xff] %v3690
        %3798 = vst [vmem:[%s3783] ss:$4 sm:$0xff] %v3564
        %3799 = vst [vmem:[%s3785] ss:$4 sm:$0xff] %v3691
        %3800 = vst [vmem:[%s3787] ss:$4 sm:$0xff] %v3692
        %3801 = vst [vmem:[%s3789] ss:$4 sm:$0xff] %v3693
        %3802 = vst [vmem:[%s3791] ss:$4 sm:$0xff] %v3567
        %v3803 = vld.sshfl [vmem:[#allocation1] sm:$0xff pattern:$0x73625140]
        %v3804 = vld.sshfl [vmem:[#allocation1 + $0x20] sm:$0xff pattern:$0x73625140]
        %3805 = vst [vmem:[#allocation1] ss:$4 sm:$0xff] %v3694
        %3806 = vst [vmem:[%s3779] ss:$4 sm:$0xff] %v3695
        %3807 = vst [vmem:[%s3781] ss:$4 sm:$0xff] %v3569
        %3808 = vst [vmem:[%s3783] ss:$4 sm:$0xff] %v3696
        %3809 = vst [vmem:[%s3785] ss:$4 sm:$0xff] %v3697
        %3810 = vst [vmem:[%s3787] ss:$4 sm:$0xff] %v3698
        %3811 = vst [vmem:[%s3789] ss:$4 sm:$0xff] %v3572
        %3812 = vst [vmem:[%s3791] ss:$4 sm:$0xff] %v3699
        %v3813 = vld.sshfl [vmem:[#allocation1] sm:$0xff pattern:$0x73625140]
        %v3814 = vld.sshfl [vmem:[#allocation1 + $0x20] sm:$0xff pattern:$0x73625140]
        %3815 = vst [vmem:[#allocation1] ss:$4 sm:$0xff] %v3700
        %3816 = vst [vmem:[%s3779] ss:$4 sm:$0xff] %v3574
        %3817 = vst [vmem:[%s3781] ss:$4 sm:$0xff] %v3701
        %3818 = vst [vmem:[%s3783] ss:$4 sm:$0xff] %v3702
        %3819 = vst [vmem:[%s3785] ss:$4 sm:$0xff] %v3703
        %3820 = vst [vmem:[%s3787] ss:$4 sm:$0xff] %v3577
        %3821 = vst [vmem:[%s3789] ss:$4 sm:$0xff] %v3704
        %3822 = vst [vmem:[%s3791] ss:$4 sm:$0xff] %v3705
        %v3823 = vld.sshfl [vmem:[#allocation1] sm:$0xff pattern:$0x73625140]
        %v3824 = vld.sshfl [vmem:[#allocation1 + $0x20] sm:$0xff pattern:$0x73625140]
        %3825 = vst [vmem:[#allocation1] ss:$4 sm:$0xff] %v3579
        %3826 = vst [vmem:[%s3779] ss:$4 sm:$0xff] %v3706
        %3827 = vst [vmem:[%s3781] ss:$4 sm:$0xff] %v3707
        %3828 = vst [vmem:[%s3783] ss:$4 sm:$0xff] %v3708
        %3829 = vst [vmem:[%s3785] ss:$4 sm:$0xff] %v3582
        %3830 = vst [vmem:[%s3787] ss:$4 sm:$0xff] %v3709
        %3831 = vst [vmem:[%s3789] ss:$4 sm:$0xff] %v3710
        %3832 = vst [vmem:[%s3791] ss:$4 sm:$0xff] %v3711
        %v3833 = vld.sshfl [vmem:[#allocation1] sm:$0xff pattern:$0x73625140]
        %v3834 = vld.sshfl [vmem:[#allocation1 + $0x20] sm:$0xff pattern:$0x73625140]
        %3835 = vst [vmem:[#allocation1] ss:$4 sm:$0xff] %v3712
        %3836 = vst [vmem:[%s3779] ss:$4 sm:$0xff] %v3713
        %3837 = vst [vmem:[%s3781] ss:$4 sm:$0xff] %v3714
        %3838 = vst [vmem:[%s3783] ss:$4 sm:$0xff] %v3587
        %3839 = vst [vmem:[%s3785] ss:$4 sm:$0xff] %v3715
        %3840 = vst [vmem:[%s3787] ss:$4 sm:$0xff] %v3716
        %3841 = vst [vmem:[%s3789] ss:$4 sm:$0xff] %v3717
        %3842 = vst [vmem:[%s3791] ss:$4 sm:$0xff] %v3589
        %v3843 = vld.sshfl [vmem:[#allocation1] sm:$0xff pattern:$0x73625140]
        %v3844 = vld.sshfl [vmem:[#allocation1 + $0x20] sm:$0xff pattern:$0x73625140]
        %3845 = vst [vmem:[#allocation1] ss:$4 sm:$0xff] %v3718
        %3846 = vst [vmem:[%s3779] ss:$4 sm:$0xff] %v3719
        %3847 = vst [vmem:[%s3781] ss:$4 sm:$0xff] %v3592
        %3848 = vst [vmem:[%s3783] ss:$4 sm:$0xff] %v3720
        %3849 = vst [vmem:[%s3785] ss:$4 sm:$0xff] %v3721
        %3850 = vst [vmem:[%s3787] ss:$4 sm:$0xff] %v3722
        %3851 = vst [vmem:[%s3789] ss:$4 sm:$0xff] %v3594
        %3852 = vst [vmem:[%s3791] ss:$4 sm:$0xff] %v3723
        %v3853 = vld.sshfl [vmem:[#allocation1] sm:$0xff pattern:$0x73625140]
        %v3854 = vld.sshfl [vmem:[#allocation1 + $0x20] sm:$0xff pattern:$0x73625140]
        %3855 = vst [vmem:[#allocation1] ss:$4 sm:$0xff] %v3724
        %3856 = vst [vmem:[%s3779] ss:$4 sm:$0xff] %v3597
        %3857 = vst [vmem:[%s3781] ss:$4 sm:$0xff] %v3725
        %3858 = vst [vmem:[%s3783] ss:$4 sm:$0xff] %v3726
        %3859 = vst [vmem:[%s3785] ss:$4 sm:$0xff] %v3727
        %3860 = vst [vmem:[%s3787] ss:$4 sm:$0xff] %v3599
        %3861 = vst [vmem:[%s3789] ss:$4 sm:$0xff] %v3728
        %3862 = vst [vmem:[%s3791] ss:$4 sm:$0xff] %v3729
        %v3863 = vld.sshfl [vmem:[#allocation1] sm:$0xff pattern:$0x73625140]
        %v3864 = vld.sshfl [vmem:[#allocation1 + $0x20] sm:$0xff pattern:$0x73625140]
        %3865 = vst [vmem:[#allocation1] ss:$4 sm:$0xff] %v3602
        %3866 = vst [vmem:[%s3779] ss:$4 sm:$0xff] %v3730
        %3867 = vst [vmem:[%s3781] ss:$4 sm:$0xff] %v3731
        %3868 = vst [vmem:[%s3783] ss:$4 sm:$0xff] %v3732
        %3869 = vst [vmem:[%s3785] ss:$4 sm:$0xff] %v3604
        %3870 = vst [vmem:[%s3787] ss:$4 sm:$0xff] %v3733
        %3871 = vst [vmem:[%s3789] ss:$4 sm:$0xff] %v3734
        %3872 = vst [vmem:[%s3791] ss:$4 sm:$0xff] %v3735
        %v3873 = vld.sshfl [vmem:[#allocation1] sm:$0xff pattern:$0x73625140]
        %v3874 = vld.sshfl [vmem:[#allocation1 + $0x20] sm:$0xff pattern:$0x73625140]
        %3875 = vst [vmem:[#allocation1] ss:$4 sm:$0xff] %v3736
        %3876 = vst [vmem:[%s3779] ss:$4 sm:$0xff] %v3737
        %3877 = vst [vmem:[%s3781] ss:$4 sm:$0xff] %v3738
        %3878 = vst [vmem:[%s3783] ss:$4 sm:$0xff] %v3609
        %3879 = vst [vmem:[%s3785] ss:$4 sm:$0xff] %v3739
        %3880 = vst [vmem:[%s3787] ss:$4 sm:$0xff] %v3740
        %3881 = vst [vmem:[%s3789] ss:$4 sm:$0xff] %v3741
        %3882 = vst [vmem:[%s3791] ss:$4 sm:$0xff] %v3612
        %v3883 = vld.sshfl [vmem:[#allocation1] sm:$0xff pattern:$0x73625140]
        %v3884 = vld.sshfl [vmem:[#allocation1 + $0x20] sm:$0xff pattern:$0x73625140]
        %3885 = vst [vmem:[#allocation1] ss:$4 sm:$0xff] %v3742
        %3886 = vst [vmem:[%s3779] ss:$4 sm:$0xff] %v3743
        %3887 = vst [vmem:[%s3781] ss:$4 sm:$0xff] %v3614
        %3888 = vst [vmem:[%s3783] ss:$4 sm:$0xff] %v3744
        %3889 = vst [vmem:[%s3785] ss:$4 sm:$0xff] %v3745
        %3890 = vst [vmem:[%s3787] ss:$4 sm:$0xff] %v3746
        %3891 = vst [vmem:[%s3789] ss:$4 sm:$0xff] %v3617
        %3892 = vst [vmem:[%s3791] ss:$4 sm:$0xff] %v3747
        %v3893 = vld.sshfl [vmem:[#allocation1] sm:$0xff pattern:$0x73625140]
        %v3894 = vld.sshfl [vmem:[#allocation1 + $0x20] sm:$0xff pattern:$0x73625140]
        %3895 = vst [vmem:[#allocation1] ss:$4 sm:$0xff] %v3748
        %3896 = vst [vmem:[%s3779] ss:$4 sm:$0xff] %v3619
        %3897 = vst [vmem:[%s3781] ss:$4 sm:$0xff] %v3749
        %3898 = vst [vmem:[%s3783] ss:$4 sm:$0xff] %v3750
        %3899 = vst [vmem:[%s3785] ss:$4 sm:$0xff] %v3751
        %3900 = vst [vmem:[%s3787] ss:$4 sm:$0xff] %v3622
        %3901 = vst [vmem:[%s3789] ss:$4 sm:$0xff] %v3752
        %3902 = vst [vmem:[%s3791] ss:$4 sm:$0xff] %v3753
        %v3903 = vld.sshfl [vmem:[#allocation1] sm:$0xff pattern:$0x73625140]
        %v3904 = vld.sshfl [vmem:[#allocation1 + $0x20] sm:$0xff pattern:$0x73625140]
        %3905 = vst [vmem:[#allocation1] ss:$4 sm:$0xff] %v3624
        %3906 = vst [vmem:[%s3779] ss:$4 sm:$0xff] %v3754
        %3907 = vst [vmem:[%s3781] ss:$4 sm:$0xff] %v3755
        %3908 = vst [vmem:[%s3783] ss:$4 sm:$0xff] %v3756
        %3909 = vst [vmem:[%s3785] ss:$4 sm:$0xff] %v3627
        %3910 = vst [vmem:[%s3787] ss:$4 sm:$0xff] %v3757
        %3911 = vst [vmem:[%s3789] ss:$4 sm:$0xff] %v3758
        %3912 = vst [vmem:[%s3791] ss:$4 sm:$0xff] %v3759
        %v3913 = vld.sshfl [vmem:[#allocation1] sm:$0xff pattern:$0x73625140]
        %v3914 = vld.sshfl [vmem:[#allocation1 + $0x20] sm:$0xff pattern:$0x73625140]
        %3915 = vst [vmem:[#allocation1] ss:$4 sm:$0xff] %v3760
        %3916 = vst [vmem:[%s3779] ss:$4 sm:$0xff] %v3761
        %3917 = vst [vmem:[%s3781] ss:$4 sm:$0xff] %v3762
        %3918 = vst [vmem:[%s3783] ss:$4 sm:$0xff] %v3632
        %3919 = vst [vmem:[%s3785] ss:$4 sm:$0xff] %v3763
        %3920 = vst [vmem:[%s3787] ss:$4 sm:$0xff] %v3764
        %3921 = vst [vmem:[%s3789] ss:$4 sm:$0xff] %v3765
        %3922 = vst [vmem:[%s3791] ss:$4 sm:$0xff] %v3634
        %v3923 = vld.sshfl [vmem:[#allocation1] sm:$0xff pattern:$0x73625140]
        %v3924 = vld.sshfl [vmem:[#allocation1 + $0x20] sm:$0xff pattern:$0x73625140]
        %3925 = vst [vmem:[#allocation1] ss:$4 sm:$0xff] %v3766
        %3926 = vst [vmem:[%s3779] ss:$4 sm:$0xff] %v3767
        %3927 = vst [vmem:[%s3781] ss:$4 sm:$0xff] %v3637
        %3928 = vst [vmem:[%s3783] ss:$4 sm:$0xff] %v3768
        %3929 = vst [vmem:[%s3785] ss:$4 sm:$0xff] %v3769
        %3930 = vst [vmem:[%s3787] ss:$4 sm:$0xff] %v3770
        %3931 = vst [vmem:[%s3789] ss:$4 sm:$0xff] %v3639
        %3932 = vst [vmem:[%s3791] ss:$4 sm:$0xff] %v3771
        %v3933 = vld.sshfl [vmem:[#allocation1] sm:$0xff pattern:$0x73625140]
        %v3934 = vld.sshfl [vmem:[#allocation1 + $0x20] sm:$0xff pattern:$0x73625140]
        %3935 = vst [vmem:[#allocation1] ss:$4 sm:$0xff] %v3772
        %3936 = vst [vmem:[%s3779] ss:$4 sm:$0xff] %v3642
        %3937 = vst [vmem:[%s3781] ss:$4 sm:$0xff] %v3773
        %3938 = vst [vmem:[%s3783] ss:$4 sm:$0xff] %v3774
        %3939 = vst [vmem:[%s3785] ss:$4 sm:$0xff] %v3775
        %3940 = vst [vmem:[%s3787] ss:$4 sm:$0xff] %v3644
        %3941 = vst [vmem:[%s3789] ss:$4 sm:$0xff] %v3776
        %3942 = vst [vmem:[%s3791] ss:$4 sm:$0xff] %v3777
        %v3943 = vld.sshfl [vmem:[#allocation1] sm:$0xff pattern:$0x73625140]
        %v3944 = vld.sshfl [vmem:[#allocation1 + $0x20] sm:$0xff pattern:$0x73625140]
        %3977 = vst.msk [vmem:[%s244] sm:$0xff] %vm3171, %v3793
        %3978 = vst.msk [vmem:[%s244 + $0x8] sm:$0xff] %vm3171, %v3794
        %3979 = vst.msk [vmem:[%s244 + $0x10] sm:$0xff] %vm3171, %v3803
        %3980 = vst.msk [vmem:[%s244 + $0x18] sm:$0xff] %vm3171, %v3804
        %3981 = vst.msk [vmem:[%s244 + $0x20] sm:$0xff] %vm3171, %v3813
        %3982 = vst.msk [vmem:[%s244 + $0x28] sm:$0xff] %vm3171, %v3814
        %3983 = vst.msk [vmem:[%s244 + $0x30] sm:$0xff] %vm3171, %v3823
        %3984 = vst.msk [vmem:[%s244 + $0x38] sm:$0xff] %vm3171, %v3824
        %3985 = vst.msk [vmem:[%s244 + $0x40] sm:$0xff] %vm3171, %v3833
        %3986 = vst.msk [vmem:[%s244 + $0x48] sm:$0xff] %vm3171, %v3834
        %3987 = vst.msk [vmem:[%s244 + $0x50] sm:$0xff] %vm3171, %v3843
        %3988 = vst.msk [vmem:[%s244 + $0x58] sm:$0xff] %vm3171, %v3844
        %3989 = vst.msk [vmem:[%s244 + $0x60] sm:$0xff] %vm3171, %v3853
        %3990 = vst.msk [vmem:[%s244 + $0x68] sm:$0xff] %vm3171, %v3854
        %3991 = vst.msk [vmem:[%s244 + $0x70] sm:$0xff] %vm3171, %v3863
        %3992 = vst.msk [vmem:[%s244 + $0x78] sm:$0xff] %vm3171, %v3864
        %3993 = vst.msk [vmem:[%s244 + $0x80] sm:$0xff] %vm3171, %v3873
        %3994 = vst.msk [vmem:[%s244 + $0x88] sm:$0xff] %vm3171, %v3874
        %3995 = vst.msk [vmem:[%s244 + $0x90] sm:$0xff] %vm3171, %v3883
        %3996 = vst.msk [vmem:[%s244 + $0x98] sm:$0xff] %vm3171, %v3884
        %3997 = vst.msk [vmem:[%s244 + $0xa0] sm:$0xff] %vm3171, %v3893
        %3998 = vst.msk [vmem:[%s244 + $0xa8] sm:$0xff] %vm3171, %v3894
        %3999 = vst.msk [vmem:[%s244 + $0xb0] sm:$0xff] %vm3171, %v3903
        %4000 = vst.msk [vmem:[%s244 + $0xb8] sm:$0xff] %vm3171, %v3904
        %4001 = vst.msk [vmem:[%s244 + $0xc0] sm:$0xff] %vm3171, %v3913
        %4002 = vst.msk [vmem:[%s244 + $0xc8] sm:$0xff] %vm3171, %v3914
        %4003 = vst.msk [vmem:[%s244 + $0xd0] sm:$0xff] %vm3171, %v3923
        %4004 = vst.msk [vmem:[%s244 + $0xd8] sm:$0xff] %vm3171, %v3924
        %4005 = vst.msk [vmem:[%s244 + $0xe0] sm:$0xff] %vm3171, %v3933
        %4006 = vst.msk [vmem:[%s244 + $0xe8] sm:$0xff] %vm3171, %v3934
        %4007 = vst.msk [vmem:[%s244 + $0xf0] sm:$0xff] %vm3171, %v3943
        %4008 = vst.msk [vmem:[%s244 + $0xf8] sm:$0xff] %vm3171, %v3944
        %s4009 = sand.u32 %s159, 1
        %s4010 = scalar_lea.sflag [#allocation4], %s4009
        %s4011 = sand.u32 %s159, 1
        %s4012 = smul.addr %s4011, 256
        %s4013 = scalar_lea.vmem [#allocation3], %s4012
        // Predicated region
        $region45: #{tpu_custom_call.1} parent=43 // pred_check
          %p4014 = pneg %p169
        $region46: #{tpu_custom_call.1} parent=43 // pred_check_branch
          %4016 = sbr.rel (%p4014) target = $region48
        $region47: #{tpu_custom_call.1} parent=43 // pred_region
          %4018 = vsyncadd %s4010, 0
          %s4019 = smul.addr %s20, 32
          %s4020 = smul.addr %s4019, 8
          %s4021 = scalar_lea.hbm %s6, %s4020
          %s4022 = sshll.u32 %s4013, 4
          %s4023 = int_to_ptr.vmem [resolvable:$true] %s4022
          %s4024 = sshll.u32 %s4021, 4
          %s4025 = int_to_ptr.hbm [resolvable:$true] %s4024
          %4030 = dma.vmem_to_hbm [thread:$0]  %s4023, 4096, %s4025, %s4010, 128, 128, 8
        $region48: #{tpu_custom_call.1} parent=43 // pred_fallthru
          _
      $region44: #{tpu_custom_call.1} parent=5 // pred_fallthru
        _
      %p4031 = scmp.le.s32.totalorder 2, %s15
      // Predicated region
      $region49: #{tpu_custom_call.1} parent=5 // pred_check
        %p4032 = pneg %p4031
      $region50: #{tpu_custom_call.1} parent=5 // pred_check_branch
        %4034 = sbr.rel (%p4032) target = $region52
      $region51: #{tpu_custom_call.1} parent=5 // pred_region
        %s4035 = ssub.s32 %s15, 2
        // Predicated region
        $region53: #{tpu_custom_call.1} parent=51 // pred_check
          %p4036 = pneg %p175
        $region54: #{tpu_custom_call.1} parent=51 // pred_check_branch
          %4038 = sbr.rel (%p4036) target = $region56
        $region55: #{tpu_custom_call.1} parent=51 // pred_region
          %s4039 = sand.u32 %s160, 1
          %s4040 = scalar_lea.sflag [#allocation4], %s4039
          %s4041 = sand.u32 %s160, 1
          %s4042 = smul.addr %s4041, 256
          %s4043 = scalar_lea.vmem [#allocation3], %s4042
          %4045 = dma.done %s4040, 4096
        $region56: #{tpu_custom_call.1} parent=51 // pred_fallthru
          _
      $region52: #{tpu_custom_call.1} parent=5 // pred_fallthru
        _
    $region6: #{tpu_custom_call.1} parent=1 // loop_footer
      %s19 = sadd.s32 1, %s15
    $region7: #{tpu_custom_call.1} parent=1 // loop_footer_branch
      %14 = sbr.rel target = $region3
    $region8: #{tpu_custom_call.1} parent=1 // loop_exit
      _
    %4046 = vsyncpa [#allocation4], 1
    %s4047 = scalar_lea.sflag [#allocation4], 1
    %4048 = vsyncpa %s4047, 1

</llo_original>
